<compile_context>
chip_gen: v6e
topology: v6e:2x2x1
jax: 0.10.0
libtpu: 0.0.40
codegen_flags: <defaults>
</compile_context>

<pallas_src>
import functools

import jax
import jax.numpy as jnp
from jax.experimental import pallas as pl
from jax.experimental.pallas import tpu as pltpu


def _conv_stats_kernel(x_ref, w_ref, y_ref, stats_ref, rhs_ref, *,
                       C_in, H, W, L, Hp, Dblk):
    """Dblk output depth planes: 3x3x3 conv as ONE big-K MXU matmul + partial BN stats."""
    HL = H * L
    HpL = Hp * L
    xb = x_ref[0, 0, :, :]                               # (C_in, (Dblk+2)*Hp*L) bf16

    # Assemble the im2col RHS (27*C_in, Dblk*H*L) from static lane-offset slices.
    # Row ordering (kd, kh, kw, ci) matches the host-side weight reshape.
    for kd in range(3):
        for kh in range(3):
            for kw in range(3):
                t = (kd * 3 + kh) * 3 + kw
                for j in range(Dblk):
                    s = (j + kd) * HpL + kh * L + kw
                    rhs_ref[t * C_in:(t + 1) * C_in, j * HL:(j + 1) * HL] = (
                        xb[:, s:s + HL])

    # Single (C_out, 27*C_in) @ (27*C_in, Dblk*H*L) matmul, f32 accumulation on the MXU.
    acc = jnp.dot(w_ref[...], rhs_ref[...], preferred_element_type=jnp.float32)

    y_ref[0, 0, :, :] = acc.astype(y_ref.dtype)          # bf16 intermediate

    # Partial per-channel BN statistics over valid columns only (junk cols w >= W).
    col = jax.lax.broadcasted_iota(jnp.int32, acc.shape, 1)
    ym = jnp.where((col % L) < W, acc, 0.0)
    stats_ref[0, 0, :, 0:1] = jnp.sum(ym, axis=1, keepdims=True)        # sum
    stats_ref[0, 0, :, 1:2] = jnp.sum(ym * acc, axis=1, keepdims=True)  # sum of squares


def _bn_relu_kernel(y_ref, scale_ref, shift_ref, o_ref, *, H, W, L, Dblk):
    """Streaming y*scale+shift + ReLU; compacts junk columns; lane-dense output block."""
    y = y_ref[0, 0, :, :].astype(jnp.float32)            # (C_out, Dblk*H*L)
    z = jnp.maximum(y * scale_ref[...] + shift_ref[...], 0.0)
    for r in range(Dblk * H):                            # drop the 2 junk cols per row
        o_ref[0, :, r * W:(r + 1) * W] = z[:, r * L:r * L + W]


def _pick_dblk(D, H, W):
    """Largest depth block (<=8) dividing D whose dense out-block lane width Dblk*H*W is
    a multiple of 128; prefer Dblk < D so grid=(N, D//Dblk) keeps >= 2N parallel steps."""
    HW = H * W
    cands = [c for c in range(1, min(D, 8) + 1)
             if D % c == 0 and (c * HW) % 128 == 0]
    sub = [c for c in cands if c < D]
    if sub:
        return max(sub)
    if cands:
        return max(cands)
    # TODO(synk): full-depth fallback (block == full array dim is always a legal spec);
    # very large volumes would additionally need H/W tiling of the out block.
    return D


def unet_block_forward(x, weight, gamma, beta, *, eps=1e-5):
    """x: (N, C_in, D, H, W) f32, weight: (C_out, C_in, 3, 3, 3) f32."""
    N, C_in, D, H, W = x.shape
    C_out = weight.shape[0]
    L = W + 2                    # padded row length (1 left / 1 right)
    Hp = H + 3                   # 1 top / 2 bottom: keeps all flattened taps in-bounds
    HpL = Hp * L
    HL = H * L
    Dblk = _pick_dblk(D, H, W)
    nb = D // Dblk
    Db2 = Dblk + 2
    Qb = Db2 * HpL               # flattened halo-block length
    K = 27 * C_in
    M = N * D * H * W            # BatchNorm element count per channel

    # ---- host prep (one cheap pass over x): bf16 cast, pad, depth-halo gather --------
    xpad = jnp.pad(x.astype(jnp.bfloat16),
                   ((0, 0), (0, 0), (1, 1), (1, 2), (1, 1)))    # (N, C_in, D+2, Hp, L)
    didx = jnp.arange(nb)[:, None] * Dblk + jnp.arange(Db2)[None, :]    # (nb, Db2)
    xb = xpad[:, :, didx]                                        # (N, C_in, nb, Db2, Hp, L)
    xb = jnp.transpose(xb, (0, 2, 1, 3, 4, 5)).reshape(N, nb, C_in, Qb)

    # weight (C_out, C_in, kd, kh, kw) -> (C_out, 27*C_in), K ordered (kd, kh, kw, ci).
    w_lhs = jnp.transpose(weight, (0, 2, 3, 4, 1)).reshape(C_out, K).astype(jnp.bfloat16)

    # ---- VMEM budget from the actual (double-buffered) block footprint ---------------
    bytes_a = (2 * (C_in * Qb * 2 + C_out * K * 2 + C_out * Dblk * HL * 2 + C_out * 8)
               + K * Dblk * HL * 2                     # im2col scratch
               + 8 * C_out * Dblk * HL * 4)            # acc / mask / temporaries
    bytes_b = (2 * (C_out * Dblk * HL * 2 + 2 * C_out * 4 + C_out * Dblk * H * W * 4)
               + 6 * C_out * Dblk * HL * 4)
    vmem_limit = int(min(max(2 * max(bytes_a, bytes_b) + (8 << 20), 16 << 20), 60 << 20))
    cparams = pltpu.CompilerParams(
        dimension_semantics=("parallel", "parallel"),
        vmem_limit_bytes=vmem_limit)

    grid = (N, nb)

    # ---- kernel A: conv (single big-K matmul per step) + partial BN stats ------------
    y, pstats = pl.pallas_call(
        functools.partial(_conv_stats_kernel,
                          C_in=C_in, H=H, W=W, L=L, Hp=Hp, Dblk=Dblk),
        out_shape=(jax.ShapeDtypeStruct((N, nb, C_out, Dblk * HL), jnp.bfloat16),
                   jax.ShapeDtypeStruct((N, nb, C_out, 2), jnp.float32)),
        grid=grid,
        in_specs=[
            pl.BlockSpec((1, 1, C_in, Qb), lambda n, b: (n, b, 0, 0)),   # halo slab
            pl.BlockSpec((C_out, K), lambda n, b: (0, 0)),               # folded weights
        ],
        out_specs=(
            pl.BlockSpec((1, 1, C_out, Dblk * HL), lambda n, b: (n, b, 0, 0)),
            pl.BlockSpec((1, 1, C_out, 2), lambda n, b: (n, b, 0, 0)),
        ),
        scratch_shapes=[pltpu.VMEM((K, Dblk * HL), jnp.bfloat16)],       # im2col RHS
        compiler_params=cparams,
    )(xb, w_lhs)

    # ---- tiny per-channel reduction + BN affine folding (negligible XLA work) --------
    # TODO(synk): E[y^2]-E[y]^2 can lose precision when |mean| >> std; switch to a
    # centered / Welford-style accumulation if real workloads show BN drift.
    sums = jnp.sum(pstats[..., 0], axis=(0, 1))
    sqs = jnp.sum(pstats[..., 1], axis=(0, 1))
    mean = sums / M
    var = sqs / M - mean * mean
    inv = gamma.astype(jnp.float32) * jax.lax.rsqrt(var + eps)
    scale = inv.reshape(C_out, 1)
    shift = (beta.astype(jnp.float32) - mean * inv).reshape(C_out, 1)

    # ---- kernel B: BN affine + ReLU, junk-column compaction, lane-dense stores -------
    out = pl.pallas_call(
        functools.partial(_bn_relu_kernel, H=H, W=W, L=L, Dblk=Dblk),
        out_shape=jax.ShapeDtypeStruct((N, C_out, D * H * W), jnp.float32),
        grid=grid,
        in_specs=[
            pl.BlockSpec((1, 1, C_out, Dblk * HL), lambda n, b: (n, b, 0, 0)),
            pl.BlockSpec((C_out, 1), lambda n, b: (0, 0)),
            pl.BlockSpec((C_out, 1), lambda n, b: (0, 0)),
        ],
        out_specs=pl.BlockSpec((1, C_out, Dblk * H * W), lambda n, b: (n, 0, b)),
        compiler_params=cparams,
    )(y, scale, shift)

    return out.reshape(N, C_out, D, H, W)     # free: splits the trailing dim only


def _reference(x, weight, gamma, beta, eps=1e-5):
    y = jax.lax.conv_general_dilated(
        x, weight, window_strides=(1, 1, 1),
        padding=((1, 1), (1, 1), (1, 1)),
        dimension_numbers=("NCDHW", "OIDHW", "NCDHW"))
    mean = y.mean(axis=(0, 2, 3, 4), keepdims=True)
    var = ((y - mean) ** 2).mean(axis=(0, 2, 3, 4), keepdims=True)
    yhat = (y - mean) / jnp.sqrt(var + eps)
    yhat = yhat * gamma.reshape(1, -1, 1, 1, 1) + beta.reshape(1, -1, 1, 1, 1)
    return jnp.maximum(yhat, 0.0)


if __name__ == "__main__":
    key = jax.random.PRNGKey(0)
    kx, kw = jax.random.split(key)

    N, C_in, C_out, D, H, W = 2, 4, 8, 8, 8, 8
    x = jax.random.normal(kx, (N, C_in, D, H, W), dtype=jnp.float32)
    weight = 0.1 * jax.random.normal(kw, (C_out, C_in, 3, 3, 3), dtype=jnp.float32)
    gamma = jnp.ones((C_out,), dtype=jnp.float32)   # BatchNorm3d default weight
    beta = jnp.zeros((C_out,), dtype=jnp.float32)   # BatchNorm3d default bias

    fwd = jax.jit(unet_block_forward)
    out = jax.block_until_ready(fwd(x, weight, gamma, beta))

    ref = _reference(x, weight, gamma, beta)
    assert out.shape == (N, C_out, D, H, W), out.shape
    err = float(jnp.max(jnp.abs(out - ref)))
    # bf16 matmul operands + bf16 y intermediate (f32 stats / accumulation) -> loose tol.
    assert jnp.allclose(out, ref, atol=3e-2, rtol=3e-2), err

    print("KERNEL_OK")
</pallas_src>

<mosaic_0001>
module attributes {stable_mosaic.version = 11 : i64} {
  func.func @_conv_stats_kernel(%arg0: i32, %arg1: i32, %arg2: memref<1x1x4x660xbf16, #tpu.memory_space<vmem>>, %arg3: memref<8x108xbf16, #tpu.memory_space<vmem>>, %arg4: memref<1x1x8x320xbf16, #tpu.memory_space<vmem>>, %arg5: memref<1x1x8x2xf32, #tpu.memory_space<vmem>>, %arg6: memref<108x320xbf16, #tpu.memory_space<vmem>>) attributes {dimension_semantics = [#tpu.dimension_semantics<parallel>, #tpu.dimension_semantics<parallel>], iteration_bounds = array<i64: 2, 2>, scalar_prefetch = 0 : i64, scratch_operands = 1 : i64, tpu.core_type = #tpu.core_type<tc>, window_params = [{transform_indices = @transform_0, window_bounds = array<i64: 1, 1, 4, 660>}, {pipeline_mode = #tpu.pipeline_mode<synchronous>, transform_indices = @transform_1, window_bounds = array<i64: 8, 108>}, {transform_indices = @transform_2, window_bounds = array<i64: 1, 1, 8, 320>}, {transform_indices = @transform_3, window_bounds = array<i64: 1, 1, 8, 2>}]} {
    %c0 = arith.constant 0 : index
    %c0_0 = arith.constant 0 : index
    %c0_1 = arith.constant 0 : index
    %c0_2 = arith.constant 0 : index
    %0 = vector.load %arg2[%c0, %c0_0, %c0_1, %c0_2] : memref<1x1x4x660xbf16, #tpu.memory_space<vmem>>, vector<1x1x4x660xbf16>
    %1 = vector.shape_cast %0 : vector<1x1x4x660xbf16> to vector<4x660xbf16>
    %2 = vector.extract_strided_slice %1 {offsets = [0, 0], sizes = [4, 80], strides = [1, 1]} : vector<4x660xbf16> to vector<4x80xbf16>
    %c0_3 = arith.constant 0 : index
    %c0_4 = arith.constant 0 : index
    %3 = vector.load %arg6[%c0_3, %c0_4] : memref<108x320xbf16, #tpu.memory_space<vmem>>, vector<4x80xbf16>
    tpu.vector_store %arg6[%c0_3, %c0_4], %2 {strides = array<i32>} : memref<108x320xbf16, #tpu.memory_space<vmem>>, vector<4x80xbf16>,
    %4 = vector.extract_strided_slice %1 {offsets = [0, 110], sizes = [4, 80], strides = [1, 1]} : vector<4x660xbf16> to vector<4x80xbf16>
    %c0_5 = arith.constant 0 : index
    %c80 = arith.constant 80 : index
    %5 = vector.load %arg6[%c0_5, %c80] : memref<108x320xbf16, #tpu.memory_space<vmem>>, vector<4x80xbf16>
    tpu.vector_store %arg6[%c0_5, %c80], %4 {strides = array<i32>} : memref<108x320xbf16, #tpu.memory_space<vmem>>, vector<4x80xbf16>,
    %6 = vector.extract_strided_slice %1 {offsets = [0, 220], sizes = [4, 80], strides = [1, 1]} : vector<4x660xbf16> to vector<4x80xbf16>
    %c0_6 = arith.constant 0 : index
    %c160 = arith.constant 160 : index
    %7 = vector.load %arg6[%c0_6, %c160] : memref<108x320xbf16, #tpu.memory_space<vmem>>, vector<4x80xbf16>
    tpu.vector_store %arg6[%c0_6, %c160], %6 {strides = array<i32>} : memref<108x320xbf16, #tpu.memory_space<vmem>>, vector<4x80xbf16>,
    %8 = vector.extract_strided_slice %1 {offsets = [0, 330], sizes = [4, 80], strides = [1, 1]} : vector<4x660xbf16> to vector<4x80xbf16>
    %c0_7 = arith.constant 0 : index
    %c240 = arith.constant 240 : index
    %9 = vector.load %arg6[%c0_7, %c240] : memref<108x320xbf16, #tpu.memory_space<vmem>>, vector<4x80xbf16>
    tpu.vector_store %arg6[%c0_7, %c240], %8 {strides = array<i32>} : memref<108x320xbf16, #tpu.memory_space<vmem>>, vector<4x80xbf16>,
    %10 = vector.extract_strided_slice %1 {offsets = [0, 1], sizes = [4, 80], strides = [1, 1]} : vector<4x660xbf16> to vector<4x80xbf16>
    %c4 = arith.constant 4 : index
    %c0_8 = arith.constant 0 : index
    %11 = vector.load %arg6[%c4, %c0_8] : memref<108x320xbf16, #tpu.memory_space<vmem>>, vector<4x80xbf16>
    tpu.vector_store %arg6[%c4, %c0_8], %10 {strides = array<i32>} : memref<108x320xbf16, #tpu.memory_space<vmem>>, vector<4x80xbf16>,
    %12 = vector.extract_strided_slice %1 {offsets = [0, 111], sizes = [4, 80], strides = [1, 1]} : vector<4x660xbf16> to vector<4x80xbf16>
    %c4_9 = arith.constant 4 : index
    %c80_10 = arith.constant 80 : index
    %13 = vector.load %arg6[%c4_9, %c80_10] : memref<108x320xbf16, #tpu.memory_space<vmem>>, vector<4x80xbf16>
    tpu.vector_store %arg6[%c4_9, %c80_10], %12 {strides = array<i32>} : memref<108x320xbf16, #tpu.memory_space<vmem>>, vector<4x80xbf16>,
    %14 = vector.extract_strided_slice %1 {offsets = [0, 221], sizes = [4, 80], strides = [1, 1]} : vector<4x660xbf16> to vector<4x80xbf16>
    %c4_11 = arith.constant 4 : index
    %c160_12 = arith.constant 160 : index
    %15 = vector.load %arg6[%c4_11, %c160_12] : memref<108x320xbf16, #tpu.memory_space<vmem>>, vector<4x80xbf16>
    tpu.vector_store %arg6[%c4_11, %c160_12], %14 {strides = array<i32>} : memref<108x320xbf16, #tpu.memory_space<vmem>>, vector<4x80xbf16>,
    %16 = vector.extract_strided_slice %1 {offsets = [0, 331], sizes = [4, 80], strides = [1, 1]} : vector<4x660xbf16> to vector<4x80xbf16>
    %c4_13 = arith.constant 4 : index
    %c240_14 = arith.constant 240 : index
    %17 = vector.load %arg6[%c4_13, %c240_14] : memref<108x320xbf16, #tpu.memory_space<vmem>>, vector<4x80xbf16>
    tpu.vector_store %arg6[%c4_13, %c240_14], %16 {strides = array<i32>} : memref<108x320xbf16, #tpu.memory_space<vmem>>, vector<4x80xbf16>,
    %18 = vector.extract_strided_slice %1 {offsets = [0, 2], sizes = [4, 80], strides = [1, 1]} : vector<4x660xbf16> to vector<4x80xbf16>
    %c8 = arith.constant 8 : index
    %c0_15 = arith.constant 0 : index
    %19 = vector.load %arg6[%c8, %c0_15] : memref<108x320xbf16, #tpu.memory_space<vmem>>, vector<4x80xbf16>
    tpu.vector_store %arg6[%c8, %c0_15], %18 {strides = array<i32>} : memref<108x320xbf16, #tpu.memory_space<vmem>>, vector<4x80xbf16>,
    %20 = vector.extract_strided_slice %1 {offsets = [0, 112], sizes = [4, 80], strides = [1, 1]} : vector<4x660xbf16> to vector<4x80xbf16>
    %c8_16 = arith.constant 8 : index
    %c80_17 = arith.constant 80 : index
    %21 = vector.load %arg6[%c8_16, %c80_17] : memref<108x320xbf16, #tpu.memory_space<vmem>>, vector<4x80xbf16>
    tpu.vector_store %arg6[%c8_16, %c80_17], %20 {strides = array<i32>} : memref<108x320xbf16, #tpu.memory_space<vmem>>, vector<4x80xbf16>,
    %22 = vector.extract_strided_slice %1 {offsets = [0, 222], sizes = [4, 80], strides = [1, 1]} : vector<4x660xbf16> to vector<4x80xbf16>
    %c8_18 = arith.constant 8 : index
    %c160_19 = arith.constant 160 : index
    %23 = vector.load %arg6[%c8_18, %c160_19] : memref<108x320xbf16, #tpu.memory_space<vmem>>, vector<4x80xbf16>
    tpu.vector_store %arg6[%c8_18, %c160_19], %22 {strides = array<i32>} : memref<108x320xbf16, #tpu.memory_space<vmem>>, vector<4x80xbf16>,
    %24 = vector.extract_strided_slice %1 {offsets = [0, 332], sizes = [4, 80], strides = [1, 1]} : vector<4x660xbf16> to vector<4x80xbf16>
    %c8_20 = arith.constant 8 : index
    %c240_21 = arith.constant 240 : index
    %25 = vector.load %arg6[%c8_20, %c240_21] : memref<108x320xbf16, #tpu.memory_space<vmem>>, vector<4x80xbf16>
    tpu.vector_store %arg6[%c8_20, %c240_21], %24 {strides = array<i32>} : memref<108x320xbf16, #tpu.memory_space<vmem>>, vector<4x80xbf16>,
    %26 = vector.extract_strided_slice %1 {offsets = [0, 10], sizes = [4, 80], strides = [1, 1]} : vector<4x660xbf16> to vector<4x80xbf16>
    %c12 = arith.constant 12 : index
    %c0_22 = arith.constant 0 : index
    %27 = vector.load %arg6[%c12, %c0_22] : memref<108x320xbf16, #tpu.memory_space<vmem>>, vector<4x80xbf16>
    tpu.vector_store %arg6[%c12, %c0_22], %26 {strides = array<i32>} : memref<108x320xbf16, #tpu.memory_space<vmem>>, vector<4x80xbf16>,
    %28 = vector.extract_strided_slice %1 {offsets = [0, 120], sizes = [4, 80], strides = [1, 1]} : vector<4x660xbf16> to vector<4x80xbf16>
    %c12_23 = arith.constant 12 : index
    %c80_24 = arith.constant 80 : index
    %29 = vector.load %arg6[%c12_23, %c80_24] : memref<108x320xbf16, #tpu.memory_space<vmem>>, vector<4x80xbf16>
    tpu.vector_store %arg6[%c12_23, %c80_24], %28 {strides = array<i32>} : memref<108x320xbf16, #tpu.memory_space<vmem>>, vector<4x80xbf16>,
    %30 = vector.extract_strided_slice %1 {offsets = [0, 230], sizes = [4, 80], strides = [1, 1]} : vector<4x660xbf16> to vector<4x80xbf16>
    %c12_25 = arith.constant 12 : index
    %c160_26 = arith.constant 160 : index
    %31 = vector.load %arg6[%c12_25, %c160_26] : memref<108x320xbf16, #tpu.memory_space<vmem>>, vector<4x80xbf16>
    tpu.vector_store %arg6[%c12_25, %c160_26], %30 {strides = array<i32>} : memref<108x320xbf16, #tpu.memory_space<vmem>>, vector<4x80xbf16>,
    %32 = vector.extract_strided_slice %1 {offsets = [0, 340], sizes = [4, 80], strides = [1, 1]} : vector<4x660xbf16> to vector<4x80xbf16>
    %c12_27 = arith.constant 12 : index
    %c240_28 = arith.constant 240 : index
    %33 = vector.load %arg6[%c12_27, %c240_28] : memref<108x320xbf16, #tpu.memory_space<vmem>>, vector<4x80xbf16>
    tpu.vector_store %arg6[%c12_27, %c240_28], %32 {strides = array<i32>} : memref<108x320xbf16, #tpu.memory_space<vmem>>, vector<4x80xbf16>,
    %34 = vector.extract_strided_slice %1 {offsets = [0, 11], sizes = [4, 80], strides = [1, 1]} : vector<4x660xbf16> to vector<4x80xbf16>
    %c16 = arith.constant 16 : index
    %c0_29 = arith.constant 0 : index
    %35 = vector.load %arg6[%c16, %c0_29] : memref<108x320xbf16, #tpu.memory_space<vmem>>, vector<4x80xbf16>
    tpu.vector_store %arg6[%c16, %c0_29], %34 {strides = array<i32>} : memref<108x320xbf16, #tpu.memory_space<vmem>>, vector<4x80xbf16>,
    %36 = vector.extract_strided_slice %1 {offsets = [0, 121], sizes = [4, 80], strides = [1, 1]} : vector<4x660xbf16> to vector<4x80xbf16>
    %c16_30 = arith.constant 16 : index
    %c80_31 = arith.constant 80 : index
    %37 = vector.load %arg6[%c16_30, %c80_31] : memref<108x320xbf16, #tpu.memory_space<vmem>>, vector<4x80xbf16>
    tpu.vector_store %arg6[%c16_30, %c80_31], %36 {strides = array<i32>} : memref<108x320xbf16, #tpu.memory_space<vmem>>, vector<4x80xbf16>,
    %38 = vector.extract_strided_slice %1 {offsets = [0, 231], sizes = [4, 80], strides = [1, 1]} : vector<4x660xbf16> to vector<4x80xbf16>
    %c16_32 = arith.constant 16 : index
    %c160_33 = arith.constant 160 : index
    %39 = vector.load %arg6[%c16_32, %c160_33] : memref<108x320xbf16, #tpu.memory_space<vmem>>, vector<4x80xbf16>
    tpu.vector_store %arg6[%c16_32, %c160_33], %38 {strides = array<i32>} : memref<108x320xbf16, #tpu.memory_space<vmem>>, vector<4x80xbf16>,
    %40 = vector.extract_strided_slice %1 {offsets = [0, 341], sizes = [4, 80], strides = [1, 1]} : vector<4x660xbf16> to vector<4x80xbf16>
    %c16_34 = arith.constant 16 : index
    %c240_35 = arith.constant 240 : index
    %41 = vector.load %arg6[%c16_34, %c240_35] : memref<108x320xbf16, #tpu.memory_space<vmem>>, vector<4x80xbf16>
    tpu.vector_store %arg6[%c16_34, %c240_35], %40 {strides = array<i32>} : memref<108x320xbf16, #tpu.memory_space<vmem>>, vector<4x80xbf16>,
    %42 = vector.extract_strided_slice %1 {offsets = [0, 12], sizes = [4, 80], strides = [1, 1]} : vector<4x660xbf16> to vector<4x80xbf16>
    %c20 = arith.constant 20 : index
    %c0_36 = arith.constant 0 : index
    %43 = vector.load %arg6[%c20, %c0_36] : memref<108x320xbf16, #tpu.memory_space<vmem>>, vector<4x80xbf16>
    tpu.vector_store %arg6[%c20, %c0_36], %42 {strides = array<i32>} : memref<108x320xbf16, #tpu.memory_space<vmem>>, vector<4x80xbf16>,
    %44 = vector.extract_strided_slice %1 {offsets = [0, 122], sizes = [4, 80], strides = [1, 1]} : vector<4x660xbf16> to vector<4x80xbf16>
    %c20_37 = arith.constant 20 : index
    %c80_38 = arith.constant 80 : index
    %45 = vector.load %arg6[%c20_37, %c80_38] : memref<108x320xbf16, #tpu.memory_space<vmem>>, vector<4x80xbf16>
    tpu.vector_store %arg6[%c20_37, %c80_38], %44 {strides = array<i32>} : memref<108x320xbf16, #tpu.memory_space<vmem>>, vector<4x80xbf16>,
    %46 = vector.extract_strided_slice %1 {offsets = [0, 232], sizes = [4, 80], strides = [1, 1]} : vector<4x660xbf16> to vector<4x80xbf16>
    %c20_39 = arith.constant 20 : index
    %c160_40 = arith.constant 160 : index
    %47 = vector.load %arg6[%c20_39, %c160_40] : memref<108x320xbf16, #tpu.memory_space<vmem>>, vector<4x80xbf16>
    tpu.vector_store %arg6[%c20_39, %c160_40], %46 {strides = array<i32>} : memref<108x320xbf16, #tpu.memory_space<vmem>>, vector<4x80xbf16>,
    %48 = vector.extract_strided_slice %1 {offsets = [0, 342], sizes = [4, 80], strides = [1, 1]} : vector<4x660xbf16> to vector<4x80xbf16>
    %c20_41 = arith.constant 20 : index
    %c240_42 = arith.constant 240 : index
    %49 = vector.load %arg6[%c20_41, %c240_42] : memref<108x320xbf16, #tpu.memory_space<vmem>>, vector<4x80xbf16>
    tpu.vector_store %arg6[%c20_41, %c240_42], %48 {strides = array<i32>} : memref<108x320xbf16, #tpu.memory_space<vmem>>, vector<4x80xbf16>,
    %50 = vector.extract_strided_slice %1 {offsets = [0, 20], sizes = [4, 80], strides = [1, 1]} : vector<4x660xbf16> to vector<4x80xbf16>
    %c24 = arith.constant 24 : index
    %c0_43 = arith.constant 0 : index
    %51 = vector.load %arg6[%c24, %c0_43] : memref<108x320xbf16, #tpu.memory_space<vmem>>, vector<4x80xbf16>
    tpu.vector_store %arg6[%c24, %c0_43], %50 {strides = array<i32>} : memref<108x320xbf16, #tpu.memory_space<vmem>>, vector<4x80xbf16>,
    %52 = vector.extract_strided_slice %1 {offsets = [0, 130], sizes = [4, 80], strides = [1, 1]} : vector<4x660xbf16> to vector<4x80xbf16>
    %c24_44 = arith.constant 24 : index
    %c80_45 = arith.constant 80 : index
    %53 = vector.load %arg6[%c24_44, %c80_45] : memref<108x320xbf16, #tpu.memory_space<vmem>>, vector<4x80xbf16>
    tpu.vector_store %arg6[%c24_44, %c80_45], %52 {strides = array<i32>} : memref<108x320xbf16, #tpu.memory_space<vmem>>, vector<4x80xbf16>,
    %54 = vector.extract_strided_slice %1 {offsets = [0, 240], sizes = [4, 80], strides = [1, 1]} : vector<4x660xbf16> to vector<4x80xbf16>
    %c24_46 = arith.constant 24 : index
    %c160_47 = arith.constant 160 : index
    %55 = vector.load %arg6[%c24_46, %c160_47] : memref<108x320xbf16, #tpu.memory_space<vmem>>, vector<4x80xbf16>
    tpu.vector_store %arg6[%c24_46, %c160_47], %54 {strides = array<i32>} : memref<108x320xbf16, #tpu.memory_space<vmem>>, vector<4x80xbf16>,
    %56 = vector.extract_strided_slice %1 {offsets = [0, 350], sizes = [4, 80], strides = [1, 1]} : vector<4x660xbf16> to vector<4x80xbf16>
    %c24_48 = arith.constant 24 : index
    %c240_49 = arith.constant 240 : index
    %57 = vector.load %arg6[%c24_48, %c240_49] : memref<108x320xbf16, #tpu.memory_space<vmem>>, vector<4x80xbf16>
    tpu.vector_store %arg6[%c24_48, %c240_49], %56 {strides = array<i32>} : memref<108x320xbf16, #tpu.memory_space<vmem>>, vector<4x80xbf16>,
    %58 = vector.extract_strided_slice %1 {offsets = [0, 21], sizes = [4, 80], strides = [1, 1]} : vector<4x660xbf16> to vector<4x80xbf16>
    %c28 = arith.constant 28 : index
    %c0_50 = arith.constant 0 : index
    %59 = vector.load %arg6[%c28, %c0_50] : memref<108x320xbf16, #tpu.memory_space<vmem>>, vector<4x80xbf16>
    tpu.vector_store %arg6[%c28, %c0_50], %58 {strides = array<i32>} : memref<108x320xbf16, #tpu.memory_space<vmem>>, vector<4x80xbf16>,
    %60 = vector.extract_strided_slice %1 {offsets = [0, 131], sizes = [4, 80], strides = [1, 1]} : vector<4x660xbf16> to vector<4x80xbf16>
    %c28_51 = arith.constant 28 : index
    %c80_52 = arith.constant 80 : index
    %61 = vector.load %arg6[%c28_51, %c80_52] : memref<108x320xbf16, #tpu.memory_space<vmem>>, vector<4x80xbf16>
    tpu.vector_store %arg6[%c28_51, %c80_52], %60 {strides = array<i32>} : memref<108x320xbf16, #tpu.memory_space<vmem>>, vector<4x80xbf16>,
    %62 = vector.extract_strided_slice %1 {offsets = [0, 241], sizes = [4, 80], strides = [1, 1]} : vector<4x660xbf16> to vector<4x80xbf16>
    %c28_53 = arith.constant 28 : index
    %c160_54 = arith.constant 160 : index
    %63 = vector.load %arg6[%c28_53, %c160_54] : memref<108x320xbf16, #tpu.memory_space<vmem>>, vector<4x80xbf16>
    tpu.vector_store %arg6[%c28_53, %c160_54], %62 {strides = array<i32>} : memref<108x320xbf16, #tpu.memory_space<vmem>>, vector<4x80xbf16>,
    %64 = vector.extract_strided_slice %1 {offsets = [0, 351], sizes = [4, 80], strides = [1, 1]} : vector<4x660xbf16> to vector<4x80xbf16>
    %c28_55 = arith.constant 28 : index
    %c240_56 = arith.constant 240 : index
    %65 = vector.load %arg6[%c28_55, %c240_56] : memref<108x320xbf16, #tpu.memory_space<vmem>>, vector<4x80xbf16>
    tpu.vector_store %arg6[%c28_55, %c240_56], %64 {strides = array<i32>} : memref<108x320xbf16, #tpu.memory_space<vmem>>, vector<4x80xbf16>,
    %66 = vector.extract_strided_slice %1 {offsets = [0, 22], sizes = [4, 80], strides = [1, 1]} : vector<4x660xbf16> to vector<4x80xbf16>
    %c32 = arith.constant 32 : index
    %c0_57 = arith.constant 0 : index
    %67 = vector.load %arg6[%c32, %c0_57] : memref<108x320xbf16, #tpu.memory_space<vmem>>, vector<4x80xbf16>
    tpu.vector_store %arg6[%c32, %c0_57], %66 {strides = array<i32>} : memref<108x320xbf16, #tpu.memory_space<vmem>>, vector<4x80xbf16>,
    %68 = vector.extract_strided_slice %1 {offsets = [0, 132], sizes = [4, 80], strides = [1, 1]} : vector<4x660xbf16> to vector<4x80xbf16>
    %c32_58 = arith.constant 32 : index
    %c80_59 = arith.constant 80 : index
    %69 = vector.load %arg6[%c32_58, %c80_59] : memref<108x320xbf16, #tpu.memory_space<vmem>>, vector<4x80xbf16>
    tpu.vector_store %arg6[%c32_58, %c80_59], %68 {strides = array<i32>} : memref<108x320xbf16, #tpu.memory_space<vmem>>, vector<4x80xbf16>,
    %70 = vector.extract_strided_slice %1 {offsets = [0, 242], sizes = [4, 80], strides = [1, 1]} : vector<4x660xbf16> to vector<4x80xbf16>
    %c32_60 = arith.constant 32 : index
    %c160_61 = arith.constant 160 : index
    %71 = vector.load %arg6[%c32_60, %c160_61] : memref<108x320xbf16, #tpu.memory_space<vmem>>, vector<4x80xbf16>
    tpu.vector_store %arg6[%c32_60, %c160_61], %70 {strides = array<i32>} : memref<108x320xbf16, #tpu.memory_space<vmem>>, vector<4x80xbf16>,
    %72 = vector.extract_strided_slice %1 {offsets = [0, 352], sizes = [4, 80], strides = [1, 1]} : vector<4x660xbf16> to vector<4x80xbf16>
    %c32_62 = arith.constant 32 : index
    %c240_63 = arith.constant 240 : index
    %73 = vector.load %arg6[%c32_62, %c240_63] : memref<108x320xbf16, #tpu.memory_space<vmem>>, vector<4x80xbf16>
    tpu.vector_store %arg6[%c32_62, %c240_63], %72 {strides = array<i32>} : memref<108x320xbf16, #tpu.memory_space<vmem>>, vector<4x80xbf16>,
    %74 = vector.extract_strided_slice %1 {offsets = [0, 110], sizes = [4, 80], strides = [1, 1]} : vector<4x660xbf16> to vector<4x80xbf16>
    %c36 = arith.constant 36 : index
    %c0_64 = arith.constant 0 : index
    %75 = vector.load %arg6[%c36, %c0_64] : memref<108x320xbf16, #tpu.memory_space<vmem>>, vector<4x80xbf16>
    tpu.vector_store %arg6[%c36, %c0_64], %74 {strides = array<i32>} : memref<108x320xbf16, #tpu.memory_space<vmem>>, vector<4x80xbf16>,
    %76 = vector.extract_strided_slice %1 {offsets = [0, 220], sizes = [4, 80], strides = [1, 1]} : vector<4x660xbf16> to vector<4x80xbf16>
    %c36_65 = arith.constant 36 : index
    %c80_66 = arith.constant 80 : index
    %77 = vector.load %arg6[%c36_65, %c80_66] : memref<108x320xbf16, #tpu.memory_space<vmem>>, vector<4x80xbf16>
    tpu.vector_store %arg6[%c36_65, %c80_66], %76 {strides = array<i32>} : memref<108x320xbf16, #tpu.memory_space<vmem>>, vector<4x80xbf16>,
    %78 = vector.extract_strided_slice %1 {offsets = [0, 330], sizes = [4, 80], strides = [1, 1]} : vector<4x660xbf16> to vector<4x80xbf16>
    %c36_67 = arith.constant 36 : index
    %c160_68 = arith.constant 160 : index
    %79 = vector.load %arg6[%c36_67, %c160_68] : memref<108x320xbf16, #tpu.memory_space<vmem>>, vector<4x80xbf16>
    tpu.vector_store %arg6[%c36_67, %c160_68], %78 {strides = array<i32>} : memref<108x320xbf16, #tpu.memory_space<vmem>>, vector<4x80xbf16>,
    %80 = vector.extract_strided_slice %1 {offsets = [0, 440], sizes = [4, 80], strides = [1, 1]} : vector<4x660xbf16> to vector<4x80xbf16>
    %c36_69 = arith.constant 36 : index
    %c240_70 = arith.constant 240 : index
    %81 = vector.load %arg6[%c36_69, %c240_70] : memref<108x320xbf16, #tpu.memory_space<vmem>>, vector<4x80xbf16>
    tpu.vector_store %arg6[%c36_69, %c240_70], %80 {strides = array<i32>} : memref<108x320xbf16, #tpu.memory_space<vmem>>, vector<4x80xbf16>,
    %82 = vector.extract_strided_slice %1 {offsets = [0, 111], sizes = [4, 80], strides = [1, 1]} : vector<4x660xbf16> to vector<4x80xbf16>
    %c40 = arith.constant 40 : index
    %c0_71 = arith.constant 0 : index
    %83 = vector.load %arg6[%c40, %c0_71] : memref<108x320xbf16, #tpu.memory_space<vmem>>, vector<4x80xbf16>
    tpu.vector_store %arg6[%c40, %c0_71], %82 {strides = array<i32>} : memref<108x320xbf16, #tpu.memory_space<vmem>>, vector<4x80xbf16>,
    %84 = vector.extract_strided_slice %1 {offsets = [0, 221], sizes = [4, 80], strides = [1, 1]} : vector<4x660xbf16> to vector<4x80xbf16>
    %c40_72 = arith.constant 40 : index
    %c80_73 = arith.constant 80 : index
    %85 = vector.load %arg6[%c40_72, %c80_73] : memref<108x320xbf16, #tpu.memory_space<vmem>>, vector<4x80xbf16>
    tpu.vector_store %arg6[%c40_72, %c80_73], %84 {strides = array<i32>} : memref<108x320xbf16, #tpu.memory_space<vmem>>, vector<4x80xbf16>,
    %86 = vector.extract_strided_slice %1 {offsets = [0, 331], sizes = [4, 80], strides = [1, 1]} : vector<4x660xbf16> to vector<4x80xbf16>
    %c40_74 = arith.constant 40 : index
    %c160_75 = arith.constant 160 : index
    %87 = vector.load %arg6[%c40_74, %c160_75] : memref<108x320xbf16, #tpu.memory_space<vmem>>, vector<4x80xbf16>
    tpu.vector_store %arg6[%c40_74, %c160_75], %86 {strides = array<i32>} : memref<108x320xbf16, #tpu.memory_space<vmem>>, vector<4x80xbf16>,
    %88 = vector.extract_strided_slice %1 {offsets = [0, 441], sizes = [4, 80], strides = [1, 1]} : vector<4x660xbf16> to vector<4x80xbf16>
    %c40_76 = arith.constant 40 : index
    %c240_77 = arith.constant 240 : index
    %89 = vector.load %arg6[%c40_76, %c240_77] : memref<108x320xbf16, #tpu.memory_space<vmem>>, vector<4x80xbf16>
    tpu.vector_store %arg6[%c40_76, %c240_77], %88 {strides = array<i32>} : memref<108x320xbf16, #tpu.memory_space<vmem>>, vector<4x80xbf16>,
    %90 = vector.extract_strided_slice %1 {offsets = [0, 112], sizes = [4, 80], strides = [1, 1]} : vector<4x660xbf16> to vector<4x80xbf16>
    %c44 = arith.constant 44 : index
    %c0_78 = arith.constant 0 : index
    %91 = vector.load %arg6[%c44, %c0_78] : memref<108x320xbf16, #tpu.memory_space<vmem>>, vector<4x80xbf16>
    tpu.vector_store %arg6[%c44, %c0_78], %90 {strides = array<i32>} : memref<108x320xbf16, #tpu.memory_space<vmem>>, vector<4x80xbf16>,
    %92 = vector.extract_strided_slice %1 {offsets = [0, 222], sizes = [4, 80], strides = [1, 1]} : vector<4x660xbf16> to vector<4x80xbf16>
    %c44_79 = arith.constant 44 : index
    %c80_80 = arith.constant 80 : index
    %93 = vector.load %arg6[%c44_79, %c80_80] : memref<108x320xbf16, #tpu.memory_space<vmem>>, vector<4x80xbf16>
    tpu.vector_store %arg6[%c44_79, %c80_80], %92 {strides = array<i32>} : memref<108x320xbf16, #tpu.memory_space<vmem>>, vector<4x80xbf16>,
    %94 = vector.extract_strided_slice %1 {offsets = [0, 332], sizes = [4, 80], strides = [1, 1]} : vector<4x660xbf16> to vector<4x80xbf16>
    %c44_81 = arith.constant 44 : index
    %c160_82 = arith.constant 160 : index
    %95 = vector.load %arg6[%c44_81, %c160_82] : memref<108x320xbf16, #tpu.memory_space<vmem>>, vector<4x80xbf16>
    tpu.vector_store %arg6[%c44_81, %c160_82], %94 {strides = array<i32>} : memref<108x320xbf16, #tpu.memory_space<vmem>>, vector<4x80xbf16>,
    %96 = vector.extract_strided_slice %1 {offsets = [0, 442], sizes = [4, 80], strides = [1, 1]} : vector<4x660xbf16> to vector<4x80xbf16>
    %c44_83 = arith.constant 44 : index
    %c240_84 = arith.constant 240 : index
    %97 = vector.load %arg6[%c44_83, %c240_84] : memref<108x320xbf16, #tpu.memory_space<vmem>>, vector<4x80xbf16>
    tpu.vector_store %arg6[%c44_83, %c240_84], %96 {strides = array<i32>} : memref<108x320xbf16, #tpu.memory_space<vmem>>, vector<4x80xbf16>,
    %98 = vector.extract_strided_slice %1 {offsets = [0, 120], sizes = [4, 80], strides = [1, 1]} : vector<4x660xbf16> to vector<4x80xbf16>
    %c48 = arith.constant 48 : index
    %c0_85 = arith.constant 0 : index
    %99 = vector.load %arg6[%c48, %c0_85] : memref<108x320xbf16, #tpu.memory_space<vmem>>, vector<4x80xbf16>
    tpu.vector_store %arg6[%c48, %c0_85], %98 {strides = array<i32>} : memref<108x320xbf16, #tpu.memory_space<vmem>>, vector<4x80xbf16>,
    %100 = vector.extract_strided_slice %1 {offsets = [0, 230], sizes = [4, 80], strides = [1, 1]} : vector<4x660xbf16> to vector<4x80xbf16>
    %c48_86 = arith.constant 48 : index
    %c80_87 = arith.constant 80 : index
    %101 = vector.load %arg6[%c48_86, %c80_87] : memref<108x320xbf16, #tpu.memory_space<vmem>>, vector<4x80xbf16>
    tpu.vector_store %arg6[%c48_86, %c80_87], %100 {strides = array<i32>} : memref<108x320xbf16, #tpu.memory_space<vmem>>, vector<4x80xbf16>,
    %102 = vector.extract_strided_slice %1 {offsets = [0, 340], sizes = [4, 80], strides = [1, 1]} : vector<4x660xbf16> to vector<4x80xbf16>
    %c48_88 = arith.constant 48 : index
    %c160_89 = arith.constant 160 : index
    %103 = vector.load %arg6[%c48_88, %c160_89] : memref<108x320xbf16, #tpu.memory_space<vmem>>, vector<4x80xbf16>
    tpu.vector_store %arg6[%c48_88, %c160_89], %102 {strides = array<i32>} : memref<108x320xbf16, #tpu.memory_space<vmem>>, vector<4x80xbf16>,
    %104 = vector.extract_strided_slice %1 {offsets = [0, 450], sizes = [4, 80], strides = [1, 1]} : vector<4x660xbf16> to vector<4x80xbf16>
    %c48_90 = arith.constant 48 : index
    %c240_91 = arith.constant 240 : index
    %105 = vector.load %arg6[%c48_90, %c240_91] : memref<108x320xbf16, #tpu.memory_space<vmem>>, vector<4x80xbf16>
    tpu.vector_store %arg6[%c48_90, %c240_91], %104 {strides = array<i32>} : memref<108x320xbf16, #tpu.memory_space<vmem>>, vector<4x80xbf16>,
    %106 = vector.extract_strided_slice %1 {offsets = [0, 121], sizes = [4, 80], strides = [1, 1]} : vector<4x660xbf16> to vector<4x80xbf16>
    %c52 = arith.constant 52 : index
    %c0_92 = arith.constant 0 : index
    %107 = vector.load %arg6[%c52, %c0_92] : memref<108x320xbf16, #tpu.memory_space<vmem>>, vector<4x80xbf16>
    tpu.vector_store %arg6[%c52, %c0_92], %106 {strides = array<i32>} : memref<108x320xbf16, #tpu.memory_space<vmem>>, vector<4x80xbf16>,
    %108 = vector.extract_strided_slice %1 {offsets = [0, 231], sizes = [4, 80], strides = [1, 1]} : vector<4x660xbf16> to vector<4x80xbf16>
    %c52_93 = arith.constant 52 : index
    %c80_94 = arith.constant 80 : index
    %109 = vector.load %arg6[%c52_93, %c80_94] : memref<108x320xbf16, #tpu.memory_space<vmem>>, vector<4x80xbf16>
    tpu.vector_store %arg6[%c52_93, %c80_94], %108 {strides = array<i32>} : memref<108x320xbf16, #tpu.memory_space<vmem>>, vector<4x80xbf16>,
    %110 = vector.extract_strided_slice %1 {offsets = [0, 341], sizes = [4, 80], strides = [1, 1]} : vector<4x660xbf16> to vector<4x80xbf16>
    %c52_95 = arith.constant 52 : index
    %c160_96 = arith.constant 160 : index
    %111 = vector.load %arg6[%c52_95, %c160_96] : memref<108x320xbf16, #tpu.memory_space<vmem>>, vector<4x80xbf16>
    tpu.vector_store %arg6[%c52_95, %c160_96], %110 {strides = array<i32>} : memref<108x320xbf16, #tpu.memory_space<vmem>>, vector<4x80xbf16>,
    %112 = vector.extract_strided_slice %1 {offsets = [0, 451], sizes = [4, 80], strides = [1, 1]} : vector<4x660xbf16> to vector<4x80xbf16>
    %c52_97 = arith.constant 52 : index
    %c240_98 = arith.constant 240 : index
    %113 = vector.load %arg6[%c52_97, %c240_98] : memref<108x320xbf16, #tpu.memory_space<vmem>>, vector<4x80xbf16>
    tpu.vector_store %arg6[%c52_97, %c240_98], %112 {strides = array<i32>} : memref<108x320xbf16, #tpu.memory_space<vmem>>, vector<4x80xbf16>,
    %114 = vector.extract_strided_slice %1 {offsets = [0, 122], sizes = [4, 80], strides = [1, 1]} : vector<4x660xbf16> to vector<4x80xbf16>
    %c56 = arith.constant 56 : index
    %c0_99 = arith.constant 0 : index
    %115 = vector.load %arg6[%c56, %c0_99] : memref<108x320xbf16, #tpu.memory_space<vmem>>, vector<4x80xbf16>
    tpu.vector_store %arg6[%c56, %c0_99], %114 {strides = array<i32>} : memref<108x320xbf16, #tpu.memory_space<vmem>>, vector<4x80xbf16>,
    %116 = vector.extract_strided_slice %1 {offsets = [0, 232], sizes = [4, 80], strides = [1, 1]} : vector<4x660xbf16> to vector<4x80xbf16>
    %c56_100 = arith.constant 56 : index
    %c80_101 = arith.constant 80 : index
    %117 = vector.load %arg6[%c56_100, %c80_101] : memref<108x320xbf16, #tpu.memory_space<vmem>>, vector<4x80xbf16>
    tpu.vector_store %arg6[%c56_100, %c80_101], %116 {strides = array<i32>} : memref<108x320xbf16, #tpu.memory_space<vmem>>, vector<4x80xbf16>,
    %118 = vector.extract_strided_slice %1 {offsets = [0, 342], sizes = [4, 80], strides = [1, 1]} : vector<4x660xbf16> to vector<4x80xbf16>
    %c56_102 = arith.constant 56 : index
    %c160_103 = arith.constant 160 : index
    %119 = vector.load %arg6[%c56_102, %c160_103] : memref<108x320xbf16, #tpu.memory_space<vmem>>, vector<4x80xbf16>
    tpu.vector_store %arg6[%c56_102, %c160_103], %118 {strides = array<i32>} : memref<108x320xbf16, #tpu.memory_space<vmem>>, vector<4x80xbf16>,
    %120 = vector.extract_strided_slice %1 {offsets = [0, 452], sizes = [4, 80], strides = [1, 1]} : vector<4x660xbf16> to vector<4x80xbf16>
    %c56_104 = arith.constant 56 : index
    %c240_105 = arith.constant 240 : index
    %121 = vector.load %arg6[%c56_104, %c240_105] : memref<108x320xbf16, #tpu.memory_space<vmem>>, vector<4x80xbf16>
    tpu.vector_store %arg6[%c56_104, %c240_105], %120 {strides = array<i32>} : memref<108x320xbf16, #tpu.memory_space<vmem>>, vector<4x80xbf16>,
    %122 = vector.extract_strided_slice %1 {offsets = [0, 130], sizes = [4, 80], strides = [1, 1]} : vector<4x660xbf16> to vector<4x80xbf16>
    %c60 = arith.constant 60 : index
    %c0_106 = arith.constant 0 : index
    %123 = vector.load %arg6[%c60, %c0_106] : memref<108x320xbf16, #tpu.memory_space<vmem>>, vector<4x80xbf16>
    tpu.vector_store %arg6[%c60, %c0_106], %122 {strides = array<i32>} : memref<108x320xbf16, #tpu.memory_space<vmem>>, vector<4x80xbf16>,
    %124 = vector.extract_strided_slice %1 {offsets = [0, 240], sizes = [4, 80], strides = [1, 1]} : vector<4x660xbf16> to vector<4x80xbf16>
    %c60_107 = arith.constant 60 : index
    %c80_108 = arith.constant 80 : index
    %125 = vector.load %arg6[%c60_107, %c80_108] : memref<108x320xbf16, #tpu.memory_space<vmem>>, vector<4x80xbf16>
    tpu.vector_store %arg6[%c60_107, %c80_108], %124 {strides = array<i32>} : memref<108x320xbf16, #tpu.memory_space<vmem>>, vector<4x80xbf16>,
    %126 = vector.extract_strided_slice %1 {offsets = [0, 350], sizes = [4, 80], strides = [1, 1]} : vector<4x660xbf16> to vector<4x80xbf16>
    %c60_109 = arith.constant 60 : index
    %c160_110 = arith.constant 160 : index
    %127 = vector.load %arg6[%c60_109, %c160_110] : memref<108x320xbf16, #tpu.memory_space<vmem>>, vector<4x80xbf16>
    tpu.vector_store %arg6[%c60_109, %c160_110], %126 {strides = array<i32>} : memref<108x320xbf16, #tpu.memory_space<vmem>>, vector<4x80xbf16>,
    %128 = vector.extract_strided_slice %1 {offsets = [0, 460], sizes = [4, 80], strides = [1, 1]} : vector<4x660xbf16> to vector<4x80xbf16>
    %c60_111 = arith.constant 60 : index
    %c240_112 = arith.constant 240 : index
    %129 = vector.load %arg6[%c60_111, %c240_112] : memref<108x320xbf16, #tpu.memory_space<vmem>>, vector<4x80xbf16>
    tpu.vector_store %arg6[%c60_111, %c240_112], %128 {strides = array<i32>} : memref<108x320xbf16, #tpu.memory_space<vmem>>, vector<4x80xbf16>,
    %130 = vector.extract_strided_slice %1 {offsets = [0, 131], sizes = [4, 80], strides = [1, 1]} : vector<4x660xbf16> to vector<4x80xbf16>
    %c64 = arith.constant 64 : index
    %c0_113 = arith.constant 0 : index
    %131 = vector.load %arg6[%c64, %c0_113] : memref<108x320xbf16, #tpu.memory_space<vmem>>, vector<4x80xbf16>
    tpu.vector_store %arg6[%c64, %c0_113], %130 {strides = array<i32>} : memref<108x320xbf16, #tpu.memory_space<vmem>>, vector<4x80xbf16>,
    %132 = vector.extract_strided_slice %1 {offsets = [0, 241], sizes = [4, 80], strides = [1, 1]} : vector<4x660xbf16> to vector<4x80xbf16>
    %c64_114 = arith.constant 64 : index
    %c80_115 = arith.constant 80 : index
    %133 = vector.load %arg6[%c64_114, %c80_115] : memref<108x320xbf16, #tpu.memory_space<vmem>>, vector<4x80xbf16>
    tpu.vector_store %arg6[%c64_114, %c80_115], %132 {strides = array<i32>} : memref<108x320xbf16, #tpu.memory_space<vmem>>, vector<4x80xbf16>,
    %134 = vector.extract_strided_slice %1 {offsets = [0, 351], sizes = [4, 80], strides = [1, 1]} : vector<4x660xbf16> to vector<4x80xbf16>
    %c64_116 = arith.constant 64 : index
    %c160_117 = arith.constant 160 : index
    %135 = vector.load %arg6[%c64_116, %c160_117] : memref<108x320xbf16, #tpu.memory_space<vmem>>, vector<4x80xbf16>
    tpu.vector_store %arg6[%c64_116, %c160_117], %134 {strides = array<i32>} : memref<108x320xbf16, #tpu.memory_space<vmem>>, vector<4x80xbf16>,
    %136 = vector.extract_strided_slice %1 {offsets = [0, 461], sizes = [4, 80], strides = [1, 1]} : vector<4x660xbf16> to vector<4x80xbf16>
    %c64_118 = arith.constant 64 : index
    %c240_119 = arith.constant 240 : index
    %137 = vector.load %arg6[%c64_118, %c240_119] : memref<108x320xbf16, #tpu.memory_space<vmem>>, vector<4x80xbf16>
    tpu.vector_store %arg6[%c64_118, %c240_119], %136 {strides = array<i32>} : memref<108x320xbf16, #tpu.memory_space<vmem>>, vector<4x80xbf16>,
    %138 = vector.extract_strided_slice %1 {offsets = [0, 132], sizes = [4, 80], strides = [1, 1]} : vector<4x660xbf16> to vector<4x80xbf16>
    %c68 = arith.constant 68 : index
    %c0_120 = arith.constant 0 : index
    %139 = vector.load %arg6[%c68, %c0_120] : memref<108x320xbf16, #tpu.memory_space<vmem>>, vector<4x80xbf16>
    tpu.vector_store %arg6[%c68, %c0_120], %138 {strides = array<i32>} : memref<108x320xbf16, #tpu.memory_space<vmem>>, vector<4x80xbf16>,
    %140 = vector.extract_strided_slice %1 {offsets = [0, 242], sizes = [4, 80], strides = [1, 1]} : vector<4x660xbf16> to vector<4x80xbf16>
    %c68_121 = arith.constant 68 : index
    %c80_122 = arith.constant 80 : index
    %141 = vector.load %arg6[%c68_121, %c80_122] : memref<108x320xbf16, #tpu.memory_space<vmem>>, vector<4x80xbf16>
    tpu.vector_store %arg6[%c68_121, %c80_122], %140 {strides = array<i32>} : memref<108x320xbf16, #tpu.memory_space<vmem>>, vector<4x80xbf16>,
    %142 = vector.extract_strided_slice %1 {offsets = [0, 352], sizes = [4, 80], strides = [1, 1]} : vector<4x660xbf16> to vector<4x80xbf16>
    %c68_123 = arith.constant 68 : index
    %c160_124 = arith.constant 160 : index
    %143 = vector.load %arg6[%c68_123, %c160_124] : memref<108x320xbf16, #tpu.memory_space<vmem>>, vector<4x80xbf16>
    tpu.vector_store %arg6[%c68_123, %c160_124], %142 {strides = array<i32>} : memref<108x320xbf16, #tpu.memory_space<vmem>>, vector<4x80xbf16>,
    %144 = vector.extract_strided_slice %1 {offsets = [0, 462], sizes = [4, 80], strides = [1, 1]} : vector<4x660xbf16> to vector<4x80xbf16>
    %c68_125 = arith.constant 68 : index
    %c240_126 = arith.constant 240 : index
    %145 = vector.load %arg6[%c68_125, %c240_126] : memref<108x320xbf16, #tpu.memory_space<vmem>>, vector<4x80xbf16>
    tpu.vector_store %arg6[%c68_125, %c240_126], %144 {strides = array<i32>} : memref<108x320xbf16, #tpu.memory_space<vmem>>, vector<4x80xbf16>,
    %146 = vector.extract_strided_slice %1 {offsets = [0, 220], sizes = [4, 80], strides = [1, 1]} : vector<4x660xbf16> to vector<4x80xbf16>
    %c72 = arith.constant 72 : index
    %c0_127 = arith.constant 0 : index
    %147 = vector.load %arg6[%c72, %c0_127] : memref<108x320xbf16, #tpu.memory_space<vmem>>, vector<4x80xbf16>
    tpu.vector_store %arg6[%c72, %c0_127], %146 {strides = array<i32>} : memref<108x320xbf16, #tpu.memory_space<vmem>>, vector<4x80xbf16>,
    %148 = vector.extract_strided_slice %1 {offsets = [0, 330], sizes = [4, 80], strides = [1, 1]} : vector<4x660xbf16> to vector<4x80xbf16>
    %c72_128 = arith.constant 72 : index
    %c80_129 = arith.constant 80 : index
    %149 = vector.load %arg6[%c72_128, %c80_129] : memref<108x320xbf16, #tpu.memory_space<vmem>>, vector<4x80xbf16>
    tpu.vector_store %arg6[%c72_128, %c80_129], %148 {strides = array<i32>} : memref<108x320xbf16, #tpu.memory_space<vmem>>, vector<4x80xbf16>,
    %150 = vector.extract_strided_slice %1 {offsets = [0, 440], sizes = [4, 80], strides = [1, 1]} : vector<4x660xbf16> to vector<4x80xbf16>
    %c72_130 = arith.constant 72 : index
    %c160_131 = arith.constant 160 : index
    %151 = vector.load %arg6[%c72_130, %c160_131] : memref<108x320xbf16, #tpu.memory_space<vmem>>, vector<4x80xbf16>
    tpu.vector_store %arg6[%c72_130, %c160_131], %150 {strides = array<i32>} : memref<108x320xbf16, #tpu.memory_space<vmem>>, vector<4x80xbf16>,
    %152 = vector.extract_strided_slice %1 {offsets = [0, 550], sizes = [4, 80], strides = [1, 1]} : vector<4x660xbf16> to vector<4x80xbf16>
    %c72_132 = arith.constant 72 : index
    %c240_133 = arith.constant 240 : index
    %153 = vector.load %arg6[%c72_132, %c240_133] : memref<108x320xbf16, #tpu.memory_space<vmem>>, vector<4x80xbf16>
    tpu.vector_store %arg6[%c72_132, %c240_133], %152 {strides = array<i32>} : memref<108x320xbf16, #tpu.memory_space<vmem>>, vector<4x80xbf16>,
    %154 = vector.extract_strided_slice %1 {offsets = [0, 221], sizes = [4, 80], strides = [1, 1]} : vector<4x660xbf16> to vector<4x80xbf16>
    %c76 = arith.constant 76 : index
    %c0_134 = arith.constant 0 : index
    %155 = vector.load %arg6[%c76, %c0_134] : memref<108x320xbf16, #tpu.memory_space<vmem>>, vector<4x80xbf16>
    tpu.vector_store %arg6[%c76, %c0_134], %154 {strides = array<i32>} : memref<108x320xbf16, #tpu.memory_space<vmem>>, vector<4x80xbf16>,
    %156 = vector.extract_strided_slice %1 {offsets = [0, 331], sizes = [4, 80], strides = [1, 1]} : vector<4x660xbf16> to vector<4x80xbf16>
    %c76_135 = arith.constant 76 : index
    %c80_136 = arith.constant 80 : index
    %157 = vector.load %arg6[%c76_135, %c80_136] : memref<108x320xbf16, #tpu.memory_space<vmem>>, vector<4x80xbf16>
    tpu.vector_store %arg6[%c76_135, %c80_136], %156 {strides = array<i32>} : memref<108x320xbf16, #tpu.memory_space<vmem>>, vector<4x80xbf16>,
    %158 = vector.extract_strided_slice %1 {offsets = [0, 441], sizes = [4, 80], strides = [1, 1]} : vector<4x660xbf16> to vector<4x80xbf16>
    %c76_137 = arith.constant 76 : index
    %c160_138 = arith.constant 160 : index
    %159 = vector.load %arg6[%c76_137, %c160_138] : memref<108x320xbf16, #tpu.memory_space<vmem>>, vector<4x80xbf16>
    tpu.vector_store %arg6[%c76_137, %c160_138], %158 {strides = array<i32>} : memref<108x320xbf16, #tpu.memory_space<vmem>>, vector<4x80xbf16>,
    %160 = vector.extract_strided_slice %1 {offsets = [0, 551], sizes = [4, 80], strides = [1, 1]} : vector<4x660xbf16> to vector<4x80xbf16>
    %c76_139 = arith.constant 76 : index
    %c240_140 = arith.constant 240 : index
    %161 = vector.load %arg6[%c76_139, %c240_140] : memref<108x320xbf16, #tpu.memory_space<vmem>>, vector<4x80xbf16>
    tpu.vector_store %arg6[%c76_139, %c240_140], %160 {strides = array<i32>} : memref<108x320xbf16, #tpu.memory_space<vmem>>, vector<4x80xbf16>,
    %162 = vector.extract_strided_slice %1 {offsets = [0, 222], sizes = [4, 80], strides = [1, 1]} : vector<4x660xbf16> to vector<4x80xbf16>
    %c80_141 = arith.constant 80 : index
    %c0_142 = arith.constant 0 : index
    %163 = vector.load %arg6[%c80_141, %c0_142] : memref<108x320xbf16, #tpu.memory_space<vmem>>, vector<4x80xbf16>
    tpu.vector_store %arg6[%c80_141, %c0_142], %162 {strides = array<i32>} : memref<108x320xbf16, #tpu.memory_space<vmem>>, vector<4x80xbf16>,
    %164 = vector.extract_strided_slice %1 {offsets = [0, 332], sizes = [4, 80], strides = [1, 1]} : vector<4x660xbf16> to vector<4x80xbf16>
    %c80_143 = arith.constant 80 : index
    %c80_144 = arith.constant 80 : index
    %165 = vector.load %arg6[%c80_143, %c80_144] : memref<108x320xbf16, #tpu.memory_space<vmem>>, vector<4x80xbf16>
    tpu.vector_store %arg6[%c80_143, %c80_144], %164 {strides = array<i32>} : memref<108x320xbf16, #tpu.memory_space<vmem>>, vector<4x80xbf16>,
    %166 = vector.extract_strided_slice %1 {offsets = [0, 442], sizes = [4, 80], strides = [1, 1]} : vector<4x660xbf16> to vector<4x80xbf16>
    %c80_145 = arith.constant 80 : index
    %c160_146 = arith.constant 160 : index
    %167 = vector.load %arg6[%c80_145, %c160_146] : memref<108x320xbf16, #tpu.memory_space<vmem>>, vector<4x80xbf16>
    tpu.vector_store %arg6[%c80_145, %c160_146], %166 {strides = array<i32>} : memref<108x320xbf16, #tpu.memory_space<vmem>>, vector<4x80xbf16>,
    %168 = vector.extract_strided_slice %1 {offsets = [0, 552], sizes = [4, 80], strides = [1, 1]} : vector<4x660xbf16> to vector<4x80xbf16>
    %c80_147 = arith.constant 80 : index
    %c240_148 = arith.constant 240 : index
    %169 = vector.load %arg6[%c80_147, %c240_148] : memref<108x320xbf16, #tpu.memory_space<vmem>>, vector<4x80xbf16>
    tpu.vector_store %arg6[%c80_147, %c240_148], %168 {strides = array<i32>} : memref<108x320xbf16, #tpu.memory_space<vmem>>, vector<4x80xbf16>,
    %170 = vector.extract_strided_slice %1 {offsets = [0, 230], sizes = [4, 80], strides = [1, 1]} : vector<4x660xbf16> to vector<4x80xbf16>
    %c84 = arith.constant 84 : index
    %c0_149 = arith.constant 0 : index
    %171 = vector.load %arg6[%c84, %c0_149] : memref<108x320xbf16, #tpu.memory_space<vmem>>, vector<4x80xbf16>
    tpu.vector_store %arg6[%c84, %c0_149], %170 {strides = array<i32>} : memref<108x320xbf16, #tpu.memory_space<vmem>>, vector<4x80xbf16>,
    %172 = vector.extract_strided_slice %1 {offsets = [0, 340], sizes = [4, 80], strides = [1, 1]} : vector<4x660xbf16> to vector<4x80xbf16>
    %c84_150 = arith.constant 84 : index
    %c80_151 = arith.constant 80 : index
    %173 = vector.load %arg6[%c84_150, %c80_151] : memref<108x320xbf16, #tpu.memory_space<vmem>>, vector<4x80xbf16>
    tpu.vector_store %arg6[%c84_150, %c80_151], %172 {strides = array<i32>} : memref<108x320xbf16, #tpu.memory_space<vmem>>, vector<4x80xbf16>,
    %174 = vector.extract_strided_slice %1 {offsets = [0, 450], sizes = [4, 80], strides = [1, 1]} : vector<4x660xbf16> to vector<4x80xbf16>
    %c84_152 = arith.constant 84 : index
    %c160_153 = arith.constant 160 : index
    %175 = vector.load %arg6[%c84_152, %c160_153] : memref<108x320xbf16, #tpu.memory_space<vmem>>, vector<4x80xbf16>
    tpu.vector_store %arg6[%c84_152, %c160_153], %174 {strides = array<i32>} : memref<108x320xbf16, #tpu.memory_space<vmem>>, vector<4x80xbf16>,
    %176 = vector.extract_strided_slice %1 {offsets = [0, 560], sizes = [4, 80], strides = [1, 1]} : vector<4x660xbf16> to vector<4x80xbf16>
    %c84_154 = arith.constant 84 : index
    %c240_155 = arith.constant 240 : index
    %177 = vector.load %arg6[%c84_154, %c240_155] : memref<108x320xbf16, #tpu.memory_space<vmem>>, vector<4x80xbf16>
    tpu.vector_store %arg6[%c84_154, %c240_155], %176 {strides = array<i32>} : memref<108x320xbf16, #tpu.memory_space<vmem>>, vector<4x80xbf16>,
    %178 = vector.extract_strided_slice %1 {offsets = [0, 231], sizes = [4, 80], strides = [1, 1]} : vector<4x660xbf16> to vector<4x80xbf16>
    %c88 = arith.constant 88 : index
    %c0_156 = arith.constant 0 : index
    %179 = vector.load %arg6[%c88, %c0_156] : memref<108x320xbf16, #tpu.memory_space<vmem>>, vector<4x80xbf16>
    tpu.vector_store %arg6[%c88, %c0_156], %178 {strides = array<i32>} : memref<108x320xbf16, #tpu.memory_space<vmem>>, vector<4x80xbf16>,
    %180 = vector.extract_strided_slice %1 {offsets = [0, 341], sizes = [4, 80], strides = [1, 1]} : vector<4x660xbf16> to vector<4x80xbf16>
    %c88_157 = arith.constant 88 : index
    %c80_158 = arith.constant 80 : index
    %181 = vector.load %arg6[%c88_157, %c80_158] : memref<108x320xbf16, #tpu.memory_space<vmem>>, vector<4x80xbf16>
    tpu.vector_store %arg6[%c88_157, %c80_158], %180 {strides = array<i32>} : memref<108x320xbf16, #tpu.memory_space<vmem>>, vector<4x80xbf16>,
    %182 = vector.extract_strided_slice %1 {offsets = [0, 451], sizes = [4, 80], strides = [1, 1]} : vector<4x660xbf16> to vector<4x80xbf16>
    %c88_159 = arith.constant 88 : index
    %c160_160 = arith.constant 160 : index
    %183 = vector.load %arg6[%c88_159, %c160_160] : memref<108x320xbf16, #tpu.memory_space<vmem>>, vector<4x80xbf16>
    tpu.vector_store %arg6[%c88_159, %c160_160], %182 {strides = array<i32>} : memref<108x320xbf16, #tpu.memory_space<vmem>>, vector<4x80xbf16>,
    %184 = vector.extract_strided_slice %1 {offsets = [0, 561], sizes = [4, 80], strides = [1, 1]} : vector<4x660xbf16> to vector<4x80xbf16>
    %c88_161 = arith.constant 88 : index
    %c240_162 = arith.constant 240 : index
    %185 = vector.load %arg6[%c88_161, %c240_162] : memref<108x320xbf16, #tpu.memory_space<vmem>>, vector<4x80xbf16>
    tpu.vector_store %arg6[%c88_161, %c240_162], %184 {strides = array<i32>} : memref<108x320xbf16, #tpu.memory_space<vmem>>, vector<4x80xbf16>,
    %186 = vector.extract_strided_slice %1 {offsets = [0, 232], sizes = [4, 80], strides = [1, 1]} : vector<4x660xbf16> to vector<4x80xbf16>
    %c92 = arith.constant 92 : index
    %c0_163 = arith.constant 0 : index
    %187 = vector.load %arg6[%c92, %c0_163] : memref<108x320xbf16, #tpu.memory_space<vmem>>, vector<4x80xbf16>
    tpu.vector_store %arg6[%c92, %c0_163], %186 {strides = array<i32>} : memref<108x320xbf16, #tpu.memory_space<vmem>>, vector<4x80xbf16>,
    %188 = vector.extract_strided_slice %1 {offsets = [0, 342], sizes = [4, 80], strides = [1, 1]} : vector<4x660xbf16> to vector<4x80xbf16>
    %c92_164 = arith.constant 92 : index
    %c80_165 = arith.constant 80 : index
    %189 = vector.load %arg6[%c92_164, %c80_165] : memref<108x320xbf16, #tpu.memory_space<vmem>>, vector<4x80xbf16>
    tpu.vector_store %arg6[%c92_164, %c80_165], %188 {strides = array<i32>} : memref<108x320xbf16, #tpu.memory_space<vmem>>, vector<4x80xbf16>,
    %190 = vector.extract_strided_slice %1 {offsets = [0, 452], sizes = [4, 80], strides = [1, 1]} : vector<4x660xbf16> to vector<4x80xbf16>
    %c92_166 = arith.constant 92 : index
    %c160_167 = arith.constant 160 : index
    %191 = vector.load %arg6[%c92_166, %c160_167] : memref<108x320xbf16, #tpu.memory_space<vmem>>, vector<4x80xbf16>
    tpu.vector_store %arg6[%c92_166, %c160_167], %190 {strides = array<i32>} : memref<108x320xbf16, #tpu.memory_space<vmem>>, vector<4x80xbf16>,
    %192 = vector.extract_strided_slice %1 {offsets = [0, 562], sizes = [4, 80], strides = [1, 1]} : vector<4x660xbf16> to vector<4x80xbf16>
    %c92_168 = arith.constant 92 : index
    %c240_169 = arith.constant 240 : index
    %193 = vector.load %arg6[%c92_168, %c240_169] : memref<108x320xbf16, #tpu.memory_space<vmem>>, vector<4x80xbf16>
    tpu.vector_store %arg6[%c92_168, %c240_169], %192 {strides = array<i32>} : memref<108x320xbf16, #tpu.memory_space<vmem>>, vector<4x80xbf16>,
    %194 = vector.extract_strided_slice %1 {offsets = [0, 240], sizes = [4, 80], strides = [1, 1]} : vector<4x660xbf16> to vector<4x80xbf16>
    %c96 = arith.constant 96 : index
    %c0_170 = arith.constant 0 : index
    %195 = vector.load %arg6[%c96, %c0_170] : memref<108x320xbf16, #tpu.memory_space<vmem>>, vector<4x80xbf16>
    tpu.vector_store %arg6[%c96, %c0_170], %194 {strides = array<i32>} : memref<108x320xbf16, #tpu.memory_space<vmem>>, vector<4x80xbf16>,
    %196 = vector.extract_strided_slice %1 {offsets = [0, 350], sizes = [4, 80], strides = [1, 1]} : vector<4x660xbf16> to vector<4x80xbf16>
    %c96_171 = arith.constant 96 : index
    %c80_172 = arith.constant 80 : index
    %197 = vector.load %arg6[%c96_171, %c80_172] : memref<108x320xbf16, #tpu.memory_space<vmem>>, vector<4x80xbf16>
    tpu.vector_store %arg6[%c96_171, %c80_172], %196 {strides = array<i32>} : memref<108x320xbf16, #tpu.memory_space<vmem>>, vector<4x80xbf16>,
    %198 = vector.extract_strided_slice %1 {offsets = [0, 460], sizes = [4, 80], strides = [1, 1]} : vector<4x660xbf16> to vector<4x80xbf16>
    %c96_173 = arith.constant 96 : index
    %c160_174 = arith.constant 160 : index
    %199 = vector.load %arg6[%c96_173, %c160_174] : memref<108x320xbf16, #tpu.memory_space<vmem>>, vector<4x80xbf16>
    tpu.vector_store %arg6[%c96_173, %c160_174], %198 {strides = array<i32>} : memref<108x320xbf16, #tpu.memory_space<vmem>>, vector<4x80xbf16>,
    %200 = vector.extract_strided_slice %1 {offsets = [0, 570], sizes = [4, 80], strides = [1, 1]} : vector<4x660xbf16> to vector<4x80xbf16>
    %c96_175 = arith.constant 96 : index
    %c240_176 = arith.constant 240 : index
    %201 = vector.load %arg6[%c96_175, %c240_176] : memref<108x320xbf16, #tpu.memory_space<vmem>>, vector<4x80xbf16>
    tpu.vector_store %arg6[%c96_175, %c240_176], %200 {strides = array<i32>} : memref<108x320xbf16, #tpu.memory_space<vmem>>, vector<4x80xbf16>,
    %202 = vector.extract_strided_slice %1 {offsets = [0, 241], sizes = [4, 80], strides = [1, 1]} : vector<4x660xbf16> to vector<4x80xbf16>
    %c100 = arith.constant 100 : index
    %c0_177 = arith.constant 0 : index
    %203 = vector.load %arg6[%c100, %c0_177] : memref<108x320xbf16, #tpu.memory_space<vmem>>, vector<4x80xbf16>
    tpu.vector_store %arg6[%c100, %c0_177], %202 {strides = array<i32>} : memref<108x320xbf16, #tpu.memory_space<vmem>>, vector<4x80xbf16>,
    %204 = vector.extract_strided_slice %1 {offsets = [0, 351], sizes = [4, 80], strides = [1, 1]} : vector<4x660xbf16> to vector<4x80xbf16>
    %c100_178 = arith.constant 100 : index
    %c80_179 = arith.constant 80 : index
    %205 = vector.load %arg6[%c100_178, %c80_179] : memref<108x320xbf16, #tpu.memory_space<vmem>>, vector<4x80xbf16>
    tpu.vector_store %arg6[%c100_178, %c80_179], %204 {strides = array<i32>} : memref<108x320xbf16, #tpu.memory_space<vmem>>, vector<4x80xbf16>,
    %206 = vector.extract_strided_slice %1 {offsets = [0, 461], sizes = [4, 80], strides = [1, 1]} : vector<4x660xbf16> to vector<4x80xbf16>
    %c100_180 = arith.constant 100 : index
    %c160_181 = arith.constant 160 : index
    %207 = vector.load %arg6[%c100_180, %c160_181] : memref<108x320xbf16, #tpu.memory_space<vmem>>, vector<4x80xbf16>
    tpu.vector_store %arg6[%c100_180, %c160_181], %206 {strides = array<i32>} : memref<108x320xbf16, #tpu.memory_space<vmem>>, vector<4x80xbf16>,
    %208 = vector.extract_strided_slice %1 {offsets = [0, 571], sizes = [4, 80], strides = [1, 1]} : vector<4x660xbf16> to vector<4x80xbf16>
    %c100_182 = arith.constant 100 : index
    %c240_183 = arith.constant 240 : index
    %209 = vector.load %arg6[%c100_182, %c240_183] : memref<108x320xbf16, #tpu.memory_space<vmem>>, vector<4x80xbf16>
    tpu.vector_store %arg6[%c100_182, %c240_183], %208 {strides = array<i32>} : memref<108x320xbf16, #tpu.memory_space<vmem>>, vector<4x80xbf16>,
    %210 = vector.extract_strided_slice %1 {offsets = [0, 242], sizes = [4, 80], strides = [1, 1]} : vector<4x660xbf16> to vector<4x80xbf16>
    %c104 = arith.constant 104 : index
    %c0_184 = arith.constant 0 : index
    %211 = vector.load %arg6[%c104, %c0_184] : memref<108x320xbf16, #tpu.memory_space<vmem>>, vector<4x80xbf16>
    tpu.vector_store %arg6[%c104, %c0_184], %210 {strides = array<i32>} : memref<108x320xbf16, #tpu.memory_space<vmem>>, vector<4x80xbf16>,
    %212 = vector.extract_strided_slice %1 {offsets = [0, 352], sizes = [4, 80], strides = [1, 1]} : vector<4x660xbf16> to vector<4x80xbf16>
    %c104_185 = arith.constant 104 : index
    %c80_186 = arith.constant 80 : index
    %213 = vector.load %arg6[%c104_185, %c80_186] : memref<108x320xbf16, #tpu.memory_space<vmem>>, vector<4x80xbf16>
    tpu.vector_store %arg6[%c104_185, %c80_186], %212 {strides = array<i32>} : memref<108x320xbf16, #tpu.memory_space<vmem>>, vector<4x80xbf16>,
    %214 = vector.extract_strided_slice %1 {offsets = [0, 462], sizes = [4, 80], strides = [1, 1]} : vector<4x660xbf16> to vector<4x80xbf16>
    %c104_187 = arith.constant 104 : index
    %c160_188 = arith.constant 160 : index
    %215 = vector.load %arg6[%c104_187, %c160_188] : memref<108x320xbf16, #tpu.memory_space<vmem>>, vector<4x80xbf16>
    tpu.vector_store %arg6[%c104_187, %c160_188], %214 {strides = array<i32>} : memref<108x320xbf16, #tpu.memory_space<vmem>>, vector<4x80xbf16>,
    %216 = vector.extract_strided_slice %1 {offsets = [0, 572], sizes = [4, 80], strides = [1, 1]} : vector<4x660xbf16> to vector<4x80xbf16>
    %c104_189 = arith.constant 104 : index
    %c240_190 = arith.constant 240 : index
    %217 = vector.load %arg6[%c104_189, %c240_190] : memref<108x320xbf16, #tpu.memory_space<vmem>>, vector<4x80xbf16>
    tpu.vector_store %arg6[%c104_189, %c240_190], %216 {strides = array<i32>} : memref<108x320xbf16, #tpu.memory_space<vmem>>, vector<4x80xbf16>,
    %c0_191 = arith.constant 0 : index
    %c0_192 = arith.constant 0 : index
    %218 = vector.load %arg3[%c0_191, %c0_192] : memref<8x108xbf16, #tpu.memory_space<vmem>>, vector<8x108xbf16>
    %c0_193 = arith.constant 0 : index
    %c0_194 = arith.constant 0 : index
    %219 = vector.load %arg6[%c0_193, %c0_194] : memref<108x320xbf16, #tpu.memory_space<vmem>>, vector<108x320xbf16>
    %cst = arith.constant dense<0.000000e+00> : vector<8x320xf32>
    %220 = tpu.matmul %218, %219, %cst {dimension_numbers = #tpu.dot_dimension_numbers<[1], [0], [0], [1], [0, 0, 1, 1], [], []>} : vector<8x108xbf16>, vector<108x320xbf16>, vector<8x320xf32> -> vector<8x320xf32>
    %221 = arith.truncf %220 : vector<8x320xf32> to vector<8x320xbf16>
    %c0_195 = arith.constant 0 : index
    %c0_196 = arith.constant 0 : index
    %c0_197 = arith.constant 0 : index
    %c0_198 = arith.constant 0 : index
    %222 = vector.load %arg4[%c0_195, %c0_196, %c0_197, %c0_198] : memref<1x1x8x320xbf16, #tpu.memory_space<vmem>>, vector<1x1x8x320xbf16>
    %223 = vector.shape_cast %222 : vector<1x1x8x320xbf16> to vector<8x320xbf16>
    %224 = vector.shape_cast %221 : vector<8x320xbf16> to vector<1x1x8x320xbf16>
    tpu.vector_store %arg4[%c0_195, %c0_196, %c0_197, %c0_198], %224 {strides = array<i32>} : memref<1x1x8x320xbf16, #tpu.memory_space<vmem>>, vector<1x1x8x320xbf16>,
    %225 = tpu.iota {dimensions = array<i32: 1>} : vector<8x320xi32>
    %c10_i32 = arith.constant 10 : i32
    %c0_i32 = arith.constant 0 : i32
    %226 = arith.cmpi eq, %c10_i32, %c0_i32 : i32
    %c1_i32 = arith.constant 1 : i32
    %227 = arith.select %226, %c1_i32, %c10_i32 : i32
    %228 = vector.broadcast %227 : i32 to vector<8x320xi32>
    %229 = arith.remsi %225, %228 : vector<8x320xi32>
    %c0_i32_199 = arith.constant 0 : i32
    %230 = vector.broadcast %c0_i32_199 : i32 to vector<8x320xi32>
    %231 = arith.cmpi ne, %229, %230 : vector<8x320xi32>
    %c0_i32_200 = arith.constant 0 : i32
    %232 = vector.broadcast %c0_i32_200 : i32 to vector<8x320xi32>
    %233 = arith.cmpi slt, %229, %232 : vector<8x320xi32>
    %c0_i32_201 = arith.constant 0 : i32
    %234 = arith.cmpi slt, %227, %c0_i32_201 : i32
    %235 = vector.broadcast %234 : i1 to vector<8x320xi1>
    %236 = vector.broadcast %235 : vector<8x320xi1> to vector<8x320xi1>
    %237 = arith.xori %233, %236 : vector<8x320xi1>
    %238 = arith.andi %237, %231 : vector<8x320xi1>
    %239 = vector.broadcast %227 : i32 to vector<8x320xi32>
    %240 = arith.addi %229, %239 : vector<8x320xi32>
    %241 = arith.select %238, %240, %229 : vector<8x320xi1>, vector<8x320xi32>
    %c8_i32 = arith.constant 8 : i32
    %242 = vector.broadcast %c8_i32 : i32 to vector<8x320xi32>
    %243 = arith.cmpi slt, %241, %242 : vector<8x320xi32>
    %cst_202 = arith.constant 0.000000e+00 : f32
    %244 = vector.broadcast %cst_202 : f32 to vector<8x320xf32>
    %245 = arith.select %243, %220, %244 : vector<8x320xi1>, vector<8x320xf32>
    %cst_203 = arith.constant dense<0.000000e+00> : vector<8xf32>
    %246 = vector.multi_reduction <add>, %245, %cst_203 [1] : vector<8x320xf32> to vector<8xf32>
    %247 = vector.shape_cast %246 : vector<8xf32> to vector<8x1xf32>
    %c0_204 = arith.constant 0 : index
    %c0_205 = arith.constant 0 : index
    %c0_206 = arith.constant 0 : index
    %c0_207 = arith.constant 0 : index
    %248 = vector.load %arg5[%c0_204, %c0_205, %c0_206, %c0_207] : memref<1x1x8x2xf32, #tpu.memory_space<vmem>>, vector<1x1x8x1xf32>
    %249 = vector.shape_cast %248 : vector<1x1x8x1xf32> to vector<8x1xf32>
    %250 = vector.shape_cast %247 : vector<8x1xf32> to vector<1x1x8x1xf32>
    tpu.vector_store %arg5[%c0_204, %c0_205, %c0_206, %c0_207], %250 {strides = array<i32>} : memref<1x1x8x2xf32, #tpu.memory_space<vmem>>, vector<1x1x8x1xf32>,
    %251 = arith.mulf %245, %220 : vector<8x320xf32>
    %cst_208 = arith.constant dense<0.000000e+00> : vector<8xf32>
    %252 = vector.multi_reduction <add>, %251, %cst_208 [1] : vector<8x320xf32> to vector<8xf32>
    %253 = vector.shape_cast %252 : vector<8xf32> to vector<8x1xf32>
    %c0_209 = arith.constant 0 : index
    %c0_210 = arith.constant 0 : index
    %c0_211 = arith.constant 0 : index
    %c1 = arith.constant 1 : index
    %254 = vector.load %arg5[%c0_209, %c0_210, %c0_211, %c1] : memref<1x1x8x2xf32, #tpu.memory_space<vmem>>, vector<1x1x8x1xf32>
    %255 = vector.shape_cast %254 : vector<1x1x8x1xf32> to vector<8x1xf32>
    %256 = vector.shape_cast %253 : vector<8x1xf32> to vector<1x1x8x1xf32>
    tpu.vector_store %arg5[%c0_209, %c0_210, %c0_211, %c1], %256 {strides = array<i32>} : memref<1x1x8x2xf32, #tpu.memory_space<vmem>>, vector<1x1x8x1xf32>,
    return
  }
  func.func @transform_0(%arg0: i32, %arg1: i32) -> (i32, i32, i32, i32) {
    %c0_i32 = arith.constant 0 : i32
    %c0_i32_0 = arith.constant 0 : i32
    %c0_i32_1 = arith.constant 0 : i32
    return %arg0, %arg1, %c0_i32, %c0_i32_0 : i32, i32, i32, i32
  }
  func.func @transform_1(%arg0: i32, %arg1: i32) -> (i32, i32) {
    %c0_i32 = arith.constant 0 : i32
    %c0_i32_0 = arith.constant 0 : i32
    %c0_i32_1 = arith.constant 0 : i32
    return %c0_i32, %c0_i32_0 : i32, i32
  }
  func.func @transform_2(%arg0: i32, %arg1: i32) -> (i32, i32, i32, i32) {
    %c0_i32 = arith.constant 0 : i32
    %c0_i32_0 = arith.constant 0 : i32
    %c0_i32_1 = arith.constant 0 : i32
    return %arg0, %arg1, %c0_i32, %c0_i32_0 : i32, i32, i32, i32
  }
  func.func @transform_3(%arg0: i32, %arg1: i32) -> (i32, i32, i32, i32) {
    %c0_i32 = arith.constant 0 : i32
    %c0_i32_0 = arith.constant 0 : i32
    %c0_i32_1 = arith.constant 0 : i32
    return %arg0, %arg1, %c0_i32, %c0_i32_0 : i32, i32, i32, i32
  }
}

module attributes {stable_mosaic.version = 11 : i64} {
  func.func @_bn_relu_kernel(%arg0: i32, %arg1: i32, %arg2: memref<1x1x8x320xbf16, #tpu.memory_space<vmem>>, %arg3: memref<8x1xf32, #tpu.memory_space<vmem>>, %arg4: memref<8x1xf32, #tpu.memory_space<vmem>>, %arg5: memref<1x8x256xf32, #tpu.memory_space<vmem>>) attributes {dimension_semantics = [#tpu.dimension_semantics<parallel>, #tpu.dimension_semantics<parallel>], iteration_bounds = array<i64: 2, 2>, scalar_prefetch = 0 : i64, scratch_operands = 0 : i64, tpu.core_type = #tpu.core_type<tc>, window_params = [{transform_indices = @transform_0, window_bounds = array<i64: 1, 1, 8, 320>}, {pipeline_mode = #tpu.pipeline_mode<synchronous>, transform_indices = @transform_1, window_bounds = array<i64: 8, 1>}, {pipeline_mode = #tpu.pipeline_mode<synchronous>, transform_indices = @transform_2, window_bounds = array<i64: 8, 1>}, {transform_indices = @transform_3, window_bounds = array<i64: 1, 8, 256>}]} {
    %c0 = arith.constant 0 : index
    %c0_0 = arith.constant 0 : index
    %c0_1 = arith.constant 0 : index
    %c0_2 = arith.constant 0 : index
    %0 = vector.load %arg2[%c0, %c0_0, %c0_1, %c0_2] : memref<1x1x8x320xbf16, #tpu.memory_space<vmem>>, vector<1x1x8x320xbf16>
    %1 = vector.shape_cast %0 : vector<1x1x8x320xbf16> to vector<8x320xbf16>
    %2 = arith.extf %1 : vector<8x320xbf16> to vector<8x320xf32>
    %c0_3 = arith.constant 0 : index
    %c0_4 = arith.constant 0 : index
    %3 = vector.load %arg3[%c0_3, %c0_4] : memref<8x1xf32, #tpu.memory_space<vmem>>, vector<8x1xf32>
    %4 = vector.broadcast %3 : vector<8x1xf32> to vector<8x320xf32>
    %5 = arith.mulf %2, %4 : vector<8x320xf32>
    %c0_5 = arith.constant 0 : index
    %c0_6 = arith.constant 0 : index
    %6 = vector.load %arg4[%c0_5, %c0_6] : memref<8x1xf32, #tpu.memory_space<vmem>>, vector<8x1xf32>
    %7 = vector.broadcast %6 : vector<8x1xf32> to vector<8x320xf32>
    %8 = arith.addf %5, %7 : vector<8x320xf32>
    %cst = arith.constant 0.000000e+00 : f32
    %9 = vector.broadcast %cst : f32 to vector<8x320xf32>
    %10 = arith.maximumf %8, %9 : vector<8x320xf32>
    %11 = vector.extract_strided_slice %10 {offsets = [0, 0], sizes = [8, 8], strides = [1, 1]} : vector<8x320xf32> to vector<8x8xf32>
    %c0_7 = arith.constant 0 : index
    %c0_8 = arith.constant 0 : index
    %c0_9 = arith.constant 0 : index
    %12 = vector.load %arg5[%c0_7, %c0_8, %c0_9] : memref<1x8x256xf32, #tpu.memory_space<vmem>>, vector<1x8x8xf32>
    %13 = vector.shape_cast %12 : vector<1x8x8xf32> to vector<8x8xf32>
    %14 = vector.shape_cast %11 : vector<8x8xf32> to vector<1x8x8xf32>
    tpu.vector_store %arg5[%c0_7, %c0_8, %c0_9], %14 {strides = array<i32>} : memref<1x8x256xf32, #tpu.memory_space<vmem>>, vector<1x8x8xf32>,
    %15 = vector.extract_strided_slice %10 {offsets = [0, 10], sizes = [8, 8], strides = [1, 1]} : vector<8x320xf32> to vector<8x8xf32>
    %c0_10 = arith.constant 0 : index
    %c0_11 = arith.constant 0 : index
    %c8 = arith.constant 8 : index
    %16 = vector.load %arg5[%c0_10, %c0_11, %c8] : memref<1x8x256xf32, #tpu.memory_space<vmem>>, vector<1x8x8xf32>
    %17 = vector.shape_cast %16 : vector<1x8x8xf32> to vector<8x8xf32>
    %18 = vector.shape_cast %15 : vector<8x8xf32> to vector<1x8x8xf32>
    tpu.vector_store %arg5[%c0_10, %c0_11, %c8], %18 {strides = array<i32>} : memref<1x8x256xf32, #tpu.memory_space<vmem>>, vector<1x8x8xf32>,
    %19 = vector.extract_strided_slice %10 {offsets = [0, 20], sizes = [8, 8], strides = [1, 1]} : vector<8x320xf32> to vector<8x8xf32>
    %c0_12 = arith.constant 0 : index
    %c0_13 = arith.constant 0 : index
    %c16 = arith.constant 16 : index
    %20 = vector.load %arg5[%c0_12, %c0_13, %c16] : memref<1x8x256xf32, #tpu.memory_space<vmem>>, vector<1x8x8xf32>
    %21 = vector.shape_cast %20 : vector<1x8x8xf32> to vector<8x8xf32>
    %22 = vector.shape_cast %19 : vector<8x8xf32> to vector<1x8x8xf32>
    tpu.vector_store %arg5[%c0_12, %c0_13, %c16], %22 {strides = array<i32>} : memref<1x8x256xf32, #tpu.memory_space<vmem>>, vector<1x8x8xf32>,
    %23 = vector.extract_strided_slice %10 {offsets = [0, 30], sizes = [8, 8], strides = [1, 1]} : vector<8x320xf32> to vector<8x8xf32>
    %c0_14 = arith.constant 0 : index
    %c0_15 = arith.constant 0 : index
    %c24 = arith.constant 24 : index
    %24 = vector.load %arg5[%c0_14, %c0_15, %c24] : memref<1x8x256xf32, #tpu.memory_space<vmem>>, vector<1x8x8xf32>
    %25 = vector.shape_cast %24 : vector<1x8x8xf32> to vector<8x8xf32>
    %26 = vector.shape_cast %23 : vector<8x8xf32> to vector<1x8x8xf32>
    tpu.vector_store %arg5[%c0_14, %c0_15, %c24], %26 {strides = array<i32>} : memref<1x8x256xf32, #tpu.memory_space<vmem>>, vector<1x8x8xf32>,
    %27 = vector.extract_strided_slice %10 {offsets = [0, 40], sizes = [8, 8], strides = [1, 1]} : vector<8x320xf32> to vector<8x8xf32>
    %c0_16 = arith.constant 0 : index
    %c0_17 = arith.constant 0 : index
    %c32 = arith.constant 32 : index
    %28 = vector.load %arg5[%c0_16, %c0_17, %c32] : memref<1x8x256xf32, #tpu.memory_space<vmem>>, vector<1x8x8xf32>
    %29 = vector.shape_cast %28 : vector<1x8x8xf32> to vector<8x8xf32>
    %30 = vector.shape_cast %27 : vector<8x8xf32> to vector<1x8x8xf32>
    tpu.vector_store %arg5[%c0_16, %c0_17, %c32], %30 {strides = array<i32>} : memref<1x8x256xf32, #tpu.memory_space<vmem>>, vector<1x8x8xf32>,
    %31 = vector.extract_strided_slice %10 {offsets = [0, 50], sizes = [8, 8], strides = [1, 1]} : vector<8x320xf32> to vector<8x8xf32>
    %c0_18 = arith.constant 0 : index
    %c0_19 = arith.constant 0 : index
    %c40 = arith.constant 40 : index
    %32 = vector.load %arg5[%c0_18, %c0_19, %c40] : memref<1x8x256xf32, #tpu.memory_space<vmem>>, vector<1x8x8xf32>
    %33 = vector.shape_cast %32 : vector<1x8x8xf32> to vector<8x8xf32>
    %34 = vector.shape_cast %31 : vector<8x8xf32> to vector<1x8x8xf32>
    tpu.vector_store %arg5[%c0_18, %c0_19, %c40], %34 {strides = array<i32>} : memref<1x8x256xf32, #tpu.memory_space<vmem>>, vector<1x8x8xf32>,
    %35 = vector.extract_strided_slice %10 {offsets = [0, 60], sizes = [8, 8], strides = [1, 1]} : vector<8x320xf32> to vector<8x8xf32>
    %c0_20 = arith.constant 0 : index
    %c0_21 = arith.constant 0 : index
    %c48 = arith.constant 48 : index
    %36 = vector.load %arg5[%c0_20, %c0_21, %c48] : memref<1x8x256xf32, #tpu.memory_space<vmem>>, vector<1x8x8xf32>
    %37 = vector.shape_cast %36 : vector<1x8x8xf32> to vector<8x8xf32>
    %38 = vector.shape_cast %35 : vector<8x8xf32> to vector<1x8x8xf32>
    tpu.vector_store %arg5[%c0_20, %c0_21, %c48], %38 {strides = array<i32>} : memref<1x8x256xf32, #tpu.memory_space<vmem>>, vector<1x8x8xf32>,
    %39 = vector.extract_strided_slice %10 {offsets = [0, 70], sizes = [8, 8], strides = [1, 1]} : vector<8x320xf32> to vector<8x8xf32>
    %c0_22 = arith.constant 0 : index
    %c0_23 = arith.constant 0 : index
    %c56 = arith.constant 56 : index
    %40 = vector.load %arg5[%c0_22, %c0_23, %c56] : memref<1x8x256xf32, #tpu.memory_space<vmem>>, vector<1x8x8xf32>
    %41 = vector.shape_cast %40 : vector<1x8x8xf32> to vector<8x8xf32>
    %42 = vector.shape_cast %39 : vector<8x8xf32> to vector<1x8x8xf32>
    tpu.vector_store %arg5[%c0_22, %c0_23, %c56], %42 {strides = array<i32>} : memref<1x8x256xf32, #tpu.memory_space<vmem>>, vector<1x8x8xf32>,
    %43 = vector.extract_strided_slice %10 {offsets = [0, 80], sizes = [8, 8], strides = [1, 1]} : vector<8x320xf32> to vector<8x8xf32>
    %c0_24 = arith.constant 0 : index
    %c0_25 = arith.constant 0 : index
    %c64 = arith.constant 64 : index
    %44 = vector.load %arg5[%c0_24, %c0_25, %c64] : memref<1x8x256xf32, #tpu.memory_space<vmem>>, vector<1x8x8xf32>
    %45 = vector.shape_cast %44 : vector<1x8x8xf32> to vector<8x8xf32>
    %46 = vector.shape_cast %43 : vector<8x8xf32> to vector<1x8x8xf32>
    tpu.vector_store %arg5[%c0_24, %c0_25, %c64], %46 {strides = array<i32>} : memref<1x8x256xf32, #tpu.memory_space<vmem>>, vector<1x8x8xf32>,
    %47 = vector.extract_strided_slice %10 {offsets = [0, 90], sizes = [8, 8], strides = [1, 1]} : vector<8x320xf32> to vector<8x8xf32>
    %c0_26 = arith.constant 0 : index
    %c0_27 = arith.constant 0 : index
    %c72 = arith.constant 72 : index
    %48 = vector.load %arg5[%c0_26, %c0_27, %c72] : memref<1x8x256xf32, #tpu.memory_space<vmem>>, vector<1x8x8xf32>
    %49 = vector.shape_cast %48 : vector<1x8x8xf32> to vector<8x8xf32>
    %50 = vector.shape_cast %47 : vector<8x8xf32> to vector<1x8x8xf32>
    tpu.vector_store %arg5[%c0_26, %c0_27, %c72], %50 {strides = array<i32>} : memref<1x8x256xf32, #tpu.memory_space<vmem>>, vector<1x8x8xf32>,
    %51 = vector.extract_strided_slice %10 {offsets = [0, 100], sizes = [8, 8], strides = [1, 1]} : vector<8x320xf32> to vector<8x8xf32>
    %c0_28 = arith.constant 0 : index
    %c0_29 = arith.constant 0 : index
    %c80 = arith.constant 80 : index
    %52 = vector.load %arg5[%c0_28, %c0_29, %c80] : memref<1x8x256xf32, #tpu.memory_space<vmem>>, vector<1x8x8xf32>
    %53 = vector.shape_cast %52 : vector<1x8x8xf32> to vector<8x8xf32>
    %54 = vector.shape_cast %51 : vector<8x8xf32> to vector<1x8x8xf32>
    tpu.vector_store %arg5[%c0_28, %c0_29, %c80], %54 {strides = array<i32>} : memref<1x8x256xf32, #tpu.memory_space<vmem>>, vector<1x8x8xf32>,
    %55 = vector.extract_strided_slice %10 {offsets = [0, 110], sizes = [8, 8], strides = [1, 1]} : vector<8x320xf32> to vector<8x8xf32>
    %c0_30 = arith.constant 0 : index
    %c0_31 = arith.constant 0 : index
    %c88 = arith.constant 88 : index
    %56 = vector.load %arg5[%c0_30, %c0_31, %c88] : memref<1x8x256xf32, #tpu.memory_space<vmem>>, vector<1x8x8xf32>
    %57 = vector.shape_cast %56 : vector<1x8x8xf32> to vector<8x8xf32>
    %58 = vector.shape_cast %55 : vector<8x8xf32> to vector<1x8x8xf32>
    tpu.vector_store %arg5[%c0_30, %c0_31, %c88], %58 {strides = array<i32>} : memref<1x8x256xf32, #tpu.memory_space<vmem>>, vector<1x8x8xf32>,
    %59 = vector.extract_strided_slice %10 {offsets = [0, 120], sizes = [8, 8], strides = [1, 1]} : vector<8x320xf32> to vector<8x8xf32>
    %c0_32 = arith.constant 0 : index
    %c0_33 = arith.constant 0 : index
    %c96 = arith.constant 96 : index
    %60 = vector.load %arg5[%c0_32, %c0_33, %c96] : memref<1x8x256xf32, #tpu.memory_space<vmem>>, vector<1x8x8xf32>
    %61 = vector.shape_cast %60 : vector<1x8x8xf32> to vector<8x8xf32>
    %62 = vector.shape_cast %59 : vector<8x8xf32> to vector<1x8x8xf32>
    tpu.vector_store %arg5[%c0_32, %c0_33, %c96], %62 {strides = array<i32>} : memref<1x8x256xf32, #tpu.memory_space<vmem>>, vector<1x8x8xf32>,
    %63 = vector.extract_strided_slice %10 {offsets = [0, 130], sizes = [8, 8], strides = [1, 1]} : vector<8x320xf32> to vector<8x8xf32>
    %c0_34 = arith.constant 0 : index
    %c0_35 = arith.constant 0 : index
    %c104 = arith.constant 104 : index
    %64 = vector.load %arg5[%c0_34, %c0_35, %c104] : memref<1x8x256xf32, #tpu.memory_space<vmem>>, vector<1x8x8xf32>
    %65 = vector.shape_cast %64 : vector<1x8x8xf32> to vector<8x8xf32>
    %66 = vector.shape_cast %63 : vector<8x8xf32> to vector<1x8x8xf32>
    tpu.vector_store %arg5[%c0_34, %c0_35, %c104], %66 {strides = array<i32>} : memref<1x8x256xf32, #tpu.memory_space<vmem>>, vector<1x8x8xf32>,
    %67 = vector.extract_strided_slice %10 {offsets = [0, 140], sizes = [8, 8], strides = [1, 1]} : vector<8x320xf32> to vector<8x8xf32>
    %c0_36 = arith.constant 0 : index
    %c0_37 = arith.constant 0 : index
    %c112 = arith.constant 112 : index
    %68 = vector.load %arg5[%c0_36, %c0_37, %c112] : memref<1x8x256xf32, #tpu.memory_space<vmem>>, vector<1x8x8xf32>
    %69 = vector.shape_cast %68 : vector<1x8x8xf32> to vector<8x8xf32>
    %70 = vector.shape_cast %67 : vector<8x8xf32> to vector<1x8x8xf32>
    tpu.vector_store %arg5[%c0_36, %c0_37, %c112], %70 {strides = array<i32>} : memref<1x8x256xf32, #tpu.memory_space<vmem>>, vector<1x8x8xf32>,
    %71 = vector.extract_strided_slice %10 {offsets = [0, 150], sizes = [8, 8], strides = [1, 1]} : vector<8x320xf32> to vector<8x8xf32>
    %c0_38 = arith.constant 0 : index
    %c0_39 = arith.constant 0 : index
    %c120 = arith.constant 120 : index
    %72 = vector.load %arg5[%c0_38, %c0_39, %c120] : memref<1x8x256xf32, #tpu.memory_space<vmem>>, vector<1x8x8xf32>
    %73 = vector.shape_cast %72 : vector<1x8x8xf32> to vector<8x8xf32>
    %74 = vector.shape_cast %71 : vector<8x8xf32> to vector<1x8x8xf32>
    tpu.vector_store %arg5[%c0_38, %c0_39, %c120], %74 {strides = array<i32>} : memref<1x8x256xf32, #tpu.memory_space<vmem>>, vector<1x8x8xf32>,
    %75 = vector.extract_strided_slice %10 {offsets = [0, 160], sizes = [8, 8], strides = [1, 1]} : vector<8x320xf32> to vector<8x8xf32>
    %c0_40 = arith.constant 0 : index
    %c0_41 = arith.constant 0 : index
    %c128 = arith.constant 128 : index
    %76 = vector.load %arg5[%c0_40, %c0_41, %c128] : memref<1x8x256xf32, #tpu.memory_space<vmem>>, vector<1x8x8xf32>
    %77 = vector.shape_cast %76 : vector<1x8x8xf32> to vector<8x8xf32>
    %78 = vector.shape_cast %75 : vector<8x8xf32> to vector<1x8x8xf32>
    tpu.vector_store %arg5[%c0_40, %c0_41, %c128], %78 {strides = array<i32>} : memref<1x8x256xf32, #tpu.memory_space<vmem>>, vector<1x8x8xf32>,
    %79 = vector.extract_strided_slice %10 {offsets = [0, 170], sizes = [8, 8], strides = [1, 1]} : vector<8x320xf32> to vector<8x8xf32>
    %c0_42 = arith.constant 0 : index
    %c0_43 = arith.constant 0 : index
    %c136 = arith.constant 136 : index
    %80 = vector.load %arg5[%c0_42, %c0_43, %c136] : memref<1x8x256xf32, #tpu.memory_space<vmem>>, vector<1x8x8xf32>
    %81 = vector.shape_cast %80 : vector<1x8x8xf32> to vector<8x8xf32>
    %82 = vector.shape_cast %79 : vector<8x8xf32> to vector<1x8x8xf32>
    tpu.vector_store %arg5[%c0_42, %c0_43, %c136], %82 {strides = array<i32>} : memref<1x8x256xf32, #tpu.memory_space<vmem>>, vector<1x8x8xf32>,
    %83 = vector.extract_strided_slice %10 {offsets = [0, 180], sizes = [8, 8], strides = [1, 1]} : vector<8x320xf32> to vector<8x8xf32>
    %c0_44 = arith.constant 0 : index
    %c0_45 = arith.constant 0 : index
    %c144 = arith.constant 144 : index
    %84 = vector.load %arg5[%c0_44, %c0_45, %c144] : memref<1x8x256xf32, #tpu.memory_space<vmem>>, vector<1x8x8xf32>
    %85 = vector.shape_cast %84 : vector<1x8x8xf32> to vector<8x8xf32>
    %86 = vector.shape_cast %83 : vector<8x8xf32> to vector<1x8x8xf32>
    tpu.vector_store %arg5[%c0_44, %c0_45, %c144], %86 {strides = array<i32>} : memref<1x8x256xf32, #tpu.memory_space<vmem>>, vector<1x8x8xf32>,
    %87 = vector.extract_strided_slice %10 {offsets = [0, 190], sizes = [8, 8], strides = [1, 1]} : vector<8x320xf32> to vector<8x8xf32>
    %c0_46 = arith.constant 0 : index
    %c0_47 = arith.constant 0 : index
    %c152 = arith.constant 152 : index
    %88 = vector.load %arg5[%c0_46, %c0_47, %c152] : memref<1x8x256xf32, #tpu.memory_space<vmem>>, vector<1x8x8xf32>
    %89 = vector.shape_cast %88 : vector<1x8x8xf32> to vector<8x8xf32>
    %90 = vector.shape_cast %87 : vector<8x8xf32> to vector<1x8x8xf32>
    tpu.vector_store %arg5[%c0_46, %c0_47, %c152], %90 {strides = array<i32>} : memref<1x8x256xf32, #tpu.memory_space<vmem>>, vector<1x8x8xf32>,
    %91 = vector.extract_strided_slice %10 {offsets = [0, 200], sizes = [8, 8], strides = [1, 1]} : vector<8x320xf32> to vector<8x8xf32>
    %c0_48 = arith.constant 0 : index
    %c0_49 = arith.constant 0 : index
    %c160 = arith.constant 160 : index
    %92 = vector.load %arg5[%c0_48, %c0_49, %c160] : memref<1x8x256xf32, #tpu.memory_space<vmem>>, vector<1x8x8xf32>
    %93 = vector.shape_cast %92 : vector<1x8x8xf32> to vector<8x8xf32>
    %94 = vector.shape_cast %91 : vector<8x8xf32> to vector<1x8x8xf32>
    tpu.vector_store %arg5[%c0_48, %c0_49, %c160], %94 {strides = array<i32>} : memref<1x8x256xf32, #tpu.memory_space<vmem>>, vector<1x8x8xf32>,
    %95 = vector.extract_strided_slice %10 {offsets = [0, 210], sizes = [8, 8], strides = [1, 1]} : vector<8x320xf32> to vector<8x8xf32>
    %c0_50 = arith.constant 0 : index
    %c0_51 = arith.constant 0 : index
    %c168 = arith.constant 168 : index
    %96 = vector.load %arg5[%c0_50, %c0_51, %c168] : memref<1x8x256xf32, #tpu.memory_space<vmem>>, vector<1x8x8xf32>
    %97 = vector.shape_cast %96 : vector<1x8x8xf32> to vector<8x8xf32>
    %98 = vector.shape_cast %95 : vector<8x8xf32> to vector<1x8x8xf32>
    tpu.vector_store %arg5[%c0_50, %c0_51, %c168], %98 {strides = array<i32>} : memref<1x8x256xf32, #tpu.memory_space<vmem>>, vector<1x8x8xf32>,
    %99 = vector.extract_strided_slice %10 {offsets = [0, 220], sizes = [8, 8], strides = [1, 1]} : vector<8x320xf32> to vector<8x8xf32>
    %c0_52 = arith.constant 0 : index
    %c0_53 = arith.constant 0 : index
    %c176 = arith.constant 176 : index
    %100 = vector.load %arg5[%c0_52, %c0_53, %c176] : memref<1x8x256xf32, #tpu.memory_space<vmem>>, vector<1x8x8xf32>
    %101 = vector.shape_cast %100 : vector<1x8x8xf32> to vector<8x8xf32>
    %102 = vector.shape_cast %99 : vector<8x8xf32> to vector<1x8x8xf32>
    tpu.vector_store %arg5[%c0_52, %c0_53, %c176], %102 {strides = array<i32>} : memref<1x8x256xf32, #tpu.memory_space<vmem>>, vector<1x8x8xf32>,
    %103 = vector.extract_strided_slice %10 {offsets = [0, 230], sizes = [8, 8], strides = [1, 1]} : vector<8x320xf32> to vector<8x8xf32>
    %c0_54 = arith.constant 0 : index
    %c0_55 = arith.constant 0 : index
    %c184 = arith.constant 184 : index
    %104 = vector.load %arg5[%c0_54, %c0_55, %c184] : memref<1x8x256xf32, #tpu.memory_space<vmem>>, vector<1x8x8xf32>
    %105 = vector.shape_cast %104 : vector<1x8x8xf32> to vector<8x8xf32>
    %106 = vector.shape_cast %103 : vector<8x8xf32> to vector<1x8x8xf32>
    tpu.vector_store %arg5[%c0_54, %c0_55, %c184], %106 {strides = array<i32>} : memref<1x8x256xf32, #tpu.memory_space<vmem>>, vector<1x8x8xf32>,
    %107 = vector.extract_strided_slice %10 {offsets = [0, 240], sizes = [8, 8], strides = [1, 1]} : vector<8x320xf32> to vector<8x8xf32>
    %c0_56 = arith.constant 0 : index
    %c0_57 = arith.constant 0 : index
    %c192 = arith.constant 192 : index
    %108 = vector.load %arg5[%c0_56, %c0_57, %c192] : memref<1x8x256xf32, #tpu.memory_space<vmem>>, vector<1x8x8xf32>
    %109 = vector.shape_cast %108 : vector<1x8x8xf32> to vector<8x8xf32>
    %110 = vector.shape_cast %107 : vector<8x8xf32> to vector<1x8x8xf32>
    tpu.vector_store %arg5[%c0_56, %c0_57, %c192], %110 {strides = array<i32>} : memref<1x8x256xf32, #tpu.memory_space<vmem>>, vector<1x8x8xf32>,
    %111 = vector.extract_strided_slice %10 {offsets = [0, 250], sizes = [8, 8], strides = [1, 1]} : vector<8x320xf32> to vector<8x8xf32>
    %c0_58 = arith.constant 0 : index
    %c0_59 = arith.constant 0 : index
    %c200 = arith.constant 200 : index
    %112 = vector.load %arg5[%c0_58, %c0_59, %c200] : memref<1x8x256xf32, #tpu.memory_space<vmem>>, vector<1x8x8xf32>
    %113 = vector.shape_cast %112 : vector<1x8x8xf32> to vector<8x8xf32>
    %114 = vector.shape_cast %111 : vector<8x8xf32> to vector<1x8x8xf32>
    tpu.vector_store %arg5[%c0_58, %c0_59, %c200], %114 {strides = array<i32>} : memref<1x8x256xf32, #tpu.memory_space<vmem>>, vector<1x8x8xf32>,
    %115 = vector.extract_strided_slice %10 {offsets = [0, 260], sizes = [8, 8], strides = [1, 1]} : vector<8x320xf32> to vector<8x8xf32>
    %c0_60 = arith.constant 0 : index
    %c0_61 = arith.constant 0 : index
    %c208 = arith.constant 208 : index
    %116 = vector.load %arg5[%c0_60, %c0_61, %c208] : memref<1x8x256xf32, #tpu.memory_space<vmem>>, vector<1x8x8xf32>
    %117 = vector.shape_cast %116 : vector<1x8x8xf32> to vector<8x8xf32>
    %118 = vector.shape_cast %115 : vector<8x8xf32> to vector<1x8x8xf32>
    tpu.vector_store %arg5[%c0_60, %c0_61, %c208], %118 {strides = array<i32>} : memref<1x8x256xf32, #tpu.memory_space<vmem>>, vector<1x8x8xf32>,
    %119 = vector.extract_strided_slice %10 {offsets = [0, 270], sizes = [8, 8], strides = [1, 1]} : vector<8x320xf32> to vector<8x8xf32>
    %c0_62 = arith.constant 0 : index
    %c0_63 = arith.constant 0 : index
    %c216 = arith.constant 216 : index
    %120 = vector.load %arg5[%c0_62, %c0_63, %c216] : memref<1x8x256xf32, #tpu.memory_space<vmem>>, vector<1x8x8xf32>
    %121 = vector.shape_cast %120 : vector<1x8x8xf32> to vector<8x8xf32>
    %122 = vector.shape_cast %119 : vector<8x8xf32> to vector<1x8x8xf32>
    tpu.vector_store %arg5[%c0_62, %c0_63, %c216], %122 {strides = array<i32>} : memref<1x8x256xf32, #tpu.memory_space<vmem>>, vector<1x8x8xf32>,
    %123 = vector.extract_strided_slice %10 {offsets = [0, 280], sizes = [8, 8], strides = [1, 1]} : vector<8x320xf32> to vector<8x8xf32>
    %c0_64 = arith.constant 0 : index
    %c0_65 = arith.constant 0 : index
    %c224 = arith.constant 224 : index
    %124 = vector.load %arg5[%c0_64, %c0_65, %c224] : memref<1x8x256xf32, #tpu.memory_space<vmem>>, vector<1x8x8xf32>
    %125 = vector.shape_cast %124 : vector<1x8x8xf32> to vector<8x8xf32>
    %126 = vector.shape_cast %123 : vector<8x8xf32> to vector<1x8x8xf32>
    tpu.vector_store %arg5[%c0_64, %c0_65, %c224], %126 {strides = array<i32>} : memref<1x8x256xf32, #tpu.memory_space<vmem>>, vector<1x8x8xf32>,
    %127 = vector.extract_strided_slice %10 {offsets = [0, 290], sizes = [8, 8], strides = [1, 1]} : vector<8x320xf32> to vector<8x8xf32>
    %c0_66 = arith.constant 0 : index
    %c0_67 = arith.constant 0 : index
    %c232 = arith.constant 232 : index
    %128 = vector.load %arg5[%c0_66, %c0_67, %c232] : memref<1x8x256xf32, #tpu.memory_space<vmem>>, vector<1x8x8xf32>
    %129 = vector.shape_cast %128 : vector<1x8x8xf32> to vector<8x8xf32>
    %130 = vector.shape_cast %127 : vector<8x8xf32> to vector<1x8x8xf32>
    tpu.vector_store %arg5[%c0_66, %c0_67, %c232], %130 {strides = array<i32>} : memref<1x8x256xf32, #tpu.memory_space<vmem>>, vector<1x8x8xf32>,
    %131 = vector.extract_strided_slice %10 {offsets = [0, 300], sizes = [8, 8], strides = [1, 1]} : vector<8x320xf32> to vector<8x8xf32>
    %c0_68 = arith.constant 0 : index
    %c0_69 = arith.constant 0 : index
    %c240 = arith.constant 240 : index
    %132 = vector.load %arg5[%c0_68, %c0_69, %c240] : memref<1x8x256xf32, #tpu.memory_space<vmem>>, vector<1x8x8xf32>
    %133 = vector.shape_cast %132 : vector<1x8x8xf32> to vector<8x8xf32>
    %134 = vector.shape_cast %131 : vector<8x8xf32> to vector<1x8x8xf32>
    tpu.vector_store %arg5[%c0_68, %c0_69, %c240], %134 {strides = array<i32>} : memref<1x8x256xf32, #tpu.memory_space<vmem>>, vector<1x8x8xf32>,
    %135 = vector.extract_strided_slice %10 {offsets = [0, 310], sizes = [8, 8], strides = [1, 1]} : vector<8x320xf32> to vector<8x8xf32>
    %c0_70 = arith.constant 0 : index
    %c0_71 = arith.constant 0 : index
    %c248 = arith.constant 248 : index
    %136 = vector.load %arg5[%c0_70, %c0_71, %c248] : memref<1x8x256xf32, #tpu.memory_space<vmem>>, vector<1x8x8xf32>
    %137 = vector.shape_cast %136 : vector<1x8x8xf32> to vector<8x8xf32>
    %138 = vector.shape_cast %135 : vector<8x8xf32> to vector<1x8x8xf32>
    tpu.vector_store %arg5[%c0_70, %c0_71, %c248], %138 {strides = array<i32>} : memref<1x8x256xf32, #tpu.memory_space<vmem>>, vector<1x8x8xf32>,
    return
  }
  func.func @transform_0(%arg0: i32, %arg1: i32) -> (i32, i32, i32, i32) {
    %c0_i32 = arith.constant 0 : i32
    %c0_i32_0 = arith.constant 0 : i32
    %c0_i32_1 = arith.constant 0 : i32
    return %arg0, %arg1, %c0_i32, %c0_i32_0 : i32, i32, i32, i32
  }
  func.func @transform_1(%arg0: i32, %arg1: i32) -> (i32, i32) {
    %c0_i32 = arith.constant 0 : i32
    %c0_i32_0 = arith.constant 0 : i32
    %c0_i32_1 = arith.constant 0 : i32
    return %c0_i32, %c0_i32_0 : i32, i32
  }
  func.func @transform_2(%arg0: i32, %arg1: i32) -> (i32, i32) {
    %c0_i32 = arith.constant 0 : i32
    %c0_i32_0 = arith.constant 0 : i32
    %c0_i32_1 = arith.constant 0 : i32
    return %c0_i32, %c0_i32_0 : i32, i32
  }
  func.func @transform_3(%arg0: i32, %arg1: i32) -> (i32, i32, i32) {
    %c0_i32 = arith.constant 0 : i32
    %c0_i32_0 = arith.constant 0 : i32
    return %arg0, %c0_i32, %arg1 : i32, i32, i32
  }
}

</mosaic_0001>

<llo_original>
// kernel: unet_block_forward.3
$region0: #{unet_block_forward.3}
  #allocation0 [shape = 'u32[]', space=smem, size = 0x4, offset = 0x4, fixed_abs, tag = 'smem constant byte address 0x4 - core index']
  #allocation1 [shape = 'u32[144,128]{1,0:T(1,128)}', space=vmem, size = 0x12000, scoped, tag = 'internal scratch']
  %s0 = inlined_call_operand.vmem [shape: bf16[2,2,8,320], index: 0, kind: input, shape index: {}]
  %s1 = inlined_call_operand.vmem [shape: f32[8,1], index: 1, kind: input, shape index: {}]
  %s2 = inlined_call_operand.vmem [shape: f32[8,1], index: 2, kind: input, shape index: {}]
  %s3 = inlined_call_operand.vmem [shape: f32[2,8,512], index: 3, kind: output, shape index: {}]
  %s4 = sld [smem:[#allocation0]]
  $region45: #{unet_block_forward.3} parent=0
    _
  %s6 = ssub.s32 1, %s4
  %s7 = scalar_select 0, %s6, %s4
  loop: start=0, step=1, limit=6
  $region2: #{unet_block_forward.3} parent=0 // loop_pre_header
    _
  $region3: #{unet_block_forward.3} parent=0 // loop_header
    %s9 = sphi 0, %s13
    %p10 = scmp.ge.s32.totalorder %s9, 6
    %s16 = sphi 0, %s28
    %s17 = sphi 0, %s24
    %s18 = sphi 0, %s16
    %s19 = sphi 0, %s17
    %s20 = sphi 0, %s18
    %s21 = sphi 0, %s19
    %s33 = sphi 0, %s35
    %s36 = sphi 0, %s33
    %s37 = sphi 0, %s36
    %s53 = sphi 0, %s37
    %s57 = sphi 0, %s57
    %s59 = sphi 0, %s57
    %s60 = sphi 0, %s59
    %s74 = sphi 0, %s60
    %s78 = sphi 0, %s78
    %s80 = sphi 0, %s78
    %s81 = sphi 0, %s80
    %s95 = sphi 0, %s81
    %s103 = sphi 0, %s105
    %s106 = sphi 0, %s103
    %s107 = sphi 0, %s106
    %s123 = sphi 0, %s107
  $region4: #{unet_block_forward.3} parent=0 // loop_header_branch
    %12 = sbr.rel (%p10) target = $region8
  $region5: #{unet_block_forward.3} parent=0 // loop_body
    %s14 = ssub.s32 %s9, 1
    %s15 = ssub.s32 %s9, 2
    %s22 = sadd.s32 1, %s17
    %p23 = scmp.ge.s32.totalorder %s22, 2
    %s24 = scalar_select %p23, 0, %s22
    %s25 = sadd.s32 1, %s16
    %s26 = scalar_select %p23, %s25, %s16
    %p27 = scmp.ge.s32.totalorder %s26, 2
    %s28 = scalar_select %p27, 0, %s26
    %s29 = ssub.s32 %s16, %s28
    %s30 = ssub.s32 %s17, %s24
    %s31 = sor.u32 %s29, %s30
    %p32 = scmp.eq.s32.totalorder %s31, 0
    %s34 = sadd.s32 %s33, 1
    %s35 = scalar_select %p32, %s33, %s34
    %p38 = pneg %p32
    %p39 = scmp.eq.s32.totalorder %s9, 3
    %p40 = por %p38, %p39
    %p41 = scmp.ne.s32.totalorder %s33, %s36
    %p42 = scmp.eq.s32.totalorder %s9, 0
    %p43 = por %p41, %p42
    %p44 = scmp.ne.s32.totalorder %s33, %s36
    %p45 = scmp.eq.s32.totalorder %s14, 3
    %p46 = por %p44, %p45
    %p47 = scmp.ne.s32.totalorder %s36, %s37
    %p48 = scmp.eq.s32.totalorder %s14, 0
    %p49 = por %p47, %p48
    %p50 = scmp.ne.s32.totalorder %s36, %s37
    %p51 = scmp.eq.s32.totalorder %s15, 3
    %p52 = por %p50, %p51
    %p54 = scmp.ne.s32.totalorder %s37, %s53
    %p55 = scmp.eq.s32.totalorder %s15, 0
    %p56 = por %p54, %p55
    %s58 = sadd.s32 %s57, 1
    %p61 = scmp.eq.s32.totalorder %s9, 3
    %p62 = scmp.ne.s32.totalorder %s57, %s59
    %p63 = scmp.eq.s32.totalorder %s9, 0
    %p64 = por %p62, %p63
    %p65 = scmp.ne.s32.totalorder %s57, %s59
    %p66 = scmp.eq.s32.totalorder %s14, 3
    %p67 = por %p65, %p66
    %p68 = scmp.ne.s32.totalorder %s59, %s60
    %p69 = scmp.eq.s32.totalorder %s14, 0
    %p70 = por %p68, %p69
    %p71 = scmp.ne.s32.totalorder %s59, %s60
    %p72 = scmp.eq.s32.totalorder %s15, 3
    %p73 = por %p71, %p72
    %p75 = scmp.ne.s32.totalorder %s60, %s74
    %p76 = scmp.eq.s32.totalorder %s15, 0
    %p77 = por %p75, %p76
    %s79 = sadd.s32 %s78, 1
    %p82 = scmp.eq.s32.totalorder %s9, 3
    %p83 = scmp.ne.s32.totalorder %s78, %s80
    %p84 = scmp.eq.s32.totalorder %s9, 0
    %p85 = por %p83, %p84
    %p86 = scmp.ne.s32.totalorder %s78, %s80
    %p87 = scmp.eq.s32.totalorder %s14, 3
    %p88 = por %p86, %p87
    %p89 = scmp.ne.s32.totalorder %s80, %s81
    %p90 = scmp.eq.s32.totalorder %s14, 0
    %p91 = por %p89, %p90
    %p92 = scmp.ne.s32.totalorder %s80, %s81
    %p93 = scmp.eq.s32.totalorder %s15, 3
    %p94 = por %p92, %p93
    %p96 = scmp.ne.s32.totalorder %s81, %s95
    %p97 = scmp.eq.s32.totalorder %s15, 0
    %p98 = por %p96, %p97
    %s99 = ssub.s32 %s16, %s28
    %s100 = ssub.s32 %s17, %s24
    %s101 = sor.u32 %s99, %s100
    %p102 = scmp.eq.s32.totalorder %s101, 0
    %s104 = sadd.s32 %s103, 1
    %s105 = scalar_select %p102, %s103, %s104
    %p108 = pneg %p102
    %p109 = scmp.eq.s32.totalorder %s9, 3
    %p110 = por %p108, %p109
    %p111 = scmp.ne.s32.totalorder %s103, %s106
    %p112 = scmp.eq.s32.totalorder %s9, 0
    %p113 = por %p111, %p112
    %p114 = scmp.ne.s32.totalorder %s103, %s106
    %p115 = scmp.eq.s32.totalorder %s14, 3
    %p116 = por %p114, %p115
    %p117 = scmp.ne.s32.totalorder %s106, %s107
    %p118 = scmp.eq.s32.totalorder %s14, 0
    %p119 = por %p117, %p118
    %p120 = scmp.ne.s32.totalorder %s106, %s107
    %p121 = scmp.eq.s32.totalorder %s15, 3
    %p122 = por %p120, %p121
    %p124 = scmp.ne.s32.totalorder %s107, %s123
    %p125 = scmp.eq.s32.totalorder %s15, 0
    %p126 = por %p124, %p125
    %p127 = scmp.le.s32.totalorder 1, %s9
    %p128 = scmp.lt.s32.totalorder %s9, 5
    %p129 = pnand %p127, %p128
    %p130 = pneg %p129
    // Predicated region
    $region9: #{unet_block_forward.3} parent=5 // pred_check
      _
    $region10: #{unet_block_forward.3} parent=5 // pred_check_branch
      %132 = sbr.rel (%p129) target = $region12
    $region11: #{unet_block_forward.3} parent=5 // pred_region
      %s133 = ssub.s32 %s9, 1
      // Predicated region
      $region13: #{unet_block_forward.3} parent=11 // pred_check
        %p134 = pneg %p70
      $region14: #{unet_block_forward.3} parent=11 // pred_check_branch
        %136 = sbr.rel (%p134) target = $region16
      $region15: #{unet_block_forward.3} parent=11 // pred_region
        _
      $region16: #{unet_block_forward.3} parent=11 // pred_fallthru
        _
      // Predicated region
      $region17: #{unet_block_forward.3} parent=11 // pred_check
        %p137 = pneg %p91
      $region18: #{unet_block_forward.3} parent=11 // pred_check_branch
        %139 = sbr.rel (%p137) target = $region20
      $region19: #{unet_block_forward.3} parent=11 // pred_region
        _
      $region20: #{unet_block_forward.3} parent=11 // pred_fallthru
        _
    $region12: #{unet_block_forward.3} parent=5 // pred_fallthru
      _
    %p140 = scmp.lt.s32.totalorder %s9, 4
    // Predicated region
    $region21: #{unet_block_forward.3} parent=5 // pred_check
      %p141 = pneg %p140
    $region22: #{unet_block_forward.3} parent=5 // pred_check_branch
      %143 = sbr.rel (%p141) target = $region24
    $region23: #{unet_block_forward.3} parent=5 // pred_region
      // Predicated region
      $region25: #{unet_block_forward.3} parent=23 // pred_check
        %p144 = pneg %p43
      $region26: #{unet_block_forward.3} parent=23 // pred_check_branch
        %146 = sbr.rel (%p144) target = $region28
      $region27: #{unet_block_forward.3} parent=23 // pred_region
        %p147 = scmp.lt.s32.totalorder %s16, 1
        %s148 = scalar_select %p147, %s16, 1
        %p149 = scmp.lt.s32.totalorder %s17, 1
        %s150 = scalar_select %p149, %s17, 1
        %s151 = smul.addr %s150, 3
        %s152 = smul.addr %s148, 6
        %s153 = sadd.s32 %s151, %s152
        %s154 = smul.addr %s153, 4
        %s155 = scalar_lea.vmem %s0, %s154
      $region28: #{unet_block_forward.3} parent=23 // pred_fallthru
        _
    $region24: #{unet_block_forward.3} parent=5 // pred_fallthru
      _
    %p156 = scmp.le.s32.totalorder 1, %s9
    %p157 = scmp.lt.s32.totalorder %s9, 5
    %p158 = pnand %p156, %p157
    %p159 = pneg %p158
    // Predicated region
    $region29: #{unet_block_forward.3} parent=5 // pred_check
      _
    $region30: #{unet_block_forward.3} parent=5 // pred_check_branch
      %161 = sbr.rel (%p158) target = $region32
    $region31: #{unet_block_forward.3} parent=5 // pred_region
      %s162 = ssub.s32 %s9, 1
      %p163 = scmp.lt.s32.totalorder %s18, 1
      %s164 = scalar_select %p163, %s18, 1
      %p165 = scmp.lt.s32.totalorder %s19, 1
      %s166 = scalar_select %p165, %s19, 1
      %s167 = smul.addr %s166, 3
      %s168 = smul.addr %s164, 6
      %s169 = sadd.s32 %s167, %s168
      %s170 = smul.addr %s169, 4
      %s171 = scalar_lea.vmem %s0, %s170
      %p172 = pneg %p49
      %p173 = pneg %p46
      %p174 = pneg %p70
      %p175 = pneg %p67
      %p176 = pneg %p91
      %p177 = pneg %p88
      %p178 = pneg %p119
      %p179 = pneg %p116
      %s180 = smul.u32 2, %s19
      %p181 = scmp.lt.s32.totalorder %s18, 1
      %s182 = scalar_select %p181, %s18, 1
      %p183 = scmp.lt.s32.totalorder %s180, 3
      %s184 = scalar_select %p183, %s180, 3
      %s185 = smul.addr %s182, 4
      %s186 = sadd.s32 %s184, %s185
      %s187 = smul.addr %s186, 8
      %s188 = scalar_lea.vmem %s3, %s187
      %p189 = scmp.lt.s32.totalorder %s18, 1
      %s190 = scalar_select %p189, %s18, 1
      %p191 = scmp.lt.s32.totalorder %s19, 1
      %s192 = scalar_select %p191, %s19, 1
      %s193 = smul.addr %s192, 3
      %s194 = smul.addr %s190, 6
      %s195 = sadd.s32 %s193, %s194
      %s196 = smul.addr %s195, 4
      %s197 = scalar_lea.vmem %s0, %s196
      %s198 = smul.u32 2, %s19
      %p199 = scmp.lt.s32.totalorder %s18, 1
      %s200 = scalar_select %p199, %s18, 1
      %p201 = scmp.lt.s32.totalorder %s198, 3
      %s202 = scalar_select %p201, %s198, 3
      %s203 = smul.addr %s200, 4
      %s204 = sadd.s32 %s202, %s203
      %s205 = smul.addr %s204, 8
      %s206 = scalar_lea.vmem %s3, %s205
      %s207 = smul.u32 2, %s19
      %v208 = vld [vmem:[%s197] sm:$0xff]
      %v209 = vld [vmem:[%s197 + $0x8] sm:$0xf]
      %v210 = vunpack.c.l.bf16 %v208
      %v211 = vunpack.c.h.bf16 %v208
      %v212 = vunpack.c.l.bf16 %v209
      %v213 = vld [vmem:[%s1] sm:$0xff]
      %215 = vset.pattern.permute.xlu0 0
      %216 = vperm.xlu0 %215, %v213
      %v217 = vpop.permute.xlu0 %216
      %v219 = vmul.f32 %v210, %v217
      %v220 = vmul.f32 %v211, %v217
      %v221 = vmul.f32 %v212, %v217
      %v222 = vld [vmem:[%s2] sm:$0xff]
      %224 = vset.pattern.permute.xlu0 0
      %225 = vperm.xlu0 %224, %v222
      %v226 = vpop.permute.xlu0 %225
      %v228 = vadd.f32 %v219, %v226
      %v229 = vadd.f32 %v220, %v226
      %v230 = vadd.f32 %v221, %v226
      %v231 = vmax.f32 %v228, 0.0
      %v232 = vmax.f32 %v229, 0.0
      %v233 = vmax.f32 %v230, 0.0
      %vm234 = vcmask 64512
      %235 = vst.msk [vmem:[%s206] sm:$0xff] %vm234, %v231
      %237 = vrot.lane.b32.xlu0 %v231, 126
      %v238 = vpop.permute.xlu0 %237
      %vm240 = vcmask 130112
      %241 = vst.msk [vmem:[%s206] sm:$0xff] %vm240, %v238
      %242 = vrot.lane.b32.xlu0 %v231, 124
      %v243 = vpop.permute.xlu0 %242
      %vm245 = vcmask 195712
      %246 = vst.msk [vmem:[%s206] sm:$0xff] %vm245, %v243
      %247 = vrot.lane.b32.xlu0 %v231, 122
      %v248 = vpop.permute.xlu0 %247
      %vm250 = vcmask 261312
      %251 = vst.msk [vmem:[%s206] sm:$0xff] %vm250, %v248
      %252 = vrot.lane.b32.xlu0 %v231, 120
      %v253 = vpop.permute.xlu0 %252
      %vm255 = vcmask 326912
      %256 = vst.msk [vmem:[%s206] sm:$0xff] %vm255, %v253
      %257 = vrot.lane.b32.xlu0 %v231, 118
      %v258 = vpop.permute.xlu0 %257
      %vm260 = vcmask 392512
      %261 = vst.msk [vmem:[%s206] sm:$0xff] %vm260, %v258
      %262 = vrot.lane.b32.xlu0 %v231, 116
      %v263 = vpop.permute.xlu0 %262
      %vm265 = vcmask 458112
      %266 = vst.msk [vmem:[%s206] sm:$0xff] %vm265, %v263
      %267 = vrot.lane.b32.xlu0 %v231, 114
      %v268 = vpop.permute.xlu0 %267
      %vm270 = vcmask 523712
      %271 = vst.msk [vmem:[%s206] sm:$0xff] %vm270, %v268
      %272 = vrot.lane.b32.xlu0 %v231, 112
      %v273 = vpop.permute.xlu0 %272
      %vm275 = vcmask 589312
      %276 = vst.msk [vmem:[%s206] sm:$0xff] %vm275, %v273
      %277 = vrot.lane.b32.xlu0 %v231, 110
      %v278 = vpop.permute.xlu0 %277
      %vm280 = vcmask 654912
      %281 = vst.msk [vmem:[%s206] sm:$0xff] %vm280, %v278
      %282 = vrot.lane.b32.xlu0 %v231, 108
      %v283 = vpop.permute.xlu0 %282
      %vm285 = vcmask 720512
      %286 = vst.msk [vmem:[%s206] sm:$0xff] %vm285, %v283
      %287 = vrot.lane.b32.xlu0 %v231, 106
      %v288 = vpop.permute.xlu0 %287
      %vm290 = vcmask 786112
      %291 = vst.msk [vmem:[%s206] sm:$0xff] %vm290, %v288
      %292 = vrot.lane.b32.xlu0 %v231, 104
      %v293 = vpop.permute.xlu0 %292
      %vm295 = vcmask 851712
      %296 = vst.msk [vmem:[%s206] sm:$0xff] %vm295, %v293
      %298 = vrot.lane.b32.xlu0 %v232, 102
      %v299 = vpop.permute.xlu0 %298
      %vm301 = vcmask 917312
      %302 = vst.msk [vmem:[%s206] sm:$0xff] %vm301, %v299
      %303 = vrot.lane.b32.xlu0 %v232, 100
      %v304 = vpop.permute.xlu0 %303
      %vm306 = vcmask 982912
      %307 = vst.msk [vmem:[%s206] sm:$0xff] %vm306, %v304
      %308 = vrot.lane.b32.xlu0 %v232, 98
      %v309 = vpop.permute.xlu0 %308
      %vm311 = vcmask 1048512
      %312 = vst.msk [vmem:[%s206] sm:$0xff] %vm311, %v309
      %313 = vrot.lane.b32.xlu0 %v232, 96
      %v314 = vpop.permute.xlu0 %313
      %316 = vst.msk [vmem:[%s206 + $0x8] sm:$0xff] %vm234, %v314
      %317 = vrot.lane.b32.xlu0 %v232, 94
      %v318 = vpop.permute.xlu0 %317
      %320 = vst.msk [vmem:[%s206 + $0x8] sm:$0xff] %vm240, %v318
      %321 = vrot.lane.b32.xlu0 %v232, 92
      %v322 = vpop.permute.xlu0 %321
      %324 = vst.msk [vmem:[%s206 + $0x8] sm:$0xff] %vm245, %v322
      %325 = vrot.lane.b32.xlu0 %v232, 90
      %v326 = vpop.permute.xlu0 %325
      %328 = vst.msk [vmem:[%s206 + $0x8] sm:$0xff] %vm250, %v326
      %329 = vrot.lane.b32.xlu0 %v232, 88
      %v330 = vpop.permute.xlu0 %329
      %332 = vst.msk [vmem:[%s206 + $0x8] sm:$0xff] %vm255, %v330
      %333 = vrot.lane.b32.xlu0 %v232, 86
      %v334 = vpop.permute.xlu0 %333
      %336 = vst.msk [vmem:[%s206 + $0x8] sm:$0xff] %vm260, %v334
      %337 = vrot.lane.b32.xlu0 %v232, 84
      %v338 = vpop.permute.xlu0 %337
      %340 = vst.msk [vmem:[%s206 + $0x8] sm:$0xff] %vm265, %v338
      %341 = vrot.lane.b32.xlu0 %v232, 82
      %v342 = vpop.permute.xlu0 %341
      %344 = vst.msk [vmem:[%s206 + $0x8] sm:$0xff] %vm270, %v342
      %345 = vrot.lane.b32.xlu0 %v232, 80
      %v346 = vpop.permute.xlu0 %345
      %348 = vst.msk [vmem:[%s206 + $0x8] sm:$0xff] %vm275, %v346
      %350 = vrot.lane.b32.xlu0 %v232, 78
      %v351 = vpop.permute.xlu0 %350
      %352 = vrot.lane.b32.xlu0 %v233, 78
      %v353 = vpop.permute.xlu0 %352
      %vm354 = vcmask 637952
      %v355 = vsel %vm354, %v351, %v353
      %357 = vst.msk [vmem:[%s206 + $0x8] sm:$0xff] %vm280, %v355
      %358 = vrot.lane.b32.xlu0 %v233, 76
      %v359 = vpop.permute.xlu0 %358
      %361 = vst.msk [vmem:[%s206 + $0x8] sm:$0xff] %vm285, %v359
      %362 = vrot.lane.b32.xlu0 %v233, 74
      %v363 = vpop.permute.xlu0 %362
      %365 = vst.msk [vmem:[%s206 + $0x8] sm:$0xff] %vm290, %v363
      %366 = vrot.lane.b32.xlu0 %v233, 72
      %v367 = vpop.permute.xlu0 %366
      %369 = vst.msk [vmem:[%s206 + $0x8] sm:$0xff] %vm295, %v367
      %370 = vrot.lane.b32.xlu0 %v233, 70
      %v371 = vpop.permute.xlu0 %370
      %373 = vst.msk [vmem:[%s206 + $0x8] sm:$0xff] %vm301, %v371
      %374 = vrot.lane.b32.xlu0 %v233, 68
      %v375 = vpop.permute.xlu0 %374
      %377 = vst.msk [vmem:[%s206 + $0x8] sm:$0xff] %vm306, %v375
      %378 = vrot.lane.b32.xlu0 %v233, 66
      %v379 = vpop.permute.xlu0 %378
      %381 = vst.msk [vmem:[%s206 + $0x8] sm:$0xff] %vm311, %v379
      %s382 = smul.u32 2, %s19
      %p383 = scmp.lt.s32.totalorder %s18, 1
      %s384 = scalar_select %p383, %s18, 1
      %p385 = scmp.lt.s32.totalorder %s382, 3
      %s386 = scalar_select %p385, %s382, 3
      %s387 = smul.addr %s384, 4
      %s388 = sadd.s32 %s386, %s387
      %s389 = smul.addr %s388, 8
      %s390 = scalar_lea.vmem %s3, %s389
      // Predicated region
      $region33: #{unet_block_forward.3} parent=31 // pred_check
        %p391 = pneg %p116
      $region34: #{unet_block_forward.3} parent=31 // pred_check_branch
        %393 = sbr.rel (%p391) target = $region36
      $region35: #{unet_block_forward.3} parent=31 // pred_region
        %s394 = smul.u32 2, %s19
      $region36: #{unet_block_forward.3} parent=31 // pred_fallthru
        _
    $region32: #{unet_block_forward.3} parent=5 // pred_fallthru
      _
    %p395 = scmp.le.s32.totalorder 2, %s9
    // Predicated region
    $region37: #{unet_block_forward.3} parent=5 // pred_check
      %p396 = pneg %p395
    $region38: #{unet_block_forward.3} parent=5 // pred_check_branch
      %398 = sbr.rel (%p396) target = $region40
    $region39: #{unet_block_forward.3} parent=5 // pred_region
      %s399 = ssub.s32 %s9, 2
      // Predicated region
      $region41: #{unet_block_forward.3} parent=39 // pred_check
        %p400 = pneg %p122
      $region42: #{unet_block_forward.3} parent=39 // pred_check_branch
        %402 = sbr.rel (%p400) target = $region44
      $region43: #{unet_block_forward.3} parent=39 // pred_region
        %s403 = smul.u32 2, %s21
        %p404 = scmp.lt.s32.totalorder %s20, 1
        %s405 = scalar_select %p404, %s20, 1
        %p406 = scmp.lt.s32.totalorder %s403, 3
        %s407 = scalar_select %p406, %s403, 3
        %s408 = smul.addr %s405, 4
        %s409 = sadd.s32 %s407, %s408
        %s410 = smul.addr %s409, 8
        %s411 = scalar_lea.vmem %s3, %s410
      $region44: #{unet_block_forward.3} parent=39 // pred_fallthru
        _
    $region40: #{unet_block_forward.3} parent=5 // pred_fallthru
      _
  $region6: #{unet_block_forward.3} parent=0 // loop_footer
    %s13 = sadd.s32 1, %s9
  $region7: #{unet_block_forward.3} parent=0 // loop_footer_branch
    %8 = sbr.rel target = $region3
  $region8: #{unet_block_forward.3} parent=0 // loop_exit
    _

// kernel: unet_block_forward.2
$region0: #{unet_block_forward.2}
  #allocation0 [shape = 'u32[]', space=smem, size = 0x4, offset = 0x4, fixed_abs, tag = 'smem constant byte address 0x4 - core index']
  #allocation1 [shape = 'u32[144,128]{1,0:T(1,128)}', space=vmem, size = 0x12000, scoped, tag = 'internal scratch']
  #allocation2 [shape = 'bf16[108,320]{1,0:T(8,128)(2,1)}', space=vmem, size = 0x15000, scoped, tag = 'scratch operand']
  %s0 = inlined_call_operand.vmem [shape: bf16[2,2,4,660], index: 0, kind: input, shape index: {}]
  %s1 = inlined_call_operand.vmem [shape: bf16[8,108], index: 1, kind: input, shape index: {}]
  %s2 = inlined_call_operand.vmem [shape: bf16[2,2,8,320], index: 2, kind: output, shape index: {0}]
  %s3 = inlined_call_operand.vmem [shape: f32[2,2,8,2], index: 3, kind: output, shape index: {1}]
  %4 = xla_tuple %s2, %s3
  %s5 = sld [smem:[#allocation0]]
  $region49: #{unet_block_forward.2} parent=0
    _
  %s7 = ssub.s32 1, %s5
  %s8 = scalar_select 0, %s7, %s5
  loop: start=0, step=1, limit=6
  $region2: #{unet_block_forward.2} parent=0 // loop_pre_header
    _
  $region3: #{unet_block_forward.2} parent=0 // loop_header
    %s10 = sphi 0, %s14
    %p11 = scmp.ge.s32.totalorder %s10, 6
    %s17 = sphi 0, %s29
    %s18 = sphi 0, %s25
    %s19 = sphi 0, %s17
    %s20 = sphi 0, %s18
    %s21 = sphi 0, %s19
    %s22 = sphi 0, %s20
    %s34 = sphi 0, %s36
    %s37 = sphi 0, %s34
    %s38 = sphi 0, %s37
    %s54 = sphi 0, %s38
    %s58 = sphi 0, %s58
    %s60 = sphi 0, %s58
    %s61 = sphi 0, %s60
    %s75 = sphi 0, %s61
    %s83 = sphi 0, %s85
    %s86 = sphi 0, %s83
    %s87 = sphi 0, %s86
    %s103 = sphi 0, %s87
    %s111 = sphi 0, %s113
    %s114 = sphi 0, %s111
    %s115 = sphi 0, %s114
    %s131 = sphi 0, %s115
  $region4: #{unet_block_forward.2} parent=0 // loop_header_branch
    %13 = sbr.rel (%p11) target = $region8
  $region5: #{unet_block_forward.2} parent=0 // loop_body
    %s15 = ssub.s32 %s10, 1
    %s16 = ssub.s32 %s10, 2
    %s23 = sadd.s32 1, %s18
    %p24 = scmp.ge.s32.totalorder %s23, 2
    %s25 = scalar_select %p24, 0, %s23
    %s26 = sadd.s32 1, %s17
    %s27 = scalar_select %p24, %s26, %s17
    %p28 = scmp.ge.s32.totalorder %s27, 2
    %s29 = scalar_select %p28, 0, %s27
    %s30 = ssub.s32 %s17, %s29
    %s31 = ssub.s32 %s18, %s25
    %s32 = sor.u32 %s30, %s31
    %p33 = scmp.eq.s32.totalorder %s32, 0
    %s35 = sadd.s32 %s34, 1
    %s36 = scalar_select %p33, %s34, %s35
    %p39 = pneg %p33
    %p40 = scmp.eq.s32.totalorder %s10, 3
    %p41 = por %p39, %p40
    %p42 = scmp.ne.s32.totalorder %s34, %s37
    %p43 = scmp.eq.s32.totalorder %s10, 0
    %p44 = por %p42, %p43
    %p45 = scmp.ne.s32.totalorder %s34, %s37
    %p46 = scmp.eq.s32.totalorder %s15, 3
    %p47 = por %p45, %p46
    %p48 = scmp.ne.s32.totalorder %s37, %s38
    %p49 = scmp.eq.s32.totalorder %s15, 0
    %p50 = por %p48, %p49
    %p51 = scmp.ne.s32.totalorder %s37, %s38
    %p52 = scmp.eq.s32.totalorder %s16, 3
    %p53 = por %p51, %p52
    %p55 = scmp.ne.s32.totalorder %s38, %s54
    %p56 = scmp.eq.s32.totalorder %s16, 0
    %p57 = por %p55, %p56
    %s59 = sadd.s32 %s58, 1
    %p62 = scmp.eq.s32.totalorder %s10, 3
    %p63 = scmp.ne.s32.totalorder %s58, %s60
    %p64 = scmp.eq.s32.totalorder %s10, 0
    %p65 = por %p63, %p64
    %p66 = scmp.ne.s32.totalorder %s58, %s60
    %p67 = scmp.eq.s32.totalorder %s15, 3
    %p68 = por %p66, %p67
    %p69 = scmp.ne.s32.totalorder %s60, %s61
    %p70 = scmp.eq.s32.totalorder %s15, 0
    %p71 = por %p69, %p70
    %p72 = scmp.ne.s32.totalorder %s60, %s61
    %p73 = scmp.eq.s32.totalorder %s16, 3
    %p74 = por %p72, %p73
    %p76 = scmp.ne.s32.totalorder %s61, %s75
    %p77 = scmp.eq.s32.totalorder %s16, 0
    %p78 = por %p76, %p77
    %s79 = ssub.s32 %s17, %s29
    %s80 = ssub.s32 %s18, %s25
    %s81 = sor.u32 %s79, %s80
    %p82 = scmp.eq.s32.totalorder %s81, 0
    %s84 = sadd.s32 %s83, 1
    %s85 = scalar_select %p82, %s83, %s84
    %p88 = pneg %p82
    %p89 = scmp.eq.s32.totalorder %s10, 3
    %p90 = por %p88, %p89
    %p91 = scmp.ne.s32.totalorder %s83, %s86
    %p92 = scmp.eq.s32.totalorder %s10, 0
    %p93 = por %p91, %p92
    %p94 = scmp.ne.s32.totalorder %s83, %s86
    %p95 = scmp.eq.s32.totalorder %s15, 3
    %p96 = por %p94, %p95
    %p97 = scmp.ne.s32.totalorder %s86, %s87
    %p98 = scmp.eq.s32.totalorder %s15, 0
    %p99 = por %p97, %p98
    %p100 = scmp.ne.s32.totalorder %s86, %s87
    %p101 = scmp.eq.s32.totalorder %s16, 3
    %p102 = por %p100, %p101
    %p104 = scmp.ne.s32.totalorder %s87, %s103
    %p105 = scmp.eq.s32.totalorder %s16, 0
    %p106 = por %p104, %p105
    %s107 = ssub.s32 %s17, %s29
    %s108 = ssub.s32 %s18, %s25
    %s109 = sor.u32 %s107, %s108
    %p110 = scmp.eq.s32.totalorder %s109, 0
    %s112 = sadd.s32 %s111, 1
    %s113 = scalar_select %p110, %s111, %s112
    %p116 = pneg %p110
    %p117 = scmp.eq.s32.totalorder %s10, 3
    %p118 = por %p116, %p117
    %p119 = scmp.ne.s32.totalorder %s111, %s114
    %p120 = scmp.eq.s32.totalorder %s10, 0
    %p121 = por %p119, %p120
    %p122 = scmp.ne.s32.totalorder %s111, %s114
    %p123 = scmp.eq.s32.totalorder %s15, 3
    %p124 = por %p122, %p123
    %p125 = scmp.ne.s32.totalorder %s114, %s115
    %p126 = scmp.eq.s32.totalorder %s15, 0
    %p127 = por %p125, %p126
    %p128 = scmp.ne.s32.totalorder %s114, %s115
    %p129 = scmp.eq.s32.totalorder %s16, 3
    %p130 = por %p128, %p129
    %p132 = scmp.ne.s32.totalorder %s115, %s131
    %p133 = scmp.eq.s32.totalorder %s16, 0
    %p134 = por %p132, %p133
    %p135 = scmp.le.s32.totalorder 1, %s10
    %p136 = scmp.lt.s32.totalorder %s10, 5
    %p137 = pnand %p135, %p136
    %p138 = pneg %p137
    // Predicated region
    $region9: #{unet_block_forward.2} parent=5 // pred_check
      _
    $region10: #{unet_block_forward.2} parent=5 // pred_check_branch
      %140 = sbr.rel (%p137) target = $region12
    $region11: #{unet_block_forward.2} parent=5 // pred_region
      %s141 = ssub.s32 %s10, 1
      // Predicated region
      $region13: #{unet_block_forward.2} parent=11 // pred_check
        %p142 = pneg %p71
      $region14: #{unet_block_forward.2} parent=11 // pred_check_branch
        %144 = sbr.rel (%p142) target = $region16
      $region15: #{unet_block_forward.2} parent=11 // pred_region
        _
      $region16: #{unet_block_forward.2} parent=11 // pred_fallthru
        _
    $region12: #{unet_block_forward.2} parent=5 // pred_fallthru
      _
    %p145 = scmp.lt.s32.totalorder %s10, 4
    // Predicated region
    $region17: #{unet_block_forward.2} parent=5 // pred_check
      %p146 = pneg %p145
    $region18: #{unet_block_forward.2} parent=5 // pred_check_branch
      %148 = sbr.rel (%p146) target = $region20
    $region19: #{unet_block_forward.2} parent=5 // pred_region
      // Predicated region
      $region21: #{unet_block_forward.2} parent=19 // pred_check
        %p149 = pneg %p44
      $region22: #{unet_block_forward.2} parent=19 // pred_check_branch
        %151 = sbr.rel (%p149) target = $region24
      $region23: #{unet_block_forward.2} parent=19 // pred_region
        %p152 = scmp.lt.s32.totalorder %s17, 1
        %s153 = scalar_select %p152, %s17, 1
        %p154 = scmp.lt.s32.totalorder %s18, 1
        %s155 = scalar_select %p154, %s18, 1
        %s156 = smul.addr %s155, 6
        %s157 = smul.addr %s153, 12
        %s158 = sadd.s32 %s156, %s157
        %s159 = smul.addr %s158, 2
        %s160 = scalar_lea.vmem %s0, %s159
      $region24: #{unet_block_forward.2} parent=19 // pred_fallthru
        _
    $region20: #{unet_block_forward.2} parent=5 // pred_fallthru
      _
    %p161 = scmp.le.s32.totalorder 1, %s10
    %p162 = scmp.lt.s32.totalorder %s10, 5
    %p163 = pnand %p161, %p162
    %p164 = pneg %p163
    // Predicated region
    $region25: #{unet_block_forward.2} parent=5 // pred_check
      _
    $region26: #{unet_block_forward.2} parent=5 // pred_check_branch
      %166 = sbr.rel (%p163) target = $region28
    $region27: #{unet_block_forward.2} parent=5 // pred_region
      %s167 = ssub.s32 %s10, 1
      %p168 = scmp.lt.s32.totalorder %s19, 1
      %s169 = scalar_select %p168, %s19, 1
      %p170 = scmp.lt.s32.totalorder %s20, 1
      %s171 = scalar_select %p170, %s20, 1
      %s172 = smul.addr %s171, 6
      %s173 = smul.addr %s169, 12
      %s174 = sadd.s32 %s172, %s173
      %s175 = smul.addr %s174, 2
      %s176 = scalar_lea.vmem %s0, %s175
      %p177 = pneg %p50
      %p178 = pneg %p47
      %p179 = pneg %p71
      %p180 = pneg %p68
      %p181 = pneg %p99
      %p182 = pneg %p96
      %p183 = scmp.lt.s32.totalorder %s19, 1
      %s184 = scalar_select %p183, %s19, 1
      %p185 = scmp.lt.s32.totalorder %s20, 1
      %s186 = scalar_select %p185, %s20, 1
      %s187 = smul.addr %s186, 3
      %s188 = smul.addr %s184, 6
      %s189 = sadd.s32 %s187, %s188
      %s190 = smul.addr %s189, 4
      %s191 = scalar_lea.vmem %s2, %s190
      %p192 = pneg %p127
      %p193 = pneg %p124
      %p194 = scmp.lt.s32.totalorder %s19, 1
      %s195 = scalar_select %p194, %s19, 1
      %p196 = scmp.lt.s32.totalorder %s20, 1
      %s197 = scalar_select %p196, %s20, 1
      %s198 = smul.addr %s195, 2
      %s199 = sadd.s32 %s197, %s198
      %s200 = smul.addr %s199, 8
      %s201 = scalar_lea.vmem %s3, %s200
      %p202 = scmp.lt.s32.totalorder %s19, 1
      %s203 = scalar_select %p202, %s19, 1
      %p204 = scmp.lt.s32.totalorder %s20, 1
      %s205 = scalar_select %p204, %s20, 1
      %s206 = smul.addr %s205, 6
      %s207 = smul.addr %s203, 12
      %s208 = sadd.s32 %s206, %s207
      %s209 = smul.addr %s208, 2
      %s210 = scalar_lea.vmem %s0, %s209
      %p211 = scmp.lt.s32.totalorder %s19, 1
      %s212 = scalar_select %p211, %s19, 1
      %p213 = scmp.lt.s32.totalorder %s20, 1
      %s214 = scalar_select %p213, %s20, 1
      %s215 = smul.addr %s214, 3
      %s216 = smul.addr %s212, 6
      %s217 = sadd.s32 %s215, %s216
      %s218 = smul.addr %s217, 4
      %s219 = scalar_lea.vmem %s2, %s218
      %p220 = scmp.lt.s32.totalorder %s19, 1
      %s221 = scalar_select %p220, %s19, 1
      %p222 = scmp.lt.s32.totalorder %s20, 1
      %s223 = scalar_select %p222, %s20, 1
      %s224 = smul.addr %s221, 2
      %s225 = sadd.s32 %s223, %s224
      %s226 = smul.addr %s225, 8
      %s227 = scalar_lea.vmem %s3, %s226
      %v229 = vld [vmem:[%s210] sm:$0xff]
      %v230 = vld [vmem:[%s210 + $0x8] sm:$0xf]
      %vm231 = vcmask 648192
      %232 = vst.msk [vmem:[#allocation2] sm:$0x3] %vm231, %v229
      %v235 = vunpack.c.l.s4 1983009808
      %v236 = vunpack.c.0.s8 %v235
      %v237 = vlaneseq
      %v238 = vshrl.u32 %v237, 7
      %v239 = vsub.s32 %v236, %v238
      %v240 = vrot.slane %v229, %v239
      %241 = vrot.lane.b32.xlu0 %v240, 98
      %v242 = vpop.permute.xlu0 %241
      %v243 = vrot.slane %v242, 4
      %vm244 = vcmask 801792
      %v245 = vsel %vm244, %v242, %v243
      %vm247 = vcmask 1042048
      %vm248 = vcmask 259076
      %vm249 = vmor %vm248, %vm247
      %250 = vst.msk [vmem:[#allocation2] sm:$0x33] %vm249, %v245
      %v251 = vcombine.high %v229, %v229
      %v253 = vunpack.c.l.s4 1983009808
      %v254 = vunpack.c.0.s8 %v253
      %v255 = vlaneseq
      %v256 = vshrl.u32 %v255, 7
      %v257 = vsub.s32 %v254, %v256
      %v258 = vrot.slane %v251, %v257
      %259 = vrot.lane.b32.xlu0 %v240, 68
      %v260 = vpop.permute.xlu0 %259
      %261 = vrot.lane.b32.xlu0 %v258, 68
      %v262 = vpop.permute.xlu0 %261
      %v263 = vrot.slane %v260, 4
      %vm264 = vcmask 556032
      %v265 = vsel %vm264, %v263, %v262
      %vm267 = vcmask 910592
      %268 = vst.msk [vmem:[#allocation2 + $0x4] sm:$0x3] %vm267, %v265
      %269 = vrot.lane.b32.xlu0 %v258, 38
      %v270 = vpop.permute.xlu0 %269
      %v271 = vrot.slane %v270, 4
      %vm272 = vcmask 310272
      %v273 = vsel %vm272, %v271, %v270
      %vm275 = vcmask 1042304
      %vm276 = vcmask 521220
      %vm277 = vmor %vm276, %vm275
      %278 = vst.msk [vmem:[#allocation2 + $0x4] sm:$0x33] %vm277, %v273
      %v279 = vcombine.low %v229, %v229
      %v281 = vunpack.c.l.s4 1983009808
      %v282 = vunpack.c.0.s8 %v281
      %v283 = vlaneseq
      %v284 = vshrl.u32 %v283, 7
      %v285 = vsub.s32 %v282, %v284
      %v286 = vrot.slane %v279, %v285
      %287 = vrot.lane.b32.xlu0 %v286, 127
      %v288 = vpop.permute.xlu0 %287
      %vm290 = vcmask 650242
      %291 = vst.msk [vmem:[#allocation2] sm:$0xc] %vm290, %v288
      %292 = vrot.lane.b32.xlu0 %v286, 97
      %v293 = vpop.permute.xlu0 %292
      %v294 = vrot.slane %v293, 4
      %vm295 = vcmask 793600
      %v296 = vsel %vm295, %v293, %v294
      %vm298 = vcmask 1044098
      %vm299 = vcmask 261126
      %vm300 = vmor %vm299, %vm298
      %301 = vst.msk [vmem:[#allocation2] sm:$0xcc] %vm300, %v296
      %302 = vrot.lane.b32.xlu0 %v286, 67
      %v303 = vpop.permute.xlu0 %302
      %304 = vrot.lane.b32.xlu0 %v240, 67
      %v305 = vpop.permute.xlu0 %304
      %v306 = vrot.slane %v303, 4
      %vm307 = vcmask 547840
      %v308 = vsel %vm307, %v306, %v305
      %vm310 = vcmask 912642
      %311 = vst.msk [vmem:[#allocation2 + $0x4] sm:$0xc] %vm310, %v308
      %312 = vrot.lane.b32.xlu0 %v240, 37
      %v313 = vpop.permute.xlu0 %312
      %v314 = vrot.slane %v313, 4
      %vm315 = vcmask 302080
      %v316 = vsel %vm315, %v314, %v313
      %vm318 = vcmask 1044354
      %vm319 = vcmask 523270
      %vm320 = vmor %vm319, %vm318
      %321 = vst.msk [vmem:[#allocation2 + $0x4] sm:$0xcc] %vm320, %v316
      %322 = vrot.lane.b32.xlu0 %v240, 126
      %v323 = vpop.permute.xlu0 %322
      %325 = vst.msk [vmem:[#allocation2 + $0xc] sm:$0x3] %vm231, %v323
      %326 = vrot.lane.b32.xlu0 %v240, 96
      %v327 = vpop.permute.xlu0 %326
      %v328 = vrot.slane %v327, 4
      %vm329 = vcmask 785408
      %v330 = vsel %vm329, %v327, %v328
      %332 = vst.msk [vmem:[#allocation2 + $0xc] sm:$0x33] %vm249, %v330
      %333 = vrot.lane.b32.xlu0 %v240, 66
      %v334 = vpop.permute.xlu0 %333
      %335 = vrot.lane.b32.xlu0 %v258, 66
      %v336 = vpop.permute.xlu0 %335
      %v337 = vrot.slane %v334, 4
      %vm338 = vcmask 539648
      %v339 = vsel %vm338, %v337, %v336
      %341 = vst.msk [vmem:[#allocation2 + $0x10] sm:$0x3] %vm267, %v339
      %342 = vrot.lane.b32.xlu0 %v258, 36
      %v343 = vpop.permute.xlu0 %342
      %v344 = vrot.slane %v343, 4
      %vm345 = vcmask 293888
      %v346 = vsel %vm345, %v344, %v343
      %348 = vst.msk [vmem:[#allocation2 + $0x10] sm:$0x33] %vm277, %v346
      %349 = vrot.lane.b32.xlu0 %v286, 118
      %v350 = vpop.permute.xlu0 %349
      %352 = vst.msk [vmem:[#allocation2 + $0xc] sm:$0xc] %vm290, %v350
      %353 = vrot.lane.b32.xlu0 %v286, 88
      %v354 = vpop.permute.xlu0 %353
      %v355 = vrot.slane %v354, 4
      %vm356 = vcmask 719872
      %v357 = vsel %vm356, %v354, %v355
      %359 = vst.msk [vmem:[#allocation2 + $0xc] sm:$0xcc] %vm300, %v357
      %360 = vrot.lane.b32.xlu0 %v286, 58
      %v361 = vpop.permute.xlu0 %360
      %362 = vrot.lane.b32.xlu0 %v240, 58
      %v363 = vpop.permute.xlu0 %362
      %v364 = vrot.slane %v361, 4
      %vm365 = vcmask 474112
      %v366 = vsel %vm365, %v364, %v363
      %368 = vst.msk [vmem:[#allocation2 + $0x10] sm:$0xc] %vm310, %v366
      %369 = vrot.lane.b32.xlu0 %v240, 28
      %v370 = vpop.permute.xlu0 %369
      %v371 = vrot.slane %v370, 4
      %vm372 = vcmask 228352
      %v373 = vsel %vm372, %v371, %v370
      %375 = vst.msk [vmem:[#allocation2 + $0x10] sm:$0xcc] %vm320, %v373
      %376 = vrot.lane.b32.xlu0 %v240, 117
      %v377 = vpop.permute.xlu0 %376
      %379 = vst.msk [vmem:[#allocation2 + $0x18] sm:$0x3] %vm231, %v377
      %380 = vrot.lane.b32.xlu0 %v240, 87
      %v381 = vpop.permute.xlu0 %380
      %v382 = vrot.slane %v381, 4
      %vm383 = vcmask 711680
      %v384 = vsel %vm383, %v381, %v382
      %386 = vst.msk [vmem:[#allocation2 + $0x18] sm:$0x33] %vm249, %v384
      %387 = vrot.lane.b32.xlu0 %v240, 57
      %v388 = vpop.permute.xlu0 %387
      %389 = vrot.lane.b32.xlu0 %v258, 57
      %v390 = vpop.permute.xlu0 %389
      %v391 = vrot.slane %v388, 4
      %vm392 = vcmask 465920
      %v393 = vsel %vm392, %v391, %v390
      %395 = vst.msk [vmem:[#allocation2 + $0x1c] sm:$0x3] %vm267, %v393
      %396 = vrot.lane.b32.xlu0 %v258, 27
      %v397 = vpop.permute.xlu0 %396
      %v398 = vrot.slane %v397, 4
      %vm399 = vcmask 220160
      %v400 = vsel %vm399, %v398, %v397
      %402 = vst.msk [vmem:[#allocation2 + $0x1c] sm:$0x33] %vm277, %v400
      %403 = vrot.lane.b32.xlu0 %v286, 116
      %v404 = vpop.permute.xlu0 %403
      %406 = vst.msk [vmem:[#allocation2 + $0x18] sm:$0xc] %vm290, %v404
      %407 = vrot.lane.b32.xlu0 %v286, 86
      %v408 = vpop.permute.xlu0 %407
      %v409 = vrot.slane %v408, 4
      %vm410 = vcmask 703488
      %v411 = vsel %vm410, %v408, %v409
      %413 = vst.msk [vmem:[#allocation2 + $0x18] sm:$0xcc] %vm300, %v411
      %414 = vrot.lane.b32.xlu0 %v286, 56
      %v415 = vpop.permute.xlu0 %414
      %416 = vrot.lane.b32.xlu0 %v240, 56
      %v417 = vpop.permute.xlu0 %416
      %v418 = vrot.slane %v415, 4
      %vm419 = vcmask 457728
      %v420 = vsel %vm419, %v418, %v417
      %422 = vst.msk [vmem:[#allocation2 + $0x1c] sm:$0xc] %vm310, %v420
      %423 = vrot.lane.b32.xlu0 %v240, 26
      %v424 = vpop.permute.xlu0 %423
      %v425 = vrot.slane %v424, 4
      %vm426 = vcmask 211968
      %v427 = vsel %vm426, %v425, %v424
      %429 = vst.msk [vmem:[#allocation2 + $0x1c] sm:$0xcc] %vm320, %v427
      %430 = vrot.lane.b32.xlu0 %v240, 108
      %v431 = vpop.permute.xlu0 %430
      %433 = vst.msk [vmem:[#allocation2 + $0x24] sm:$0x3] %vm231, %v431
      %434 = vrot.lane.b32.xlu0 %v240, 78
      %v435 = vpop.permute.xlu0 %434
      %v436 = vrot.slane %v435, 4
      %vm437 = vcmask 637952
      %v438 = vsel %vm437, %v435, %v436
      %440 = vst.msk [vmem:[#allocation2 + $0x24] sm:$0x33] %vm249, %v438
      %441 = vrot.lane.b32.xlu0 %v240, 48
      %v442 = vpop.permute.xlu0 %441
      %443 = vrot.lane.b32.xlu0 %v258, 48
      %v444 = vpop.permute.xlu0 %443
      %v445 = vrot.slane %v442, 4
      %vm446 = vcmask 392192
      %v447 = vsel %vm446, %v445, %v444
      %449 = vst.msk [vmem:[#allocation2 + $0x28] sm:$0x3] %vm267, %v447
      %450 = vrot.lane.b32.xlu0 %v258, 18
      %v451 = vpop.permute.xlu0 %450
      %v452 = vrot.slane %v451, 4
      %vm453 = vcmask 146432
      %v454 = vsel %vm453, %v452, %v451
      %456 = vst.msk [vmem:[#allocation2 + $0x28] sm:$0x33] %vm277, %v454
      %457 = vrot.lane.b32.xlu0 %v286, 107
      %v458 = vpop.permute.xlu0 %457
      %460 = vst.msk [vmem:[#allocation2 + $0x24] sm:$0xc] %vm290, %v458
      %461 = vrot.lane.b32.xlu0 %v286, 77
      %v462 = vpop.permute.xlu0 %461
      %v463 = vrot.slane %v462, 4
      %vm464 = vcmask 629760
      %v465 = vsel %vm464, %v462, %v463
      %467 = vst.msk [vmem:[#allocation2 + $0x24] sm:$0xcc] %vm300, %v465
      %468 = vrot.lane.b32.xlu0 %v286, 47
      %v469 = vpop.permute.xlu0 %468
      %470 = vrot.lane.b32.xlu0 %v240, 47
      %v471 = vpop.permute.xlu0 %470
      %v472 = vrot.slane %v469, 4
      %vm473 = vcmask 384000
      %v474 = vsel %vm473, %v472, %v471
      %476 = vst.msk [vmem:[#allocation2 + $0x28] sm:$0xc] %vm310, %v474
      %477 = vrot.lane.b32.xlu0 %v240, 17
      %v478 = vpop.permute.xlu0 %477
      %v479 = vrot.slane %v478, 4
      %vm480 = vcmask 138240
      %v481 = vsel %vm480, %v479, %v478
      %483 = vst.msk [vmem:[#allocation2 + $0x28] sm:$0xcc] %vm320, %v481
      %484 = vrot.lane.b32.xlu0 %v240, 106
      %v485 = vpop.permute.xlu0 %484
      %487 = vst.msk [vmem:[#allocation2 + $0x30] sm:$0x3] %vm231, %v485
      %488 = vrot.lane.b32.xlu0 %v240, 76
      %v489 = vpop.permute.xlu0 %488
      %v490 = vrot.slane %v489, 4
      %vm491 = vcmask 621568
      %v492 = vsel %vm491, %v489, %v490
      %494 = vst.msk [vmem:[#allocation2 + $0x30] sm:$0x33] %vm249, %v492
      %495 = vrot.lane.b32.xlu0 %v240, 46
      %v496 = vpop.permute.xlu0 %495
      %497 = vrot.lane.b32.xlu0 %v258, 46
      %v498 = vpop.permute.xlu0 %497
      %v499 = vrot.slane %v496, 4
      %vm500 = vcmask 375808
      %v501 = vsel %vm500, %v499, %v498
      %503 = vst.msk [vmem:[#allocation2 + $0x34] sm:$0x3] %vm267, %v501
      %504 = vrot.lane.b32.xlu0 %v258, 16
      %v505 = vpop.permute.xlu0 %504
      %v506 = vrot.slane %v505, 4
      %vm507 = vcmask 130048
      %v508 = vsel %vm507, %v506, %v505
      %510 = vst.msk [vmem:[#allocation2 + $0x34] sm:$0x33] %vm277, %v508
      %511 = vrot.lane.b32.xlu0 %v286, 18
      %v512 = vpop.permute.xlu0 %511
      %v513 = vrot.slane %v512, 4
      %v514 = vsel %vm453, %v512, %v513
      %516 = vst.msk [vmem:[#allocation2 + $0x30] sm:$0xc] %vm290, %v514
      %517 = vrot.lane.b32.xlu0 %v240, 116
      %v518 = vpop.permute.xlu0 %517
      %v519 = vrot.slane %v404, 4
      %v520 = vrot.slane %v518, 4
      %vm521 = vcmask 1043456
      %v522 = vsel %vm521, %v519, %v520
      %vm523 = vcmask 949248
      %v524 = vsel %vm523, %v522, %v518
      %526 = vst.msk [vmem:[#allocation2 + $0x30] sm:$0xcc] %vm300, %v524
      %527 = vrot.lane.b32.xlu0 %v240, 86
      %v528 = vpop.permute.xlu0 %527
      %v529 = vrot.slane %v528, 4
      %v530 = vsel %vm410, %v528, %v529
      %532 = vst.msk [vmem:[#allocation2 + $0x34] sm:$0xc] %vm310, %v530
      %v534 = vcombine.low %v230, %v230
      %v536 = vunpack.c.l.s4 1983009808
      %v537 = vunpack.c.0.s8 %v536
      %v538 = vlaneseq
      %v539 = vshrl.u32 %v538, 7
      %v540 = vsub.s32 %v537, %v539
      %v541 = vrot.slane %v534, %v540
      %542 = vrot.lane.b32.xlu0 %v541, 56
      %v543 = vpop.permute.xlu0 %542
      %v544 = vrot.slane %v417, 4
      %v545 = vrot.slane %v543, 4
      %v546 = vsel %vm521, %v544, %v545
      %v547 = vsel %vm419, %v417, %v546
      %549 = vst.msk [vmem:[#allocation2 + $0x34] sm:$0xcc] %vm320, %v547
      %v550 = vsel %vm480, %v478, %v479
      %552 = vst.msk [vmem:[#allocation2 + $0x3c] sm:$0x3] %vm231, %v550
      %553 = vrot.lane.b32.xlu0 %v240, 115
      %v554 = vpop.permute.xlu0 %553
      %555 = vrot.lane.b32.xlu0 %v258, 115
      %v556 = vpop.permute.xlu0 %555
      %v557 = vrot.slane %v554, 4
      %v558 = vrot.slane %v556, 4
      %v559 = vsel %vm521, %v557, %v558
      %vm560 = vcmask 941056
      %v561 = vsel %vm560, %v559, %v556
      %563 = vst.msk [vmem:[#allocation2 + $0x3c] sm:$0x33] %vm249, %v561
      %564 = vrot.lane.b32.xlu0 %v258, 85
      %v565 = vpop.permute.xlu0 %564
      %v566 = vrot.slane %v565, 4
      %vm567 = vcmask 695296
      %v568 = vsel %vm567, %v565, %v566
      %570 = vst.msk [vmem:[#allocation2 + $0x40] sm:$0x3] %vm267, %v568
      %v572 = vunpack.c.l.s4 1983009808
      %v573 = vunpack.c.0.s8 %v572
      %v574 = vlaneseq
      %v575 = vshrl.u32 %v574, 7
      %v576 = vsub.s32 %v573, %v575
      %v577 = vrot.slane %v230, %v576
      %578 = vrot.lane.b32.xlu0 %v258, 55
      %v579 = vpop.permute.xlu0 %578
      %580 = vrot.lane.b32.xlu0 %v577, 55
      %v581 = vpop.permute.xlu0 %580
      %v582 = vrot.slane %v579, 4
      %v583 = vrot.slane %v581, 4
      %v584 = vsel %vm521, %v582, %v583
      %vm585 = vcmask 449536
      %v586 = vsel %vm585, %v579, %v584
      %588 = vst.msk [vmem:[#allocation2 + $0x40] sm:$0x33] %vm277, %v586
      %589 = vrot.lane.b32.xlu0 %v286, 16
      %v590 = vpop.permute.xlu0 %589
      %v591 = vrot.slane %v590, 4
      %v592 = vsel %vm507, %v590, %v591
      %594 = vst.msk [vmem:[#allocation2 + $0x3c] sm:$0xc] %vm290, %v592
      %595 = vrot.lane.b32.xlu0 %v286, 114
      %v596 = vpop.permute.xlu0 %595
      %597 = vrot.lane.b32.xlu0 %v240, 114
      %v598 = vpop.permute.xlu0 %597
      %v599 = vrot.slane %v596, 4
      %v600 = vrot.slane %v598, 4
      %v601 = vsel %vm521, %v599, %v600
      %vm602 = vcmask 932864
      %v603 = vsel %vm602, %v601, %v598
      %605 = vst.msk [vmem:[#allocation2 + $0x3c] sm:$0xcc] %vm300, %v603
      %606 = vrot.lane.b32.xlu0 %v240, 84
      %v607 = vpop.permute.xlu0 %606
      %v608 = vrot.slane %v607, 4
      %vm609 = vcmask 687104
      %v610 = vsel %vm609, %v607, %v608
      %612 = vst.msk [vmem:[#allocation2 + $0x40] sm:$0xc] %vm310, %v610
      %613 = vrot.lane.b32.xlu0 %v240, 54
      %v614 = vpop.permute.xlu0 %613
      %615 = vrot.lane.b32.xlu0 %v541, 54
      %v616 = vpop.permute.xlu0 %615
      %v617 = vrot.slane %v614, 4
      %v618 = vrot.slane %v616, 4
      %v619 = vsel %vm521, %v617, %v618
      %vm620 = vcmask 441344
      %v621 = vsel %vm620, %v614, %v619
      %623 = vst.msk [vmem:[#allocation2 + $0x40] sm:$0xcc] %vm320, %v621
      %624 = vrot.lane.b32.xlu0 %v240, 8
      %v625 = vpop.permute.xlu0 %624
      %v626 = vrot.slane %v625, 4
      %vm627 = vcmask 64512
      %v628 = vsel %vm627, %v625, %v626
      %630 = vst.msk [vmem:[#allocation2 + $0x48] sm:$0x3] %vm231, %v628
      %631 = vrot.lane.b32.xlu0 %v258, 106
      %v632 = vpop.permute.xlu0 %631
      %v633 = vrot.slane %v485, 4
      %v634 = vrot.slane %v632, 4
      %v635 = vsel %vm521, %v633, %v634
      %vm636 = vcmask 867328
      %v637 = vsel %vm636, %v635, %v632
      %639 = vst.msk [vmem:[#allocation2 + $0x48] sm:$0x33] %vm249, %v637
      %640 = vrot.lane.b32.xlu0 %v258, 76
      %v641 = vpop.permute.xlu0 %640
      %v642 = vrot.slane %v641, 4
      %v643 = vsel %vm491, %v641, %v642
      %645 = vst.msk [vmem:[#allocation2 + $0x4c] sm:$0x3] %vm267, %v643
      %646 = vrot.lane.b32.xlu0 %v577, 46
      %v647 = vpop.permute.xlu0 %646
      %v648 = vrot.slane %v498, 4
      %v649 = vrot.slane %v647, 4
      %v650 = vsel %vm521, %v648, %v649
      %v651 = vsel %vm500, %v498, %v650
      %653 = vst.msk [vmem:[#allocation2 + $0x4c] sm:$0x33] %vm277, %v651
      %654 = vrot.lane.b32.xlu0 %v286, 7
      %v655 = vpop.permute.xlu0 %654
      %v656 = vrot.slane %v655, 4
      %vm657 = vcmask 56320
      %v658 = vsel %vm657, %v655, %v656
      %660 = vst.msk [vmem:[#allocation2 + $0x48] sm:$0xc] %vm290, %v658
      %661 = vrot.lane.b32.xlu0 %v286, 105
      %v662 = vpop.permute.xlu0 %661
      %663 = vrot.lane.b32.xlu0 %v240, 105
      %v664 = vpop.permute.xlu0 %663
      %v665 = vrot.slane %v662, 4
      %v666 = vrot.slane %v664, 4
      %v667 = vsel %vm521, %v665, %v666
      %vm668 = vcmask 859136
      %v669 = vsel %vm668, %v667, %v664
      %671 = vst.msk [vmem:[#allocation2 + $0x48] sm:$0xcc] %vm300, %v669
      %672 = vrot.lane.b32.xlu0 %v240, 75
      %v673 = vpop.permute.xlu0 %672
      %v674 = vrot.slane %v673, 4
      %vm675 = vcmask 613376
      %v676 = vsel %vm675, %v673, %v674
      %678 = vst.msk [vmem:[#allocation2 + $0x4c] sm:$0xc] %vm310, %v676
      %679 = vrot.lane.b32.xlu0 %v240, 45
      %v680 = vpop.permute.xlu0 %679
      %681 = vrot.lane.b32.xlu0 %v541, 45
      %v682 = vpop.permute.xlu0 %681
      %v683 = vrot.slane %v680, 4
      %v684 = vrot.slane %v682, 4
      %v685 = vsel %vm521, %v683, %v684
      %vm686 = vcmask 367616
      %v687 = vsel %vm686, %v680, %v685
      %689 = vst.msk [vmem:[#allocation2 + $0x4c] sm:$0xcc] %vm320, %v687
      %690 = vrot.lane.b32.xlu0 %v240, 6
      %v691 = vpop.permute.xlu0 %690
      %v692 = vrot.slane %v691, 4
      %vm693 = vcmask 48128
      %v694 = vsel %vm693, %v691, %v692
      %696 = vst.msk [vmem:[#allocation2 + $0x54] sm:$0x3] %vm231, %v694
      %697 = vrot.lane.b32.xlu0 %v240, 104
      %v698 = vpop.permute.xlu0 %697
      %699 = vrot.lane.b32.xlu0 %v258, 104
      %v700 = vpop.permute.xlu0 %699
      %v701 = vrot.slane %v698, 4
      %v702 = vrot.slane %v700, 4
      %v703 = vsel %vm521, %v701, %v702
      %vm704 = vcmask 850944
      %v705 = vsel %vm704, %v703, %v700
      %707 = vst.msk [vmem:[#allocation2 + $0x54] sm:$0x33] %vm249, %v705
      %708 = vrot.lane.b32.xlu0 %v258, 74
      %v709 = vpop.permute.xlu0 %708
      %v710 = vrot.slane %v709, 4
      %vm711 = vcmask 605184
      %v712 = vsel %vm711, %v709, %v710
      %714 = vst.msk [vmem:[#allocation2 + $0x58] sm:$0x3] %vm267, %v712
      %715 = vrot.lane.b32.xlu0 %v258, 44
      %v716 = vpop.permute.xlu0 %715
      %717 = vrot.lane.b32.xlu0 %v577, 44
      %v718 = vpop.permute.xlu0 %717
      %v719 = vrot.slane %v716, 4
      %v720 = vrot.slane %v718, 4
      %v721 = vsel %vm521, %v719, %v720
      %vm722 = vcmask 359424
      %v723 = vsel %vm722, %v716, %v721
      %725 = vst.msk [vmem:[#allocation2 + $0x58] sm:$0x33] %vm277, %v723
      %726 = vrot.lane.b32.xlu0 %v286, 126
      %v727 = vpop.permute.xlu0 %726
      %v728 = vrot.slane %v727, 4
      %730 = vst.msk [vmem:[#allocation2 + $0x54] sm:$0xc] %vm290, %v728
      %731 = vrot.lane.b32.xlu0 %v286, 96
      %v732 = vpop.permute.xlu0 %731
      %v733 = vrot.slane %v732, 4
      %v734 = vsel %vm521, %v733, %v328
      %v735 = vsel %vm329, %v734, %v327
      %737 = vst.msk [vmem:[#allocation2 + $0x54] sm:$0xcc] %vm300, %v735
      %v738 = vsel %vm338, %v334, %v337
      %740 = vst.msk [vmem:[#allocation2 + $0x58] sm:$0xc] %vm310, %v738
      %741 = vrot.lane.b32.xlu0 %v240, 36
      %v742 = vpop.permute.xlu0 %741
      %743 = vrot.lane.b32.xlu0 %v541, 36
      %v744 = vpop.permute.xlu0 %743
      %v745 = vrot.slane %v742, 4
      %v746 = vrot.slane %v744, 4
      %v747 = vsel %vm521, %v745, %v746
      %v748 = vsel %vm345, %v742, %v747
      %750 = vst.msk [vmem:[#allocation2 + $0x58] sm:$0xcc] %vm320, %v748
      %751 = vrot.lane.b32.xlu0 %v240, 125
      %v752 = vpop.permute.xlu0 %751
      %v753 = vrot.slane %v752, 4
      %755 = vst.msk [vmem:[#allocation2 + $0x60] sm:$0x3] %vm231, %v753
      %756 = vrot.lane.b32.xlu0 %v240, 95
      %v757 = vpop.permute.xlu0 %756
      %758 = vrot.lane.b32.xlu0 %v258, 95
      %v759 = vpop.permute.xlu0 %758
      %v760 = vrot.slane %v757, 4
      %v761 = vrot.slane %v759, 4
      %v762 = vsel %vm521, %v760, %v761
      %vm763 = vcmask 777216
      %v764 = vsel %vm763, %v762, %v759
      %766 = vst.msk [vmem:[#allocation2 + $0x60] sm:$0x33] %vm249, %v764
      %767 = vrot.lane.b32.xlu0 %v258, 65
      %v768 = vpop.permute.xlu0 %767
      %v769 = vrot.slane %v768, 4
      %vm770 = vcmask 531456
      %v771 = vsel %vm770, %v768, %v769
      %773 = vst.msk [vmem:[#allocation2 + $0x64] sm:$0x3] %vm267, %v771
      %774 = vrot.lane.b32.xlu0 %v258, 35
      %v775 = vpop.permute.xlu0 %774
      %776 = vrot.lane.b32.xlu0 %v577, 35
      %v777 = vpop.permute.xlu0 %776
      %v778 = vrot.slane %v775, 4
      %v779 = vrot.slane %v777, 4
      %v780 = vsel %vm521, %v778, %v779
      %vm781 = vcmask 285696
      %v782 = vsel %vm781, %v775, %v780
      %784 = vst.msk [vmem:[#allocation2 + $0x64] sm:$0x33] %vm277, %v782
      %785 = vrot.lane.b32.xlu0 %v286, 124
      %v786 = vpop.permute.xlu0 %785
      %v787 = vrot.slane %v786, 4
      %789 = vst.msk [vmem:[#allocation2 + $0x60] sm:$0xc] %vm290, %v787
      %790 = vrot.lane.b32.xlu0 %v286, 94
      %v791 = vpop.permute.xlu0 %790
      %792 = vrot.lane.b32.xlu0 %v240, 94
      %v793 = vpop.permute.xlu0 %792
      %v794 = vrot.slane %v791, 4
      %v795 = vrot.slane %v793, 4
      %v796 = vsel %vm521, %v794, %v795
      %vm797 = vcmask 769024
      %v798 = vsel %vm797, %v796, %v793
      %800 = vst.msk [vmem:[#allocation2 + $0x60] sm:$0xcc] %vm300, %v798
      %801 = vrot.lane.b32.xlu0 %v240, 64
      %v802 = vpop.permute.xlu0 %801
      %v803 = vrot.slane %v802, 4
      %vm804 = vcmask 523264
      %v805 = vsel %vm804, %v802, %v803
      %807 = vst.msk [vmem:[#allocation2 + $0x64] sm:$0xc] %vm310, %v805
      %808 = vrot.lane.b32.xlu0 %v240, 34
      %v809 = vpop.permute.xlu0 %808
      %810 = vrot.lane.b32.xlu0 %v541, 34
      %v811 = vpop.permute.xlu0 %810
      %v812 = vrot.slane %v809, 4
      %v813 = vrot.slane %v811, 4
      %v814 = vsel %vm521, %v812, %v813
      %vm815 = vcmask 277504
      %v816 = vsel %vm815, %v809, %v814
      %818 = vst.msk [vmem:[#allocation2 + $0x64] sm:$0xcc] %vm320, %v816
      %v819 = vsel %vm345, %v745, %v343
      %821 = vst.msk [vmem:[#allocation2 + $0x6c] sm:$0x3] %vm231, %v819
      %822 = vrot.lane.b32.xlu0 %v258, 6
      %v823 = vpop.permute.xlu0 %822
      %v824 = vrot.slane %v823, 4
      %v825 = vsel %vm693, %v824, %v823
      %827 = vst.msk [vmem:[#allocation2 + $0x6c] sm:$0x33] %vm249, %v825
      %828 = vrot.lane.b32.xlu0 %v577, 104
      %v829 = vpop.permute.xlu0 %828
      %v830 = vsel %vm704, %v702, %v829
      %832 = vst.msk [vmem:[#allocation2 + $0x70] sm:$0x3] %vm267, %v830
      %833 = vrot.lane.b32.xlu0 %v577, 74
      %v834 = vpop.permute.xlu0 %833
      %v835 = vrot.slane %v834, 4
      %v836 = vsel %vm711, %v835, %v834
      %838 = vst.msk [vmem:[#allocation2 + $0x70] sm:$0x33] %vm277, %v836
      %839 = vrot.lane.b32.xlu0 %v286, 35
      %v840 = vpop.permute.xlu0 %839
      %841 = vrot.lane.b32.xlu0 %v240, 35
      %v842 = vpop.permute.xlu0 %841
      %v843 = vrot.slane %v840, 4
      %v844 = vsel %vm781, %v843, %v842
      %846 = vst.msk [vmem:[#allocation2 + $0x6c] sm:$0xc] %vm290, %v844
      %847 = vrot.lane.b32.xlu0 %v240, 5
      %v848 = vpop.permute.xlu0 %847
      %v849 = vrot.slane %v848, 4
      %vm850 = vcmask 39936
      %v851 = vsel %vm850, %v849, %v848
      %853 = vst.msk [vmem:[#allocation2 + $0x6c] sm:$0xcc] %vm300, %v851
      %854 = vrot.lane.b32.xlu0 %v240, 103
      %v855 = vpop.permute.xlu0 %854
      %856 = vrot.lane.b32.xlu0 %v541, 103
      %v857 = vpop.permute.xlu0 %856
      %v858 = vrot.slane %v855, 4
      %vm859 = vcmask 842752
      %v860 = vsel %vm859, %v858, %v857
      %862 = vst.msk [vmem:[#allocation2 + $0x70] sm:$0xc] %vm310, %v860
      %863 = vrot.lane.b32.xlu0 %v541, 73
      %v864 = vpop.permute.xlu0 %863
      %v865 = vrot.slane %v864, 4
      %vm866 = vcmask 596992
      %v867 = vsel %vm866, %v865, %v864
      %869 = vst.msk [vmem:[#allocation2 + $0x70] sm:$0xcc] %vm320, %v867
      %870 = vrot.lane.b32.xlu0 %v258, 34
      %v871 = vpop.permute.xlu0 %870
      %v872 = vsel %vm815, %v812, %v871
      %874 = vst.msk [vmem:[#allocation2 + $0x78] sm:$0x3] %vm231, %v872
      %875 = vrot.lane.b32.xlu0 %v258, 4
      %v876 = vpop.permute.xlu0 %875
      %v877 = vrot.slane %v876, 4
      %vm878 = vcmask 31744
      %v879 = vsel %vm878, %v877, %v876
      %881 = vst.msk [vmem:[#allocation2 + $0x78] sm:$0x33] %vm249, %v879
      %882 = vrot.lane.b32.xlu0 %v258, 102
      %v883 = vpop.permute.xlu0 %882
      %884 = vrot.lane.b32.xlu0 %v577, 102
      %v885 = vpop.permute.xlu0 %884
      %v886 = vrot.slane %v883, 4
      %vm887 = vcmask 834560
      %v888 = vsel %vm887, %v886, %v885
      %890 = vst.msk [vmem:[#allocation2 + $0x7c] sm:$0x3] %vm267, %v888
      %891 = vrot.lane.b32.xlu0 %v577, 72
      %v892 = vpop.permute.xlu0 %891
      %v893 = vrot.slane %v892, 4
      %vm894 = vcmask 588800
      %v895 = vsel %vm894, %v893, %v892
      %897 = vst.msk [vmem:[#allocation2 + $0x7c] sm:$0x33] %vm277, %v895
      %898 = vrot.lane.b32.xlu0 %v286, 26
      %v899 = vpop.permute.xlu0 %898
      %v900 = vrot.slane %v899, 4
      %v901 = vsel %vm426, %v900, %v424
      %903 = vst.msk [vmem:[#allocation2 + $0x78] sm:$0xc] %vm290, %v901
      %904 = vrot.lane.b32.xlu0 %v240, 124
      %v905 = vpop.permute.xlu0 %904
      %v906 = vrot.slane %v905, 4
      %vm907 = vcmask 1014784
      %v908 = vsel %vm907, %v905, %v906
      %910 = vst.msk [vmem:[#allocation2 + $0x78] sm:$0xcc] %vm300, %v908
      %911 = vrot.lane.b32.xlu0 %v541, 94
      %v912 = vpop.permute.xlu0 %911
      %v913 = vsel %vm797, %v795, %v912
      %915 = vst.msk [vmem:[#allocation2 + $0x7c] sm:$0xc] %vm310, %v913
      %916 = vrot.lane.b32.xlu0 %v541, 64
      %v917 = vpop.permute.xlu0 %916
      %v918 = vrot.slane %v917, 4
      %v919 = vsel %vm804, %v918, %v917
      %921 = vst.msk [vmem:[#allocation2 + $0x7c] sm:$0xcc] %vm320, %v919
      %922 = vrot.lane.b32.xlu0 %v240, 25
      %v923 = vpop.permute.xlu0 %922
      %924 = vrot.lane.b32.xlu0 %v258, 25
      %v925 = vpop.permute.xlu0 %924
      %v926 = vrot.slane %v923, 4
      %vm927 = vcmask 203776
      %v928 = vsel %vm927, %v926, %v925
      %930 = vst.msk [vmem:[#allocation2 + $0x84] sm:$0x3] %vm231, %v928
      %931 = vrot.lane.b32.xlu0 %v258, 123
      %v932 = vpop.permute.xlu0 %931
      %v933 = vrot.slane %v932, 4
      %vm934 = vcmask 1006592
      %v935 = vsel %vm934, %v932, %v933
      %937 = vst.msk [vmem:[#allocation2 + $0x84] sm:$0x33] %vm249, %v935
      %938 = vrot.lane.b32.xlu0 %v258, 93
      %v939 = vpop.permute.xlu0 %938
      %940 = vrot.lane.b32.xlu0 %v577, 93
      %v941 = vpop.permute.xlu0 %940
      %v942 = vrot.slane %v939, 4
      %vm943 = vcmask 760832
      %v944 = vsel %vm943, %v942, %v941
      %946 = vst.msk [vmem:[#allocation2 + $0x88] sm:$0x3] %vm267, %v944
      %947 = vrot.lane.b32.xlu0 %v577, 63
      %v948 = vpop.permute.xlu0 %947
      %v949 = vrot.slane %v948, 4
      %vm950 = vcmask 515072
      %v951 = vsel %vm950, %v949, %v948
      %953 = vst.msk [vmem:[#allocation2 + $0x88] sm:$0x33] %vm277, %v951
      %954 = vrot.lane.b32.xlu0 %v286, 24
      %v955 = vpop.permute.xlu0 %954
      %956 = vrot.lane.b32.xlu0 %v240, 24
      %v957 = vpop.permute.xlu0 %956
      %v958 = vrot.slane %v955, 4
      %vm959 = vcmask 195584
      %v960 = vsel %vm959, %v958, %v957
      %962 = vst.msk [vmem:[#allocation2 + $0x84] sm:$0xc] %vm290, %v960
      %963 = vrot.lane.b32.xlu0 %v240, 122
      %v964 = vpop.permute.xlu0 %963
      %v965 = vrot.slane %v964, 4
      %vm966 = vcmask 998400
      %v967 = vsel %vm966, %v964, %v965
      %969 = vst.msk [vmem:[#allocation2 + $0x84] sm:$0xcc] %vm300, %v967
      %970 = vrot.lane.b32.xlu0 %v240, 92
      %v971 = vpop.permute.xlu0 %970
      %972 = vrot.lane.b32.xlu0 %v541, 92
      %v973 = vpop.permute.xlu0 %972
      %v974 = vrot.slane %v971, 4
      %vm975 = vcmask 752640
      %v976 = vsel %vm975, %v974, %v973
      %978 = vst.msk [vmem:[#allocation2 + $0x88] sm:$0xc] %vm310, %v976
      %979 = vrot.lane.b32.xlu0 %v541, 62
      %v980 = vpop.permute.xlu0 %979
      %v981 = vrot.slane %v980, 4
      %vm982 = vcmask 506880
      %v983 = vsel %vm982, %v981, %v980
      %985 = vst.msk [vmem:[#allocation2 + $0x88] sm:$0xcc] %vm320, %v983
      %986 = vrot.lane.b32.xlu0 %v240, 16
      %v987 = vpop.permute.xlu0 %986
      %v988 = vrot.slane %v987, 4
      %v989 = vsel %vm507, %v988, %v505
      %991 = vst.msk [vmem:[#allocation2 + $0x90] sm:$0x3] %vm231, %v989
      %992 = vrot.lane.b32.xlu0 %v258, 114
      %v993 = vpop.permute.xlu0 %992
      %v994 = vrot.slane %v993, 4
      %v995 = vsel %vm602, %v993, %v994
      %997 = vst.msk [vmem:[#allocation2 + $0x90] sm:$0x33] %vm249, %v995
      %998 = vrot.lane.b32.xlu0 %v258, 84
      %v999 = vpop.permute.xlu0 %998
      %1000 = vrot.lane.b32.xlu0 %v577, 84
      %v1001 = vpop.permute.xlu0 %1000
      %v1002 = vrot.slane %v999, 4
      %v1003 = vsel %vm609, %v1002, %v1001
      %1005 = vst.msk [vmem:[#allocation2 + $0x94] sm:$0x3] %vm267, %v1003
      %1006 = vrot.lane.b32.xlu0 %v577, 54
      %v1007 = vpop.permute.xlu0 %1006
      %v1008 = vrot.slane %v1007, 4
      %v1009 = vsel %vm620, %v1008, %v1007
      %1011 = vst.msk [vmem:[#allocation2 + $0x94] sm:$0x33] %vm277, %v1009
      %1012 = vrot.lane.b32.xlu0 %v286, 15
      %v1013 = vpop.permute.xlu0 %1012
      %1014 = vrot.lane.b32.xlu0 %v240, 15
      %v1015 = vpop.permute.xlu0 %1014
      %v1016 = vrot.slane %v1013, 4
      %vm1017 = vcmask 121856
      %v1018 = vsel %vm1017, %v1016, %v1015
      %1020 = vst.msk [vmem:[#allocation2 + $0x90] sm:$0xc] %vm290, %v1018
      %1021 = vrot.lane.b32.xlu0 %v240, 113
      %v1022 = vpop.permute.xlu0 %1021
      %v1023 = vrot.slane %v1022, 4
      %vm1024 = vcmask 924672
      %v1025 = vsel %vm1024, %v1022, %v1023
      %1027 = vst.msk [vmem:[#allocation2 + $0x90] sm:$0xcc] %vm300, %v1025
      %1028 = vrot.lane.b32.xlu0 %v240, 83
      %v1029 = vpop.permute.xlu0 %1028
      %1030 = vrot.lane.b32.xlu0 %v541, 83
      %v1031 = vpop.permute.xlu0 %1030
      %v1032 = vrot.slane %v1029, 4
      %vm1033 = vcmask 678912
      %v1034 = vsel %vm1033, %v1032, %v1031
      %1036 = vst.msk [vmem:[#allocation2 + $0x94] sm:$0xc] %vm310, %v1034
      %1037 = vrot.lane.b32.xlu0 %v541, 53
      %v1038 = vpop.permute.xlu0 %1037
      %v1039 = vrot.slane %v1038, 4
      %vm1040 = vcmask 433152
      %v1041 = vsel %vm1040, %v1039, %v1038
      %1043 = vst.msk [vmem:[#allocation2 + $0x94] sm:$0xcc] %vm320, %v1041
      %1044 = vrot.lane.b32.xlu0 %v240, 14
      %v1045 = vpop.permute.xlu0 %1044
      %1046 = vrot.lane.b32.xlu0 %v258, 14
      %v1047 = vpop.permute.xlu0 %1046
      %v1048 = vrot.slane %v1045, 4
      %vm1049 = vcmask 113664
      %v1050 = vsel %vm1049, %v1048, %v1047
      %1052 = vst.msk [vmem:[#allocation2 + $0x9c] sm:$0x3] %vm231, %v1050
      %1053 = vrot.lane.b32.xlu0 %v258, 112
      %v1054 = vpop.permute.xlu0 %1053
      %v1055 = vrot.slane %v1054, 4
      %vm1056 = vcmask 916480
      %v1057 = vsel %vm1056, %v1054, %v1055
      %1059 = vst.msk [vmem:[#allocation2 + $0x9c] sm:$0x33] %vm249, %v1057
      %1060 = vrot.lane.b32.xlu0 %v258, 82
      %v1061 = vpop.permute.xlu0 %1060
      %1062 = vrot.lane.b32.xlu0 %v577, 82
      %v1063 = vpop.permute.xlu0 %1062
      %v1064 = vrot.slane %v1061, 4
      %vm1065 = vcmask 670720
      %v1066 = vsel %vm1065, %v1064, %v1063
      %1068 = vst.msk [vmem:[#allocation2 + $0xa0] sm:$0x3] %vm267, %v1066
      %1069 = vrot.lane.b32.xlu0 %v577, 52
      %v1070 = vpop.permute.xlu0 %1069
      %v1071 = vrot.slane %v1070, 4
      %vm1072 = vcmask 424960
      %v1073 = vsel %vm1072, %v1071, %v1070
      %1075 = vst.msk [vmem:[#allocation2 + $0xa0] sm:$0x33] %vm277, %v1073
      %v1076 = vld [vmem:[%s1] sm:$0xf]
      %v1077 = vld [vmem:[#allocation2] sm:$0xff]
      %v1078 = vld [vmem:[#allocation2 + $0x8] sm:$0xf]
      %v1079 = vld [vmem:[#allocation2 + $0xc] sm:$0xff]
      %v1080 = vld [vmem:[#allocation2 + $0x14] sm:$0xf]
      %v1081 = vld [vmem:[#allocation2 + $0x18] sm:$0xff]
      %v1082 = vld [vmem:[#allocation2 + $0x20] sm:$0xf]
      %v1083 = vld [vmem:[#allocation2 + $0x24] sm:$0xff]
      %v1084 = vld [vmem:[#allocation2 + $0x2c] sm:$0xf]
      %v1085 = vld [vmem:[#allocation2 + $0x30] sm:$0xff]
      %v1086 = vld [vmem:[#allocation2 + $0x38] sm:$0xf]
      %v1087 = vld [vmem:[#allocation2 + $0x3c] sm:$0xff]
      %v1088 = vld [vmem:[#allocation2 + $0x44] sm:$0xf]
      %v1089 = vld [vmem:[#allocation2 + $0x48] sm:$0xff]
      %v1090 = vld [vmem:[#allocation2 + $0x50] sm:$0xf]
      %v1091 = vld [vmem:[#allocation2 + $0x54] sm:$0xff]
      %v1092 = vld [vmem:[#allocation2 + $0x5c] sm:$0xf]
      %v1093 = vld [vmem:[#allocation2 + $0x60] sm:$0xff]
      %v1094 = vld [vmem:[#allocation2 + $0x68] sm:$0xf]
      %v1095 = vld [vmem:[#allocation2 + $0x6c] sm:$0xff]
      %v1096 = vld [vmem:[#allocation2 + $0x74] sm:$0xf]
      %v1097 = vld [vmem:[#allocation2 + $0x78] sm:$0xff]
      %v1098 = vld [vmem:[#allocation2 + $0x80] sm:$0xf]
      %v1099 = vld [vmem:[#allocation2 + $0x84] sm:$0xff]
      %v1100 = vld [vmem:[#allocation2 + $0x8c] sm:$0xf]
      %v1101 = vld [vmem:[#allocation2 + $0x90] sm:$0xff]
      %v1102 = vld [vmem:[#allocation2 + $0x98] sm:$0xf]
      %v1103 = vld [vmem:[#allocation2 + $0x9c] sm:$0x33]
      %v1104 = vld [vmem:[#allocation2 + $0xa4] sm:$0x3]
      %v1133 = vunpack.c.l.b16 %v1077
      %v1134 = vunpack.c.h.b16 %v1077
      %v1135 = vunpack.c.l.b16 %v1078
      %v1136 = vunpack.c.l.b16 %v1079
      %v1137 = vunpack.c.h.b16 %v1079
      %v1138 = vunpack.c.l.b16 %v1080
      %v1139 = vunpack.c.l.b16 %v1081
      %v1140 = vunpack.c.h.b16 %v1081
      %v1141 = vunpack.c.l.b16 %v1082
      %v1142 = vunpack.c.l.b16 %v1083
      %v1143 = vunpack.c.h.b16 %v1083
      %v1144 = vunpack.c.l.b16 %v1084
      %v1145 = vunpack.c.l.b16 %v1085
      %v1146 = vunpack.c.h.b16 %v1085
      %v1147 = vunpack.c.l.b16 %v1086
      %v1148 = vunpack.c.l.b16 %v1087
      %v1149 = vunpack.c.h.b16 %v1087
      %v1150 = vunpack.c.l.b16 %v1088
      %v1151 = vunpack.c.l.b16 %v1089
      %v1152 = vunpack.c.h.b16 %v1089
      %v1153 = vunpack.c.l.b16 %v1090
      %v1154 = vunpack.c.l.b16 %v1091
      %v1155 = vunpack.c.h.b16 %v1091
      %v1156 = vunpack.c.l.b16 %v1092
      %v1157 = vunpack.c.l.b16 %v1093
      %v1158 = vunpack.c.h.b16 %v1093
      %v1159 = vunpack.c.l.b16 %v1094
      %v1160 = vunpack.c.l.b16 %v1095
      %v1161 = vunpack.c.h.b16 %v1095
      %v1162 = vunpack.c.l.b16 %v1096
      %v1163 = vunpack.c.l.b16 %v1097
      %v1164 = vunpack.c.h.b16 %v1097
      %v1165 = vunpack.c.l.b16 %v1098
      %v1166 = vunpack.c.l.b16 %v1099
      %v1167 = vunpack.c.h.b16 %v1099
      %v1168 = vunpack.c.l.b16 %v1100
      %v1169 = vunpack.c.l.b16 %v1101
      %v1170 = vunpack.c.h.b16 %v1101
      %v1171 = vunpack.c.l.b16 %v1102
      %v1172 = vunpack.c.l.b16 %v1103
      %v1173 = vunpack.c.h.b16 %v1103
      %v1174 = vunpack.c.l.b16 %v1104
      %v1175 = vpack.c.b16 %v1136, %v1133
      %v1176 = vpack.c.b16 %v1137, %v1134
      %v1177 = vpack.c.b16 %v1138, %v1135
      %v1178 = vpack.c.b16 %v1142, %v1139
      %v1179 = vpack.c.b16 %v1143, %v1140
      %v1180 = vpack.c.b16 %v1144, %v1141
      %v1181 = vpack.c.b16 %v1148, %v1145
      %v1182 = vpack.c.b16 %v1149, %v1146
      %v1183 = vpack.c.b16 %v1150, %v1147
      %v1184 = vpack.c.b16 %v1154, %v1151
      %v1185 = vpack.c.b16 %v1155, %v1152
      %v1186 = vpack.c.b16 %v1156, %v1153
      %v1187 = vpack.c.b16 %v1160, %v1157
      %v1188 = vpack.c.b16 %v1161, %v1158
      %v1189 = vpack.c.b16 %v1162, %v1159
      %v1190 = vpack.c.b16 %v1166, %v1163
      %v1191 = vpack.c.b16 %v1167, %v1164
      %v1192 = vpack.c.b16 %v1168, %v1165
      %v1193 = vpack.c.b16 %v1172, %v1169
      %v1194 = vpack.c.b16 %v1173, %v1170
      %v1195 = vpack.c.b16 %v1174, %v1171
      %vm1214 = vcmask 883712
      %v1216 = vsel %vm1214, %v1076, 0
      %vm1218 = vcmask 1045504
      %v1220 = vsel %vm1218, %v1193, 0
      %v1223 = vsel %vm1218, %v1194, 0
      %v1226 = vsel %vm1218, %v1195, 0
      %1228 = vmatprep.subr.bf16.mxu0 0
      %1229 = vmatpush1.bf16.msra.mxu0 0
      %1230 = vmatprep.subr.bf16.mxu0 %v1223
      %1231 = vmatpush1.bf16.msra.mxu0 %v1220
      %1232 = vmatprep.subr.bf16.mxu0 %v1191
      %1233 = vmatpush1.bf16.msra.mxu0 %v1190
      %1234 = vmatprep.subr.bf16.mxu0 %v1188
      %1235 = vmatpush1.bf16.msra.mxu0 %v1187
      %1236 = vmatprep.subr.bf16.mxu0 %v1185
      %1237 = vmatpush1.bf16.msra.mxu0 %v1184
      %1238 = vmatprep.subr.bf16.mxu0 %v1182
      %1239 = vmatpush1.bf16.msra.mxu0 %v1181
      %1240 = vmatprep.subr.bf16.mxu0 %v1179
      %1241 = vmatpush1.bf16.msra.mxu0 %v1178
      %1242 = vmatprep.subr.bf16.mxu0 %v1176
      %1243 = vmatpush1.bf16.msra.mxu0 %v1175
      %1244 = vmatprep.subr.bf16.mxu0 0
      %1245 = vmatpush2.bf16.msra.mxu0 0
      %1246 = vmatprep.subr.bf16.mxu0 0
      %1247 = vmatpush2.bf16.msra.mxu0 0
      %1248 = vmatprep.subr.bf16.mxu0 0
      %1249 = vmatpush2.bf16.msra.mxu0 0
      %1250 = vmatprep.subr.bf16.mxu0 0
      %1251 = vmatpush2.bf16.msra.mxu0 0
      %1252 = vmatprep.subr.bf16.mxu0 0
      %1253 = vmatpush2.bf16.msra.mxu0 0
      %1254 = vmatprep.subr.bf16.mxu0 0
      %1255 = vmatpush2.bf16.msra.mxu0 0
      %1256 = vmatprep.subr.bf16.mxu0 0
      %1257 = vmatpush2.bf16.msra.mxu0 0
      %1258 = vmatprep.subr.bf16.mxu0 0
      %1259 = vmatpush2.bf16.msra.mxu0 0
      %1260 = vmatprep.mubr.bf16.mxu0 0
      %1261 = vmatmul.mubr.bf16.gmra.mxu0 %v1216
      %v1262 = vpop.f32.mrf.mxu0
      %v1263 = vadd.f32 0.0, %v1262
      %v1264 = vpop.f32.mrf.mxu0
      %v1265 = vadd.f32 0.0, %v1264
      %v1266 = vpop.f32.mrf.mxu0
      %v1267 = vpop.f32.mrf.mxu0
      %1268 = vdwg.mxu0
      %1269 = vmatprep.subr.bf16.mxu0 0
      %1270 = vmatpush1.bf16.msra.mxu0 0
      %1271 = vmatprep.subr.bf16.mxu0 0
      %1272 = vmatpush1.bf16.msra.mxu0 %v1226
      %1273 = vmatprep.subr.bf16.mxu0 0
      %1274 = vmatpush1.bf16.msra.mxu0 %v1192
      %1275 = vmatprep.subr.bf16.mxu0 0
      %1276 = vmatpush1.bf16.msra.mxu0 %v1189
      %1277 = vmatprep.subr.bf16.mxu0 0
      %1278 = vmatpush1.bf16.msra.mxu0 %v1186
      %1279 = vmatprep.subr.bf16.mxu0 0
      %1280 = vmatpush1.bf16.msra.mxu0 %v1183
      %1281 = vmatprep.subr.bf16.mxu0 0
      %1282 = vmatpush1.bf16.msra.mxu0 %v1180
      %1283 = vmatprep.subr.bf16.mxu0 0
      %1284 = vmatpush1.bf16.msra.mxu0 %v1177
      %1285 = vmatprep.subr.bf16.mxu0 0
      %1286 = vmatpush2.bf16.msra.mxu0 0
      %1287 = vmatprep.subr.bf16.mxu0 0
      %1288 = vmatpush2.bf16.msra.mxu0 0
      %1289 = vmatprep.subr.bf16.mxu0 0
      %1290 = vmatpush2.bf16.msra.mxu0 0
      %1291 = vmatprep.subr.bf16.mxu0 0
      %1292 = vmatpush2.bf16.msra.mxu0 0
      %1293 = vmatprep.subr.bf16.mxu0 0
      %1294 = vmatpush2.bf16.msra.mxu0 0
      %1295 = vmatprep.subr.bf16.mxu0 0
      %1296 = vmatpush2.bf16.msra.mxu0 0
      %1297 = vmatprep.subr.bf16.mxu0 0
      %1298 = vmatpush2.bf16.msra.mxu0 0
      %1299 = vmatprep.subr.bf16.mxu0 0
      %1300 = vmatpush2.bf16.msra.mxu0 0
      %1301 = vmatprep.mubr.bf16.mxu0 0
      %1302 = vmatmul.mubr.bf16.gmra.mxu0 %v1216
      %v1303 = vpop.f32.mrf.mxu0
      %v1304 = vadd.f32 0.0, %v1303
      %v1305 = vpop.f32.mrf.mxu0
      %v1306 = vpop.f32.mrf.mxu0
      %v1307 = vpop.f32.mrf.mxu0
      %1308 = vdwg.mxu0
      %v1309 = vpack.c.bf16 %v1263, %v1263
      %v1310 = vpack.c.bf16 %v1265, %v1265
      %v1311 = vpack.c.bf16 %v1304, %v1304
      %v1315 = vunpack.c.l.b16 %v1309
      %v1316 = vunpack.c.l.b16 %v1310
      %v1317 = vunpack.c.l.b16 %v1311
      %v1318 = vpack.c.b16 %v1316, %v1315
      %v1319 = vpack.c.b16 %v1317, %v1317
      %1322 = vst [vmem:[%s219] sm:$0xff] %v1318
      %vm1323 = vcmask 519168
      %1324 = vst.msk [vmem:[%s219 + $0x8] sm:$0xf] %vm1323, %v1319
      %v1325 = vlaneseq
      %v1326 = vand.u32 %v1325, 127
      %v1327 = vadd.s32 %v1326, 128
      %v1328 = vadd.s32 %v1326, 256
      %vm1329 = vcmp.lt.s32.totalorder %v1326, 0
      %v1330 = vsub.s32 0, %v1326
      %v1331 = vsel %vm1329, %v1330, %v1326
      %v1332 = vmul.u32.u64.compose %v1331, 3435973837
      %v1333 = vextract.low.u32 %v1332
      %v1334 = vextract.high.u32 %v1332
      %v1335 = vshrl.u32 %v1334, 3
      %v1336 = vmul.u32 %v1335, 10
      %v1337 = vsub.s32 %v1331, %v1336
      %v1338 = vsub.s32 0, %v1337
      %v1339 = vsel %vm1329, %v1338, %v1337
      %vm1340 = vcmp.lt.s32.totalorder %v1327, 0
      %v1341 = vsub.s32 0, %v1327
      %v1342 = vsel %vm1340, %v1341, %v1327
      %v1343 = vmul.u32.u64.compose %v1342, 3435973837
      %v1344 = vextract.low.u32 %v1343
      %v1345 = vextract.high.u32 %v1343
      %v1346 = vshrl.u32 %v1345, 3
      %v1347 = vmul.u32 %v1346, 10
      %v1348 = vsub.s32 %v1342, %v1347
      %v1349 = vsub.s32 0, %v1348
      %v1350 = vsel %vm1340, %v1349, %v1348
      %vm1351 = vcmp.lt.s32.totalorder %v1328, 0
      %v1352 = vsub.s32 0, %v1328
      %v1353 = vsel %vm1351, %v1352, %v1328
      %v1354 = vmul.u32.u64.compose %v1353, 3435973837
      %v1355 = vextract.low.u32 %v1354
      %v1356 = vextract.high.u32 %v1354
      %v1357 = vshrl.u32 %v1356, 3
      %v1358 = vmul.u32 %v1357, 10
      %v1359 = vsub.s32 %v1353, %v1358
      %v1360 = vsub.s32 0, %v1359
      %v1361 = vsel %vm1351, %v1360, %v1359
      %vm1362 = vcmp.ne.s32.totalorder %v1339, 0
      %vm1363 = vcmp.ne.s32.totalorder %v1350, 0
      %vm1364 = vcmp.ne.s32.totalorder %v1361, 0
      %vm1365 = vcmp.lt.s32.totalorder %v1339, 0
      %vm1366 = vcmp.lt.s32.totalorder %v1350, 0
      %vm1367 = vcmp.lt.s32.totalorder %v1361, 0
      %vm1368 = vmand %vm1365, %vm1362
      %vm1369 = vmand %vm1366, %vm1363
      %vm1370 = vmand %vm1367, %vm1364
      %v1371 = vadd.s32 %v1339, 10
      %v1372 = vadd.s32 %v1350, 10
      %v1373 = vadd.s32 %v1361, 10
      %v1374 = vsel %vm1368, %v1371, %v1339
      %v1375 = vsel %vm1369, %v1372, %v1350
      %v1376 = vsel %vm1370, %v1373, %v1361
      %vm1377 = vcmp.lt.s32.totalorder %v1374, 8
      %vm1378 = vcmp.lt.s32.totalorder %v1375, 8
      %vm1379 = vcmp.lt.s32.totalorder %v1376, 8
      %v1380 = vsel %vm1377, %v1263, 0.0
      %v1381 = vsel %vm1378, %v1265, 0.0
      %v1382 = vsel %vm1379, %v1304, 0.0
      %v1383 = vadd.f32 %v1380, %v1381
      %vm1384 = vcmask 523264
      %v1385 = vsel %vm1384, %v1382, 0.0
      %v1386 = vadd.f32 %v1383, %v1385
      %1387 = vadd.xlane.f32.xlu0 %v1386
      %v1388 = vpop.xlane.xlu0 %1387
      %vm1389 = vcmask 7168
      %1390 = vst.msk [vmem:[%s227] sm:$0xff] %vm1389, %v1388
      %v1391 = vmul.f32 %v1380, %v1263
      %v1392 = vmul.f32 %v1381, %v1265
      %v1393 = vmul.f32 %v1382, %v1304
      %v1394 = vadd.f32 %v1391, %v1392
      %v1395 = vsel %vm1384, %v1393, 0.0
      %v1396 = vadd.f32 %v1394, %v1395
      %1397 = vadd.xlane.f32.xlu0 %v1396
      %v1398 = vpop.xlane.xlu0 %1397
      %vm1399 = vcmask 15368
      %1400 = vst.msk [vmem:[%s227] sm:$0xff] %vm1399, %v1398
      %p1401 = scmp.lt.s32.totalorder %s19, 1
      %s1402 = scalar_select %p1401, %s19, 1
      %p1403 = scmp.lt.s32.totalorder %s20, 1
      %s1404 = scalar_select %p1403, %s20, 1
      %s1405 = smul.addr %s1404, 3
      %s1406 = smul.addr %s1402, 6
      %s1407 = sadd.s32 %s1405, %s1406
      %s1408 = smul.addr %s1407, 4
      %s1409 = scalar_lea.vmem %s2, %s1408
      %p1410 = scmp.lt.s32.totalorder %s19, 1
      %s1411 = scalar_select %p1410, %s19, 1
      %p1412 = scmp.lt.s32.totalorder %s20, 1
      %s1413 = scalar_select %p1412, %s20, 1
      %s1414 = smul.addr %s1411, 2
      %s1415 = sadd.s32 %s1413, %s1414
      %s1416 = smul.addr %s1415, 8
      %s1417 = scalar_lea.vmem %s3, %s1416
      // Predicated region
      $region29: #{unet_block_forward.2} parent=27 // pred_check
        %p1418 = pneg %p96
      $region30: #{unet_block_forward.2} parent=27 // pred_check_branch
        %1420 = sbr.rel (%p1418) target = $region32
      $region31: #{unet_block_forward.2} parent=27 // pred_region
        _
      $region32: #{unet_block_forward.2} parent=27 // pred_fallthru
        _
      // Predicated region
      $region33: #{unet_block_forward.2} parent=27 // pred_check
        %p1421 = pneg %p124
      $region34: #{unet_block_forward.2} parent=27 // pred_check_branch
        %1423 = sbr.rel (%p1421) target = $region36
      $region35: #{unet_block_forward.2} parent=27 // pred_region
        _
      $region36: #{unet_block_forward.2} parent=27 // pred_fallthru
        _
    $region28: #{unet_block_forward.2} parent=5 // pred_fallthru
      _
    %p1424 = scmp.le.s32.totalorder 2, %s10
    // Predicated region
    $region37: #{unet_block_forward.2} parent=5 // pred_check
      %p1425 = pneg %p1424
    $region38: #{unet_block_forward.2} parent=5 // pred_check_branch
      %1427 = sbr.rel (%p1425) target = $region40
    $region39: #{unet_block_forward.2} parent=5 // pred_region
      %s1428 = ssub.s32 %s10, 2
      // Predicated region
      $region41: #{unet_block_forward.2} parent=39 // pred_check
        %p1429 = pneg %p102
      $region42: #{unet_block_forward.2} parent=39 // pred_check_branch
        %1431 = sbr.rel (%p1429) target = $region44
      $region43: #{unet_block_forward.2} parent=39 // pred_region
        %p1432 = scmp.lt.s32.totalorder %s21, 1
        %s1433 = scalar_select %p1432, %s21, 1
        %p1434 = scmp.lt.s32.totalorder %s22, 1
        %s1435 = scalar_select %p1434, %s22, 1
        %s1436 = smul.addr %s1435, 3
        %s1437 = smul.addr %s1433, 6
        %s1438 = sadd.s32 %s1436, %s1437
        %s1439 = smul.addr %s1438, 4
        %s1440 = scalar_lea.vmem %s2, %s1439
      $region44: #{unet_block_forward.2} parent=39 // pred_fallthru
        _
      // Predicated region
      $region45: #{unet_block_forward.2} parent=39 // pred_check
        %p1441 = pneg %p130
      $region46: #{unet_block_forward.2} parent=39 // pred_check_branch
        %1443 = sbr.rel (%p1441) target = $region48
      $region47: #{unet_block_forward.2} parent=39 // pred_region
        %p1444 = scmp.lt.s32.totalorder %s21, 1
        %s1445 = scalar_select %p1444, %s21, 1
        %p1446 = scmp.lt.s32.totalorder %s22, 1
        %s1447 = scalar_select %p1446, %s22, 1
        %s1448 = smul.addr %s1445, 2
        %s1449 = sadd.s32 %s1447, %s1448
        %s1450 = smul.addr %s1449, 8
        %s1451 = scalar_lea.vmem %s3, %s1450
      $region48: #{unet_block_forward.2} parent=39 // pred_fallthru
        _
    $region40: #{unet_block_forward.2} parent=5 // pred_fallthru
      _
  $region6: #{unet_block_forward.2} parent=0 // loop_footer
    %s14 = sadd.s32 1, %s10
  $region7: #{unet_block_forward.2} parent=0 // loop_footer_branch
    %9 = sbr.rel target = $region3
  $region8: #{unet_block_forward.2} parent=0 // loop_exit
    _

</llo_original>
